<compile_context>
chip_gen: v7x
topology: tpu7x:2x2x1
jax: 0.10.0
libtpu: 0.0.40
codegen_flags: <defaults>
</compile_context>

<pallas_src>
import functools

import jax
import jax.numpy as jnp
from jax import lax
from jax.experimental import pallas as pl
from jax.experimental.pallas import tpu as pltpu


# ----------------------------------------------------------------------------
# Fused Pallas kernel: conv1 + GN1 + ReLU + conv2 + GN2 + skip + ReLU
# ----------------------------------------------------------------------------
def _residual_block_kernel(x_ref, w1_ref, w2_ref, *rest,
                           D, H, W, Cin, Cout, G, use_skip_conv, eps=1e-5):
    """One batch element, lane-dense layout (lane index = w*C + c).

    x_ref   : (D, H, W*Cin)        f32 input
    w1_ref  : (9, W*Cin, W*Cout)   bf16 banded conv1 weights (one slab / (kd,kh))
    w2_ref  : (9, W*Cout, W*Cout)  bf16 banded conv2 weights
    ws_ref  : (W*Cin, W*Cout)      bf16 block-diagonal 1x1x1 skip weights (opt)
    prm_ref : (7, W*Cout)          f32 rows: b1,g1,be1,b2,g2,be2,bs (lane-tiled)
    mlg_ref : (W*Cout, G)          f32 lane->group mask
    mgl_ref : (G, W*Cout)          f32 group->lane mask
    out_ref : (D, H, W*Cout)       f32 output
    xpad/hpad (scratch): (D+2, H+2, W*C) f32 halo buffers (D/H halo only)
    """
    if use_skip_conv:
        ws_ref, prm_ref, mlg_ref, mgl_ref, out_ref, xpad_ref, hpad_ref = rest
    else:
        prm_ref, mlg_ref, mgl_ref, out_ref, xpad_ref, hpad_ref = rest

    f32 = jnp.float32
    bf16 = jnp.bfloat16
    DH = D * H
    WCi = W * Cin
    WCo = W * Cout
    Cg = Cout // G
    inv_count = 1.0 / float(DH * W * Cg)

    # ---- zero only the 4 halo faces (interior is overwritten every step;
    #      W-direction halo is handled by zero rows in the banded weights) ----
    xpad_ref[0:1] = jnp.zeros((1, H + 2, WCi), f32)
    xpad_ref[D + 1:D + 2] = jnp.zeros((1, H + 2, WCi), f32)
    xpad_ref[:, 0:1] = jnp.zeros((D + 2, 1, WCi), f32)
    xpad_ref[:, H + 1:H + 2] = jnp.zeros((D + 2, 1, WCi), f32)
    hpad_ref[0:1] = jnp.zeros((1, H + 2, WCo), f32)
    hpad_ref[D + 1:D + 2] = jnp.zeros((1, H + 2, WCo), f32)
    hpad_ref[:, 0:1] = jnp.zeros((D + 2, 1, WCo), f32)
    hpad_ref[:, H + 1:H + 2] = jnp.zeros((D + 2, 1, WCo), f32)

    x = x_ref[...]                                   # (D, H, W*Cin) f32
    xpad_ref[1:D + 1, 1:H + 1, :] = x

    prm = prm_ref[...]                               # (7, W*Cout) f32
    mlg = mlg_ref[...]                               # (W*Cout, G) f32
    mgl = mgl_ref[...]                               # (G, W*Cout) f32

    def banded_conv(pad_ref, w_ref, K):
        # 9 banded matmuls; K = W*C_in_lanes, N = W*Cout (lane-dense result).
        acc = jnp.zeros((DH, WCo), f32)
        for t in range(9):
            kd, kh = t // 3, t % 3
            lhs = pad_ref[kd:kd + D, kh:kh + H, :].reshape(DH, K).astype(bf16)
            acc = acc + jnp.dot(lhs, w_ref[t], preferred_element_type=f32)
        return acc

    def group_norm(a, gamma_row, beta_row):
        # One-pass E[x^2]-E[x]^2 (f32, clamped at 0); reduce/broadcast across
        # groups via two merged mask matmuls.
        # TODO(synk): switch to shifted/two-pass stats if |mean| >> std.
        sum_l = jnp.sum(a, axis=0, keepdims=True)                     # (1, WCo)
        ssq_l = jnp.sum(a * a, axis=0, keepdims=True)                 # (1, WCo)
        stats_g = jnp.dot(jnp.concatenate([sum_l, ssq_l], axis=0), mlg,
                          preferred_element_type=f32) * inv_count     # (2, G)
        mean_g = stats_g[0:1]
        var_g = jnp.maximum(stats_g[1:2] - mean_g * mean_g, 0.0)
        rstd_g = lax.rsqrt(var_g + eps)
        mr_l = jnp.dot(jnp.concatenate([mean_g, rstd_g], axis=0), mgl,
                       preferred_element_type=f32)                    # (2, WCo)
        return (a - mr_l[0:1]) * mr_l[1:2] * gamma_row + beta_row

    # ---- conv1 + bias -> GN1 -> ReLU ---------------------------------------
    acc1 = banded_conv(xpad_ref, w1_ref, WCi) + prm[0:1]
    h = jnp.maximum(group_norm(acc1, prm[1:2], prm[2:3]), 0.0)        # (DH, WCo)
    hpad_ref[1:D + 1, 1:H + 1, :] = h.reshape(D, H, WCo)

    # ---- conv2 + bias -> GN2 -----------------------------------------------
    acc2 = banded_conv(hpad_ref, w2_ref, WCo) + prm[3:4]
    y = group_norm(acc2, prm[4:5], prm[5:6])

    # ---- residual (identity or fused 1x1x1 skip conv) + ReLU ---------------
    if use_skip_conv:
        xs = x.reshape(DH, WCi).astype(bf16)
        y = y + jnp.dot(xs, ws_ref[...], preferred_element_type=f32) + prm[6:7]
    else:
        y = y + x.reshape(DH, WCi)                    # Cin == Cout, same layout

    out_ref[...] = jnp.maximum(y, 0.0).reshape(D, H, WCo).astype(out_ref.dtype)


# ----------------------------------------------------------------------------
# Wrapper: banded-weight construction + pallas_call
# ----------------------------------------------------------------------------
def _banded_conv3_weight(w_dhwio, W, mxu_dtype):
    """(3,3,3,Cin,Cout) -> (9, W*Cin, W*Cout) banded weights.
    band[kd*3+kh, wi*Cin+ci, wo*Cout+co] = w[kd,kh,kw,ci,co] with wi = wo+kw-1
    (rows for out-of-range wi stay zero, which implements the W padding)."""
    Cin, Cout = w_dhwio.shape[3], w_dhwio.shape[4]
    wq = w_dhwio.astype(mxu_dtype)
    band = jnp.zeros((3, 3, W * Cin, W * Cout), mxu_dtype)
    for kw in range(3):
        for wo in range(W):
            wi = wo + kw - 1
            if 0 <= wi < W:
                band = band.at[:, :, wi * Cin:(wi + 1) * Cin,
                               wo * Cout:(wo + 1) * Cout].set(wq[:, :, kw])
    return band.reshape(9, W * Cin, W * Cout)


def _banded_skip_weight(ws, W, mxu_dtype):
    """(Cin,Cout) 1x1x1 conv -> block-diagonal (W*Cin, W*Cout)."""
    Cin, Cout = ws.shape
    wq = ws.astype(mxu_dtype)
    band = jnp.zeros((W * Cin, W * Cout), mxu_dtype)
    for wo in range(W):
        band = band.at[wo * Cin:(wo + 1) * Cin,
                       wo * Cout:(wo + 1) * Cout].set(wq)
    return band


def _lane_tile(v, W, Cout):
    return jnp.tile(jnp.reshape(v.astype(jnp.float32), (1, Cout)), (1, W))


def residual_block_3d(x_ncdhw, params, G, *, mxu_dtype=jnp.bfloat16):
    """Forward pass matching ResidualBlock3D. x_ncdhw: (N, Cin, D, H, W) f32."""
    w1, b1, g1, be1, w2, b2, g2, be2, ws, bs = params
    N, Cin, D, H, W = x_ncdhw.shape
    Cout = w1.shape[-1]
    WCi, WCo = W * Cin, W * Cout
    use_skip_conv = (Cin != Cout)

    # NCDHW -> lane-dense (N, D, H, W*Cin), lane index = w*Cin + ci
    x = jnp.transpose(x_ncdhw, (0, 2, 3, 4, 1)).reshape(N, D, H, WCi)

    w1b = _banded_conv3_weight(w1, W, mxu_dtype)           # (9, W*Cin,  W*Cout)
    w2b = _banded_conv3_weight(w2, W, mxu_dtype)           # (9, W*Cout, W*Cout)

    bs_row = bs if use_skip_conv else jnp.zeros((Cout,), jnp.float32)
    prm = jnp.concatenate(
        [_lane_tile(v, W, Cout) for v in (b1, g1, be1, b2, g2, be2, bs_row)],
        axis=0)                                            # (7, W*Cout) f32

    Cg = Cout // G
    grp = (jnp.arange(WCo, dtype=jnp.int32) % Cout) // Cg
    mlg = (grp[:, None] == jnp.arange(G, dtype=jnp.int32)[None, :]
           ).astype(jnp.float32)                           # (W*Cout, G)
    mgl = jnp.transpose(mlg)                               # (G, W*Cout)

    kernel = functools.partial(
        _residual_block_kernel, D=D, H=H, W=W, Cin=Cin, Cout=Cout, G=G,
        use_skip_conv=use_skip_conv)

    in_specs = [
        pl.BlockSpec((None, D, H, WCi), lambda n: (n, 0, 0, 0)),
        pl.BlockSpec((9, WCi, WCo), lambda n: (0, 0, 0)),
        pl.BlockSpec((9, WCo, WCo), lambda n: (0, 0, 0)),
    ]
    args = [x, w1b, w2b]
    if use_skip_conv:
        in_specs.append(pl.BlockSpec((WCi, WCo), lambda n: (0, 0)))
        args.append(_banded_skip_weight(ws, W, mxu_dtype))
    in_specs += [
        pl.BlockSpec((7, WCo), lambda n: (0, 0)),
        pl.BlockSpec((WCo, G), lambda n: (0, 0)),
        pl.BlockSpec((G, WCo), lambda n: (0, 0)),
    ]
    args += [prm, mlg, mgl]

    # Explicit scoped-VMEM budget: ~96 MiB on v5e/v6e, ~48 MiB on v7x.
    try:
        cap = pltpu.get_tpu_info().vmem_capacity_bytes
        vmem_limit = int(min(96 * 1024 * 1024, (cap * 3) // 4))
    except Exception:
        vmem_limit = None

    out = pl.pallas_call(
        kernel,
        out_shape=jax.ShapeDtypeStruct((N, D, H, WCo), jnp.float32),
        grid=(N,),
        in_specs=in_specs,
        out_specs=pl.BlockSpec((None, D, H, WCo), lambda n: (n, 0, 0, 0)),
        scratch_shapes=[pltpu.VMEM((D + 2, H + 2, WCi), jnp.float32),
                        pltpu.VMEM((D + 2, H + 2, WCo), jnp.float32)],
        compiler_params=pltpu.CompilerParams(
            dimension_semantics=("parallel",),
            vmem_limit_bytes=vmem_limit),
    )(*args)

    return jnp.transpose(out.reshape(N, D, H, W, Cout), (0, 4, 1, 2, 3))


# ----------------------------------------------------------------------------
# Pure-JAX reference (for correctness check)
# ----------------------------------------------------------------------------
def _gn_ref(x, gamma, beta, G, eps=1e-5):
    N, D, H, W, C = x.shape
    Cg = C // G
    xg = x.reshape(N, D * H * W, G, Cg)
    mean = xg.mean(axis=(1, 3), keepdims=True)
    var = ((xg - mean) ** 2).mean(axis=(1, 3), keepdims=True)
    xn = (xg - mean) / jnp.sqrt(var + eps)
    return xn.reshape(N, D, H, W, C) * gamma.reshape(1, 1, 1, 1, C) + \
        beta.reshape(1, 1, 1, 1, C)


def _conv3_ref(x, w, b):
    y = lax.conv_general_dilated(
        x, w, window_strides=(1, 1, 1), padding=((1, 1), (1, 1), (1, 1)),
        dimension_numbers=("NDHWC", "DHWIO", "NDHWC"),
        precision=lax.Precision.HIGHEST)
    return y + b.reshape(1, 1, 1, 1, -1)


def reference_block(x_ncdhw, params, G):
    w1, b1, g1, be1, w2, b2, g2, be2, ws, bs = params
    Cin, Cout = x_ncdhw.shape[1], w1.shape[-1]
    x = jnp.transpose(x_ncdhw, (0, 2, 3, 4, 1))
    if Cin != Cout:
        identity = jnp.einsum("ndhwc,co->ndhwo", x, ws,
                              precision=lax.Precision.HIGHEST) \
            + bs.reshape(1, 1, 1, 1, -1)
    else:
        identity = x
    out = jax.nn.relu(_gn_ref(_conv3_ref(x, w1, b1), g1, be1, G))
    out = _gn_ref(_conv3_ref(out, w2, b2), g2, be2, G)
    out = jax.nn.relu(out + identity)
    return jnp.transpose(out, (0, 4, 1, 2, 3))


# ----------------------------------------------------------------------------
if __name__ == "__main__":
    def run_case(key, N, Cin, Cout, D, H, W):
        G = min(32, Cout // 4)
        k_x, k_p = jax.random.split(key)
        ks = jax.random.split(k_p, 10)
        s1 = (27.0 * Cin) ** -0.5
        s2 = (27.0 * Cout) ** -0.5
        ss = (1.0 * Cin) ** -0.5
        w1 = jax.random.uniform(ks[0], (3, 3, 3, Cin, Cout), jnp.float32, -s1, s1)
        b1 = jax.random.uniform(ks[1], (Cout,), jnp.float32, -s1, s1)
        g1 = 1.0 + 0.1 * jax.random.normal(ks[2], (Cout,), jnp.float32)
        be1 = 0.05 * jax.random.normal(ks[3], (Cout,), jnp.float32)
        w2 = jax.random.uniform(ks[4], (3, 3, 3, Cout, Cout), jnp.float32, -s2, s2)
        b2 = jax.random.uniform(ks[5], (Cout,), jnp.float32, -s2, s2)
        g2 = 1.0 + 0.1 * jax.random.normal(ks[6], (Cout,), jnp.float32)
        be2 = 0.05 * jax.random.normal(ks[7], (Cout,), jnp.float32)
        ws = jax.random.uniform(ks[8], (Cin, Cout), jnp.float32, -ss, ss)
        bs = jax.random.uniform(ks[9], (Cout,), jnp.float32, -ss, ss)
        params = (w1, b1, g1, be1, w2, b2, g2, be2, ws, bs)

        x = jax.random.normal(k_x, (N, Cin, D, H, W), jnp.float32)   # NCDHW
        out = jax.block_until_ready(residual_block_3d(x, params, G))
        ref = reference_block(x, params, G)
        err = float(jnp.max(jnp.abs(out - ref)))
        assert out.shape == (N, Cout, D, H, W), out.shape
        # bf16 MXU operands with f32 accumulation / f32 GN statistics.
        assert err < 5e-2, f"max abs err {err}"
        return err

    key = jax.random.PRNGKey(0)
    k1, k2 = jax.random.split(key)
    run_case(k1, N=2, Cin=8, Cout=16, D=8, H=8, W=8)    # projection (1x1x1) skip
    run_case(k2, N=2, Cin=16, Cout=16, D=8, H=8, W=8)   # identity skip
    print("KERNEL_OK")
</pallas_src>

<mosaic_0001>
module attributes {stable_mosaic.version = 11 : i64} {
  func.func @_residual_block_kernel(%arg0: i32, %arg1: memref<1x8x8x64xf32, #tpu.memory_space<vmem>>, %arg2: memref<9x64x128xbf16, #tpu.memory_space<vmem>>, %arg3: memref<9x128x128xbf16, #tpu.memory_space<vmem>>, %arg4: memref<64x128xbf16, #tpu.memory_space<vmem>>, %arg5: memref<7x128xf32, #tpu.memory_space<vmem>>, %arg6: memref<128x4xf32, #tpu.memory_space<vmem>>, %arg7: memref<4x128xf32, #tpu.memory_space<vmem>>, %arg8: memref<1x8x8x128xf32, #tpu.memory_space<vmem>>, %arg9: memref<10x10x64xf32, #tpu.memory_space<vmem>>, %arg10: memref<10x10x128xf32, #tpu.memory_space<vmem>>) attributes {dimension_semantics = [#tpu.dimension_semantics<parallel>], iteration_bounds = array<i64: 2>, scalar_prefetch = 0 : i64, scratch_operands = 2 : i64, tpu.core_type = #tpu.core_type<tc>, window_params = [{transform_indices = @transform_0, window_bounds = array<i64: 1, 8, 8, 64>}, {pipeline_mode = #tpu.pipeline_mode<synchronous>, transform_indices = @transform_1, window_bounds = array<i64: 9, 64, 128>}, {pipeline_mode = #tpu.pipeline_mode<synchronous>, transform_indices = @transform_2, window_bounds = array<i64: 9, 128, 128>}, {pipeline_mode = #tpu.pipeline_mode<synchronous>, transform_indices = @transform_3, window_bounds = array<i64: 64, 128>}, {pipeline_mode = #tpu.pipeline_mode<synchronous>, transform_indices = @transform_4, window_bounds = array<i64: 7, 128>}, {pipeline_mode = #tpu.pipeline_mode<synchronous>, transform_indices = @transform_5, window_bounds = array<i64: 128, 4>}, {pipeline_mode = #tpu.pipeline_mode<synchronous>, transform_indices = @transform_6, window_bounds = array<i64: 4, 128>}, {transform_indices = @transform_7, window_bounds = array<i64: 1, 8, 8, 128>}]} {
    %cst = arith.constant 0.000000e+00 : f32
    %0 = vector.broadcast %cst : f32 to vector<1x10x64xf32>
    %c0 = arith.constant 0 : index
    %c0_0 = arith.constant 0 : index
    %c0_1 = arith.constant 0 : index
    %1 = vector.load %arg9[%c0, %c0_0, %c0_1] : memref<10x10x64xf32, #tpu.memory_space<vmem>>, vector<1x10x64xf32>
    tpu.vector_store %arg9[%c0, %c0_0, %c0_1], %0 {strides = array<i32>} : memref<10x10x64xf32, #tpu.memory_space<vmem>>, vector<1x10x64xf32>,
    %cst_2 = arith.constant 0.000000e+00 : f32
    %2 = vector.broadcast %cst_2 : f32 to vector<1x10x64xf32>
    %c9 = arith.constant 9 : index
    %c0_3 = arith.constant 0 : index
    %c0_4 = arith.constant 0 : index
    %3 = vector.load %arg9[%c9, %c0_3, %c0_4] : memref<10x10x64xf32, #tpu.memory_space<vmem>>, vector<1x10x64xf32>
    tpu.vector_store %arg9[%c9, %c0_3, %c0_4], %2 {strides = array<i32>} : memref<10x10x64xf32, #tpu.memory_space<vmem>>, vector<1x10x64xf32>,
    %cst_5 = arith.constant 0.000000e+00 : f32
    %4 = vector.broadcast %cst_5 : f32 to vector<10x1x64xf32>
    %c0_6 = arith.constant 0 : index
    %c0_7 = arith.constant 0 : index
    %c0_8 = arith.constant 0 : index
    %5 = vector.load %arg9[%c0_6, %c0_7, %c0_8] : memref<10x10x64xf32, #tpu.memory_space<vmem>>, vector<10x1x64xf32>
    tpu.vector_store %arg9[%c0_6, %c0_7, %c0_8], %4 {strides = array<i32>} : memref<10x10x64xf32, #tpu.memory_space<vmem>>, vector<10x1x64xf32>,
    %cst_9 = arith.constant 0.000000e+00 : f32
    %6 = vector.broadcast %cst_9 : f32 to vector<10x1x64xf32>
    %c0_10 = arith.constant 0 : index
    %c9_11 = arith.constant 9 : index
    %c0_12 = arith.constant 0 : index
    %7 = vector.load %arg9[%c0_10, %c9_11, %c0_12] : memref<10x10x64xf32, #tpu.memory_space<vmem>>, vector<10x1x64xf32>
    tpu.vector_store %arg9[%c0_10, %c9_11, %c0_12], %6 {strides = array<i32>} : memref<10x10x64xf32, #tpu.memory_space<vmem>>, vector<10x1x64xf32>,
    %cst_13 = arith.constant 0.000000e+00 : f32
    %8 = vector.broadcast %cst_13 : f32 to vector<1x10x128xf32>
    %c0_14 = arith.constant 0 : index
    %c0_15 = arith.constant 0 : index
    %c0_16 = arith.constant 0 : index
    %9 = vector.load %arg10[%c0_14, %c0_15, %c0_16] : memref<10x10x128xf32, #tpu.memory_space<vmem>>, vector<1x10x128xf32>
    tpu.vector_store %arg10[%c0_14, %c0_15, %c0_16], %8 {strides = array<i32>} : memref<10x10x128xf32, #tpu.memory_space<vmem>>, vector<1x10x128xf32>,
    %cst_17 = arith.constant 0.000000e+00 : f32
    %10 = vector.broadcast %cst_17 : f32 to vector<1x10x128xf32>
    %c9_18 = arith.constant 9 : index
    %c0_19 = arith.constant 0 : index
    %c0_20 = arith.constant 0 : index
    %11 = vector.load %arg10[%c9_18, %c0_19, %c0_20] : memref<10x10x128xf32, #tpu.memory_space<vmem>>, vector<1x10x128xf32>
    tpu.vector_store %arg10[%c9_18, %c0_19, %c0_20], %10 {strides = array<i32>} : memref<10x10x128xf32, #tpu.memory_space<vmem>>, vector<1x10x128xf32>,
    %cst_21 = arith.constant 0.000000e+00 : f32
    %12 = vector.broadcast %cst_21 : f32 to vector<10x1x128xf32>
    %c0_22 = arith.constant 0 : index
    %c0_23 = arith.constant 0 : index
    %c0_24 = arith.constant 0 : index
    %13 = vector.load %arg10[%c0_22, %c0_23, %c0_24] : memref<10x10x128xf32, #tpu.memory_space<vmem>>, vector<10x1x128xf32>
    tpu.vector_store %arg10[%c0_22, %c0_23, %c0_24], %12 {strides = array<i32>} : memref<10x10x128xf32, #tpu.memory_space<vmem>>, vector<10x1x128xf32>,
    %cst_25 = arith.constant 0.000000e+00 : f32
    %14 = vector.broadcast %cst_25 : f32 to vector<10x1x128xf32>
    %c0_26 = arith.constant 0 : index
    %c9_27 = arith.constant 9 : index
    %c0_28 = arith.constant 0 : index
    %15 = vector.load %arg10[%c0_26, %c9_27, %c0_28] : memref<10x10x128xf32, #tpu.memory_space<vmem>>, vector<10x1x128xf32>
    tpu.vector_store %arg10[%c0_26, %c9_27, %c0_28], %14 {strides = array<i32>} : memref<10x10x128xf32, #tpu.memory_space<vmem>>, vector<10x1x128xf32>,
    %c0_29 = arith.constant 0 : index
    %c0_30 = arith.constant 0 : index
    %c0_31 = arith.constant 0 : index
    %c0_32 = arith.constant 0 : index
    %16 = vector.load %arg1[%c0_29, %c0_30, %c0_31, %c0_32] : memref<1x8x8x64xf32, #tpu.memory_space<vmem>>, vector<1x8x8x64xf32>
    %17 = vector.shape_cast %16 : vector<1x8x8x64xf32> to vector<8x8x64xf32>
    %c1 = arith.constant 1 : index
    %c1_33 = arith.constant 1 : index
    %c0_34 = arith.constant 0 : index
    %18 = vector.load %arg9[%c1, %c1_33, %c0_34] : memref<10x10x64xf32, #tpu.memory_space<vmem>>, vector<8x8x64xf32>
    tpu.vector_store %arg9[%c1, %c1_33, %c0_34], %17 {strides = array<i32>} : memref<10x10x64xf32, #tpu.memory_space<vmem>>, vector<8x8x64xf32>,
    %c0_35 = arith.constant 0 : index
    %c0_36 = arith.constant 0 : index
    %19 = vector.load %arg5[%c0_35, %c0_36] : memref<7x128xf32, #tpu.memory_space<vmem>>, vector<7x128xf32>
    %c0_37 = arith.constant 0 : index
    %c0_38 = arith.constant 0 : index
    %20 = vector.load %arg6[%c0_37, %c0_38] : memref<128x4xf32, #tpu.memory_space<vmem>>, vector<128x4xf32>
    %c0_39 = arith.constant 0 : index
    %c0_40 = arith.constant 0 : index
    %21 = vector.load %arg7[%c0_39, %c0_40] : memref<4x128xf32, #tpu.memory_space<vmem>>, vector<4x128xf32>
    %cst_41 = arith.constant 0.000000e+00 : f32
    %22 = vector.broadcast %cst_41 : f32 to vector<64x128xf32>
    %c0_42 = arith.constant 0 : index
    %c0_43 = arith.constant 0 : index
    %c0_44 = arith.constant 0 : index
    %23 = vector.load %arg9[%c0_42, %c0_43, %c0_44] : memref<10x10x64xf32, #tpu.memory_space<vmem>>, vector<8x8x64xf32>
    %24 = vector.shape_cast %23 : vector<8x8x64xf32> to vector<64x64xf32>
    %25 = arith.truncf %24 : vector<64x64xf32> to vector<64x64xbf16>
    %c0_45 = arith.constant 0 : index
    %c0_46 = arith.constant 0 : index
    %c0_47 = arith.constant 0 : index
    %26 = vector.load %arg2[%c0_45, %c0_46, %c0_47] : memref<9x64x128xbf16, #tpu.memory_space<vmem>>, vector<1x64x128xbf16>
    %27 = vector.shape_cast %26 : vector<1x64x128xbf16> to vector<64x128xbf16>
    %cst_48 = arith.constant dense<0.000000e+00> : vector<64x128xf32>
    %28 = tpu.matmul %25, %27, %cst_48 {dimension_numbers = #tpu.dot_dimension_numbers<[1], [0], [0], [1], [0, 0, 1, 1], [], []>} : vector<64x64xbf16>, vector<64x128xbf16>, vector<64x128xf32> -> vector<64x128xf32>
    %29 = arith.addf %22, %28 : vector<64x128xf32>
    %c0_49 = arith.constant 0 : index
    %c1_50 = arith.constant 1 : index
    %c0_51 = arith.constant 0 : index
    %30 = vector.load %arg9[%c0_49, %c1_50, %c0_51] : memref<10x10x64xf32, #tpu.memory_space<vmem>>, vector<8x8x64xf32>
    %31 = vector.shape_cast %30 : vector<8x8x64xf32> to vector<64x64xf32>
    %32 = arith.truncf %31 : vector<64x64xf32> to vector<64x64xbf16>
    %c1_52 = arith.constant 1 : index
    %c0_53 = arith.constant 0 : index
    %c0_54 = arith.constant 0 : index
    %33 = vector.load %arg2[%c1_52, %c0_53, %c0_54] : memref<9x64x128xbf16, #tpu.memory_space<vmem>>, vector<1x64x128xbf16>
    %34 = vector.shape_cast %33 : vector<1x64x128xbf16> to vector<64x128xbf16>
    %cst_55 = arith.constant dense<0.000000e+00> : vector<64x128xf32>
    %35 = tpu.matmul %32, %34, %cst_55 {dimension_numbers = #tpu.dot_dimension_numbers<[1], [0], [0], [1], [0, 0, 1, 1], [], []>} : vector<64x64xbf16>, vector<64x128xbf16>, vector<64x128xf32> -> vector<64x128xf32>
    %36 = arith.addf %29, %35 : vector<64x128xf32>
    %c0_56 = arith.constant 0 : index
    %c2 = arith.constant 2 : index
    %c0_57 = arith.constant 0 : index
    %37 = vector.load %arg9[%c0_56, %c2, %c0_57] : memref<10x10x64xf32, #tpu.memory_space<vmem>>, vector<8x8x64xf32>
    %38 = vector.shape_cast %37 : vector<8x8x64xf32> to vector<64x64xf32>
    %39 = arith.truncf %38 : vector<64x64xf32> to vector<64x64xbf16>
    %c2_58 = arith.constant 2 : index
    %c0_59 = arith.constant 0 : index
    %c0_60 = arith.constant 0 : index
    %40 = vector.load %arg2[%c2_58, %c0_59, %c0_60] : memref<9x64x128xbf16, #tpu.memory_space<vmem>>, vector<1x64x128xbf16>
    %41 = vector.shape_cast %40 : vector<1x64x128xbf16> to vector<64x128xbf16>
    %cst_61 = arith.constant dense<0.000000e+00> : vector<64x128xf32>
    %42 = tpu.matmul %39, %41, %cst_61 {dimension_numbers = #tpu.dot_dimension_numbers<[1], [0], [0], [1], [0, 0, 1, 1], [], []>} : vector<64x64xbf16>, vector<64x128xbf16>, vector<64x128xf32> -> vector<64x128xf32>
    %43 = arith.addf %36, %42 : vector<64x128xf32>
    %c1_62 = arith.constant 1 : index
    %c0_63 = arith.constant 0 : index
    %c0_64 = arith.constant 0 : index
    %44 = vector.load %arg9[%c1_62, %c0_63, %c0_64] : memref<10x10x64xf32, #tpu.memory_space<vmem>>, vector<8x8x64xf32>
    %45 = vector.shape_cast %44 : vector<8x8x64xf32> to vector<64x64xf32>
    %46 = arith.truncf %45 : vector<64x64xf32> to vector<64x64xbf16>
    %c3 = arith.constant 3 : index
    %c0_65 = arith.constant 0 : index
    %c0_66 = arith.constant 0 : index
    %47 = vector.load %arg2[%c3, %c0_65, %c0_66] : memref<9x64x128xbf16, #tpu.memory_space<vmem>>, vector<1x64x128xbf16>
    %48 = vector.shape_cast %47 : vector<1x64x128xbf16> to vector<64x128xbf16>
    %cst_67 = arith.constant dense<0.000000e+00> : vector<64x128xf32>
    %49 = tpu.matmul %46, %48, %cst_67 {dimension_numbers = #tpu.dot_dimension_numbers<[1], [0], [0], [1], [0, 0, 1, 1], [], []>} : vector<64x64xbf16>, vector<64x128xbf16>, vector<64x128xf32> -> vector<64x128xf32>
    %50 = arith.addf %43, %49 : vector<64x128xf32>
    %c1_68 = arith.constant 1 : index
    %c1_69 = arith.constant 1 : index
    %c0_70 = arith.constant 0 : index
    %51 = vector.load %arg9[%c1_68, %c1_69, %c0_70] : memref<10x10x64xf32, #tpu.memory_space<vmem>>, vector<8x8x64xf32>
    %52 = vector.shape_cast %51 : vector<8x8x64xf32> to vector<64x64xf32>
    %53 = arith.truncf %52 : vector<64x64xf32> to vector<64x64xbf16>
    %c4 = arith.constant 4 : index
    %c0_71 = arith.constant 0 : index
    %c0_72 = arith.constant 0 : index
    %54 = vector.load %arg2[%c4, %c0_71, %c0_72] : memref<9x64x128xbf16, #tpu.memory_space<vmem>>, vector<1x64x128xbf16>
    %55 = vector.shape_cast %54 : vector<1x64x128xbf16> to vector<64x128xbf16>
    %cst_73 = arith.constant dense<0.000000e+00> : vector<64x128xf32>
    %56 = tpu.matmul %53, %55, %cst_73 {dimension_numbers = #tpu.dot_dimension_numbers<[1], [0], [0], [1], [0, 0, 1, 1], [], []>} : vector<64x64xbf16>, vector<64x128xbf16>, vector<64x128xf32> -> vector<64x128xf32>
    %57 = arith.addf %50, %56 : vector<64x128xf32>
    %c1_74 = arith.constant 1 : index
    %c2_75 = arith.constant 2 : index
    %c0_76 = arith.constant 0 : index
    %58 = vector.load %arg9[%c1_74, %c2_75, %c0_76] : memref<10x10x64xf32, #tpu.memory_space<vmem>>, vector<8x8x64xf32>
    %59 = vector.shape_cast %58 : vector<8x8x64xf32> to vector<64x64xf32>
    %60 = arith.truncf %59 : vector<64x64xf32> to vector<64x64xbf16>
    %c5 = arith.constant 5 : index
    %c0_77 = arith.constant 0 : index
    %c0_78 = arith.constant 0 : index
    %61 = vector.load %arg2[%c5, %c0_77, %c0_78] : memref<9x64x128xbf16, #tpu.memory_space<vmem>>, vector<1x64x128xbf16>
    %62 = vector.shape_cast %61 : vector<1x64x128xbf16> to vector<64x128xbf16>
    %cst_79 = arith.constant dense<0.000000e+00> : vector<64x128xf32>
    %63 = tpu.matmul %60, %62, %cst_79 {dimension_numbers = #tpu.dot_dimension_numbers<[1], [0], [0], [1], [0, 0, 1, 1], [], []>} : vector<64x64xbf16>, vector<64x128xbf16>, vector<64x128xf32> -> vector<64x128xf32>
    %64 = arith.addf %57, %63 : vector<64x128xf32>
    %c2_80 = arith.constant 2 : index
    %c0_81 = arith.constant 0 : index
    %c0_82 = arith.constant 0 : index
    %65 = vector.load %arg9[%c2_80, %c0_81, %c0_82] : memref<10x10x64xf32, #tpu.memory_space<vmem>>, vector<8x8x64xf32>
    %66 = vector.shape_cast %65 : vector<8x8x64xf32> to vector<64x64xf32>
    %67 = arith.truncf %66 : vector<64x64xf32> to vector<64x64xbf16>
    %c6 = arith.constant 6 : index
    %c0_83 = arith.constant 0 : index
    %c0_84 = arith.constant 0 : index
    %68 = vector.load %arg2[%c6, %c0_83, %c0_84] : memref<9x64x128xbf16, #tpu.memory_space<vmem>>, vector<1x64x128xbf16>
    %69 = vector.shape_cast %68 : vector<1x64x128xbf16> to vector<64x128xbf16>
    %cst_85 = arith.constant dense<0.000000e+00> : vector<64x128xf32>
    %70 = tpu.matmul %67, %69, %cst_85 {dimension_numbers = #tpu.dot_dimension_numbers<[1], [0], [0], [1], [0, 0, 1, 1], [], []>} : vector<64x64xbf16>, vector<64x128xbf16>, vector<64x128xf32> -> vector<64x128xf32>
    %71 = arith.addf %64, %70 : vector<64x128xf32>
    %c2_86 = arith.constant 2 : index
    %c1_87 = arith.constant 1 : index
    %c0_88 = arith.constant 0 : index
    %72 = vector.load %arg9[%c2_86, %c1_87, %c0_88] : memref<10x10x64xf32, #tpu.memory_space<vmem>>, vector<8x8x64xf32>
    %73 = vector.shape_cast %72 : vector<8x8x64xf32> to vector<64x64xf32>
    %74 = arith.truncf %73 : vector<64x64xf32> to vector<64x64xbf16>
    %c7 = arith.constant 7 : index
    %c0_89 = arith.constant 0 : index
    %c0_90 = arith.constant 0 : index
    %75 = vector.load %arg2[%c7, %c0_89, %c0_90] : memref<9x64x128xbf16, #tpu.memory_space<vmem>>, vector<1x64x128xbf16>
    %76 = vector.shape_cast %75 : vector<1x64x128xbf16> to vector<64x128xbf16>
    %cst_91 = arith.constant dense<0.000000e+00> : vector<64x128xf32>
    %77 = tpu.matmul %74, %76, %cst_91 {dimension_numbers = #tpu.dot_dimension_numbers<[1], [0], [0], [1], [0, 0, 1, 1], [], []>} : vector<64x64xbf16>, vector<64x128xbf16>, vector<64x128xf32> -> vector<64x128xf32>
    %78 = arith.addf %71, %77 : vector<64x128xf32>
    %c2_92 = arith.constant 2 : index
    %c2_93 = arith.constant 2 : index
    %c0_94 = arith.constant 0 : index
    %79 = vector.load %arg9[%c2_92, %c2_93, %c0_94] : memref<10x10x64xf32, #tpu.memory_space<vmem>>, vector<8x8x64xf32>
    %80 = vector.shape_cast %79 : vector<8x8x64xf32> to vector<64x64xf32>
    %81 = arith.truncf %80 : vector<64x64xf32> to vector<64x64xbf16>
    %c8 = arith.constant 8 : index
    %c0_95 = arith.constant 0 : index
    %c0_96 = arith.constant 0 : index
    %82 = vector.load %arg2[%c8, %c0_95, %c0_96] : memref<9x64x128xbf16, #tpu.memory_space<vmem>>, vector<1x64x128xbf16>
    %83 = vector.shape_cast %82 : vector<1x64x128xbf16> to vector<64x128xbf16>
    %cst_97 = arith.constant dense<0.000000e+00> : vector<64x128xf32>
    %84 = tpu.matmul %81, %83, %cst_97 {dimension_numbers = #tpu.dot_dimension_numbers<[1], [0], [0], [1], [0, 0, 1, 1], [], []>} : vector<64x64xbf16>, vector<64x128xbf16>, vector<64x128xf32> -> vector<64x128xf32>
    %85 = arith.addf %78, %84 : vector<64x128xf32>
    %86 = vector.extract_strided_slice %19 {offsets = [0, 0], sizes = [1, 128], strides = [1, 1]} : vector<7x128xf32> to vector<1x128xf32>
    %87 = vector.broadcast %86 : vector<1x128xf32> to vector<64x128xf32>
    %88 = arith.addf %85, %87 : vector<64x128xf32>
    %89 = vector.extract_strided_slice %19 {offsets = [1, 0], sizes = [1, 128], strides = [1, 1]} : vector<7x128xf32> to vector<1x128xf32>
    %90 = vector.extract_strided_slice %19 {offsets = [2, 0], sizes = [1, 128], strides = [1, 1]} : vector<7x128xf32> to vector<1x128xf32>
    %cst_98 = arith.constant dense<0.000000e+00> : vector<128xf32>
    %91 = vector.multi_reduction <add>, %88, %cst_98 [0] : vector<64x128xf32> to vector<128xf32>
    %92 = vector.shape_cast %91 : vector<128xf32> to vector<1x128xf32>
    %93 = arith.mulf %88, %88 : vector<64x128xf32>
    %cst_99 = arith.constant dense<0.000000e+00> : vector<128xf32>
    %94 = vector.multi_reduction <add>, %93, %cst_99 [0] : vector<64x128xf32> to vector<128xf32>
    %95 = vector.shape_cast %94 : vector<128xf32> to vector<1x128xf32>
    %96 = tpu.concatenate %92, %95 in 0 : vector<1x128xf32>, vector<1x128xf32> -> vector<2x128xf32>
    %cst_100 = arith.constant dense<0.000000e+00> : vector<2x4xf32>
    %97 = tpu.matmul %96, %20, %cst_100 {dimension_numbers = #tpu.dot_dimension_numbers<[1], [0], [0], [1], [0, 0, 1, 1], [], []>} : vector<2x128xf32>, vector<128x4xf32>, vector<2x4xf32> -> vector<2x4xf32>
    %cst_101 = arith.constant 4.8828125E-4 : f32
    %98 = vector.broadcast %cst_101 : f32 to vector<2x4xf32>
    %99 = arith.mulf %97, %98 : vector<2x4xf32>
    %100 = vector.extract_strided_slice %99 {offsets = [0, 0], sizes = [1, 4], strides = [1, 1]} : vector<2x4xf32> to vector<1x4xf32>
    %101 = vector.extract_strided_slice %99 {offsets = [1, 0], sizes = [1, 4], strides = [1, 1]} : vector<2x4xf32> to vector<1x4xf32>
    %102 = arith.mulf %100, %100 : vector<1x4xf32>
    %103 = arith.subf %101, %102 : vector<1x4xf32>
    %cst_102 = arith.constant 0.000000e+00 : f32
    %104 = vector.broadcast %cst_102 : f32 to vector<1x4xf32>
    %105 = arith.maximumf %103, %104 : vector<1x4xf32>
    %cst_103 = arith.constant 9.99999974E-6 : f32
    %106 = vector.broadcast %cst_103 : f32 to vector<1x4xf32>
    %107 = arith.addf %105, %106 : vector<1x4xf32>
    %108 = math.rsqrt %107 : vector<1x4xf32>
    %109 = tpu.concatenate %100, %108 in 0 : vector<1x4xf32>, vector<1x4xf32> -> vector<2x4xf32>
    %cst_104 = arith.constant dense<0.000000e+00> : vector<2x128xf32>
    %110 = tpu.matmul %109, %21, %cst_104 {dimension_numbers = #tpu.dot_dimension_numbers<[1], [0], [0], [1], [0, 0, 1, 1], [], []>} : vector<2x4xf32>, vector<4x128xf32>, vector<2x128xf32> -> vector<2x128xf32>
    %111 = vector.extract_strided_slice %110 {offsets = [0, 0], sizes = [1, 128], strides = [1, 1]} : vector<2x128xf32> to vector<1x128xf32>
    %112 = vector.broadcast %111 : vector<1x128xf32> to vector<64x128xf32>
    %113 = arith.subf %88, %112 : vector<64x128xf32>
    %114 = vector.extract_strided_slice %110 {offsets = [1, 0], sizes = [1, 128], strides = [1, 1]} : vector<2x128xf32> to vector<1x128xf32>
    %115 = vector.broadcast %114 : vector<1x128xf32> to vector<64x128xf32>
    %116 = arith.mulf %113, %115 : vector<64x128xf32>
    %117 = vector.broadcast %89 : vector<1x128xf32> to vector<64x128xf32>
    %118 = arith.mulf %116, %117 : vector<64x128xf32>
    %119 = vector.broadcast %90 : vector<1x128xf32> to vector<64x128xf32>
    %120 = arith.addf %118, %119 : vector<64x128xf32>
    %cst_105 = arith.constant 0.000000e+00 : f32
    %121 = vector.broadcast %cst_105 : f32 to vector<64x128xf32>
    %122 = arith.maximumf %120, %121 : vector<64x128xf32>
    %123 = vector.shape_cast %122 : vector<64x128xf32> to vector<8x8x128xf32>
    %c1_106 = arith.constant 1 : index
    %c1_107 = arith.constant 1 : index
    %c0_108 = arith.constant 0 : index
    %124 = vector.load %arg10[%c1_106, %c1_107, %c0_108] : memref<10x10x128xf32, #tpu.memory_space<vmem>>, vector<8x8x128xf32>
    tpu.vector_store %arg10[%c1_106, %c1_107, %c0_108], %123 {strides = array<i32>} : memref<10x10x128xf32, #tpu.memory_space<vmem>>, vector<8x8x128xf32>,
    %cst_109 = arith.constant 0.000000e+00 : f32
    %125 = vector.broadcast %cst_109 : f32 to vector<64x128xf32>
    %c0_110 = arith.constant 0 : index
    %c0_111 = arith.constant 0 : index
    %c0_112 = arith.constant 0 : index
    %126 = vector.load %arg10[%c0_110, %c0_111, %c0_112] : memref<10x10x128xf32, #tpu.memory_space<vmem>>, vector<8x8x128xf32>
    %127 = vector.shape_cast %126 : vector<8x8x128xf32> to vector<64x128xf32>
    %128 = arith.truncf %127 : vector<64x128xf32> to vector<64x128xbf16>
    %c0_113 = arith.constant 0 : index
    %c0_114 = arith.constant 0 : index
    %c0_115 = arith.constant 0 : index
    %129 = vector.load %arg3[%c0_113, %c0_114, %c0_115] : memref<9x128x128xbf16, #tpu.memory_space<vmem>>, vector<1x128x128xbf16>
    %130 = vector.shape_cast %129 : vector<1x128x128xbf16> to vector<128x128xbf16>
    %cst_116 = arith.constant dense<0.000000e+00> : vector<64x128xf32>
    %131 = tpu.matmul %128, %130, %cst_116 {dimension_numbers = #tpu.dot_dimension_numbers<[1], [0], [0], [1], [0, 0, 1, 1], [], []>} : vector<64x128xbf16>, vector<128x128xbf16>, vector<64x128xf32> -> vector<64x128xf32>
    %132 = arith.addf %125, %131 : vector<64x128xf32>
    %c0_117 = arith.constant 0 : index
    %c1_118 = arith.constant 1 : index
    %c0_119 = arith.constant 0 : index
    %133 = vector.load %arg10[%c0_117, %c1_118, %c0_119] : memref<10x10x128xf32, #tpu.memory_space<vmem>>, vector<8x8x128xf32>
    %134 = vector.shape_cast %133 : vector<8x8x128xf32> to vector<64x128xf32>
    %135 = arith.truncf %134 : vector<64x128xf32> to vector<64x128xbf16>
    %c1_120 = arith.constant 1 : index
    %c0_121 = arith.constant 0 : index
    %c0_122 = arith.constant 0 : index
    %136 = vector.load %arg3[%c1_120, %c0_121, %c0_122] : memref<9x128x128xbf16, #tpu.memory_space<vmem>>, vector<1x128x128xbf16>
    %137 = vector.shape_cast %136 : vector<1x128x128xbf16> to vector<128x128xbf16>
    %cst_123 = arith.constant dense<0.000000e+00> : vector<64x128xf32>
    %138 = tpu.matmul %135, %137, %cst_123 {dimension_numbers = #tpu.dot_dimension_numbers<[1], [0], [0], [1], [0, 0, 1, 1], [], []>} : vector<64x128xbf16>, vector<128x128xbf16>, vector<64x128xf32> -> vector<64x128xf32>
    %139 = arith.addf %132, %138 : vector<64x128xf32>
    %c0_124 = arith.constant 0 : index
    %c2_125 = arith.constant 2 : index
    %c0_126 = arith.constant 0 : index
    %140 = vector.load %arg10[%c0_124, %c2_125, %c0_126] : memref<10x10x128xf32, #tpu.memory_space<vmem>>, vector<8x8x128xf32>
    %141 = vector.shape_cast %140 : vector<8x8x128xf32> to vector<64x128xf32>
    %142 = arith.truncf %141 : vector<64x128xf32> to vector<64x128xbf16>
    %c2_127 = arith.constant 2 : index
    %c0_128 = arith.constant 0 : index
    %c0_129 = arith.constant 0 : index
    %143 = vector.load %arg3[%c2_127, %c0_128, %c0_129] : memref<9x128x128xbf16, #tpu.memory_space<vmem>>, vector<1x128x128xbf16>
    %144 = vector.shape_cast %143 : vector<1x128x128xbf16> to vector<128x128xbf16>
    %cst_130 = arith.constant dense<0.000000e+00> : vector<64x128xf32>
    %145 = tpu.matmul %142, %144, %cst_130 {dimension_numbers = #tpu.dot_dimension_numbers<[1], [0], [0], [1], [0, 0, 1, 1], [], []>} : vector<64x128xbf16>, vector<128x128xbf16>, vector<64x128xf32> -> vector<64x128xf32>
    %146 = arith.addf %139, %145 : vector<64x128xf32>
    %c1_131 = arith.constant 1 : index
    %c0_132 = arith.constant 0 : index
    %c0_133 = arith.constant 0 : index
    %147 = vector.load %arg10[%c1_131, %c0_132, %c0_133] : memref<10x10x128xf32, #tpu.memory_space<vmem>>, vector<8x8x128xf32>
    %148 = vector.shape_cast %147 : vector<8x8x128xf32> to vector<64x128xf32>
    %149 = arith.truncf %148 : vector<64x128xf32> to vector<64x128xbf16>
    %c3_134 = arith.constant 3 : index
    %c0_135 = arith.constant 0 : index
    %c0_136 = arith.constant 0 : index
    %150 = vector.load %arg3[%c3_134, %c0_135, %c0_136] : memref<9x128x128xbf16, #tpu.memory_space<vmem>>, vector<1x128x128xbf16>
    %151 = vector.shape_cast %150 : vector<1x128x128xbf16> to vector<128x128xbf16>
    %cst_137 = arith.constant dense<0.000000e+00> : vector<64x128xf32>
    %152 = tpu.matmul %149, %151, %cst_137 {dimension_numbers = #tpu.dot_dimension_numbers<[1], [0], [0], [1], [0, 0, 1, 1], [], []>} : vector<64x128xbf16>, vector<128x128xbf16>, vector<64x128xf32> -> vector<64x128xf32>
    %153 = arith.addf %146, %152 : vector<64x128xf32>
    %c1_138 = arith.constant 1 : index
    %c1_139 = arith.constant 1 : index
    %c0_140 = arith.constant 0 : index
    %154 = vector.load %arg10[%c1_138, %c1_139, %c0_140] : memref<10x10x128xf32, #tpu.memory_space<vmem>>, vector<8x8x128xf32>
    %155 = vector.shape_cast %154 : vector<8x8x128xf32> to vector<64x128xf32>
    %156 = arith.truncf %155 : vector<64x128xf32> to vector<64x128xbf16>
    %c4_141 = arith.constant 4 : index
    %c0_142 = arith.constant 0 : index
    %c0_143 = arith.constant 0 : index
    %157 = vector.load %arg3[%c4_141, %c0_142, %c0_143] : memref<9x128x128xbf16, #tpu.memory_space<vmem>>, vector<1x128x128xbf16>
    %158 = vector.shape_cast %157 : vector<1x128x128xbf16> to vector<128x128xbf16>
    %cst_144 = arith.constant dense<0.000000e+00> : vector<64x128xf32>
    %159 = tpu.matmul %156, %158, %cst_144 {dimension_numbers = #tpu.dot_dimension_numbers<[1], [0], [0], [1], [0, 0, 1, 1], [], []>} : vector<64x128xbf16>, vector<128x128xbf16>, vector<64x128xf32> -> vector<64x128xf32>
    %160 = arith.addf %153, %159 : vector<64x128xf32>
    %c1_145 = arith.constant 1 : index
    %c2_146 = arith.constant 2 : index
    %c0_147 = arith.constant 0 : index
    %161 = vector.load %arg10[%c1_145, %c2_146, %c0_147] : memref<10x10x128xf32, #tpu.memory_space<vmem>>, vector<8x8x128xf32>
    %162 = vector.shape_cast %161 : vector<8x8x128xf32> to vector<64x128xf32>
    %163 = arith.truncf %162 : vector<64x128xf32> to vector<64x128xbf16>
    %c5_148 = arith.constant 5 : index
    %c0_149 = arith.constant 0 : index
    %c0_150 = arith.constant 0 : index
    %164 = vector.load %arg3[%c5_148, %c0_149, %c0_150] : memref<9x128x128xbf16, #tpu.memory_space<vmem>>, vector<1x128x128xbf16>
    %165 = vector.shape_cast %164 : vector<1x128x128xbf16> to vector<128x128xbf16>
    %cst_151 = arith.constant dense<0.000000e+00> : vector<64x128xf32>
    %166 = tpu.matmul %163, %165, %cst_151 {dimension_numbers = #tpu.dot_dimension_numbers<[1], [0], [0], [1], [0, 0, 1, 1], [], []>} : vector<64x128xbf16>, vector<128x128xbf16>, vector<64x128xf32> -> vector<64x128xf32>
    %167 = arith.addf %160, %166 : vector<64x128xf32>
    %c2_152 = arith.constant 2 : index
    %c0_153 = arith.constant 0 : index
    %c0_154 = arith.constant 0 : index
    %168 = vector.load %arg10[%c2_152, %c0_153, %c0_154] : memref<10x10x128xf32, #tpu.memory_space<vmem>>, vector<8x8x128xf32>
    %169 = vector.shape_cast %168 : vector<8x8x128xf32> to vector<64x128xf32>
    %170 = arith.truncf %169 : vector<64x128xf32> to vector<64x128xbf16>
    %c6_155 = arith.constant 6 : index
    %c0_156 = arith.constant 0 : index
    %c0_157 = arith.constant 0 : index
    %171 = vector.load %arg3[%c6_155, %c0_156, %c0_157] : memref<9x128x128xbf16, #tpu.memory_space<vmem>>, vector<1x128x128xbf16>
    %172 = vector.shape_cast %171 : vector<1x128x128xbf16> to vector<128x128xbf16>
    %cst_158 = arith.constant dense<0.000000e+00> : vector<64x128xf32>
    %173 = tpu.matmul %170, %172, %cst_158 {dimension_numbers = #tpu.dot_dimension_numbers<[1], [0], [0], [1], [0, 0, 1, 1], [], []>} : vector<64x128xbf16>, vector<128x128xbf16>, vector<64x128xf32> -> vector<64x128xf32>
    %174 = arith.addf %167, %173 : vector<64x128xf32>
    %c2_159 = arith.constant 2 : index
    %c1_160 = arith.constant 1 : index
    %c0_161 = arith.constant 0 : index
    %175 = vector.load %arg10[%c2_159, %c1_160, %c0_161] : memref<10x10x128xf32, #tpu.memory_space<vmem>>, vector<8x8x128xf32>
    %176 = vector.shape_cast %175 : vector<8x8x128xf32> to vector<64x128xf32>
    %177 = arith.truncf %176 : vector<64x128xf32> to vector<64x128xbf16>
    %c7_162 = arith.constant 7 : index
    %c0_163 = arith.constant 0 : index
    %c0_164 = arith.constant 0 : index
    %178 = vector.load %arg3[%c7_162, %c0_163, %c0_164] : memref<9x128x128xbf16, #tpu.memory_space<vmem>>, vector<1x128x128xbf16>
    %179 = vector.shape_cast %178 : vector<1x128x128xbf16> to vector<128x128xbf16>
    %cst_165 = arith.constant dense<0.000000e+00> : vector<64x128xf32>
    %180 = tpu.matmul %177, %179, %cst_165 {dimension_numbers = #tpu.dot_dimension_numbers<[1], [0], [0], [1], [0, 0, 1, 1], [], []>} : vector<64x128xbf16>, vector<128x128xbf16>, vector<64x128xf32> -> vector<64x128xf32>
    %181 = arith.addf %174, %180 : vector<64x128xf32>
    %c2_166 = arith.constant 2 : index
    %c2_167 = arith.constant 2 : index
    %c0_168 = arith.constant 0 : index
    %182 = vector.load %arg10[%c2_166, %c2_167, %c0_168] : memref<10x10x128xf32, #tpu.memory_space<vmem>>, vector<8x8x128xf32>
    %183 = vector.shape_cast %182 : vector<8x8x128xf32> to vector<64x128xf32>
    %184 = arith.truncf %183 : vector<64x128xf32> to vector<64x128xbf16>
    %c8_169 = arith.constant 8 : index
    %c0_170 = arith.constant 0 : index
    %c0_171 = arith.constant 0 : index
    %185 = vector.load %arg3[%c8_169, %c0_170, %c0_171] : memref<9x128x128xbf16, #tpu.memory_space<vmem>>, vector<1x128x128xbf16>
    %186 = vector.shape_cast %185 : vector<1x128x128xbf16> to vector<128x128xbf16>
    %cst_172 = arith.constant dense<0.000000e+00> : vector<64x128xf32>
    %187 = tpu.matmul %184, %186, %cst_172 {dimension_numbers = #tpu.dot_dimension_numbers<[1], [0], [0], [1], [0, 0, 1, 1], [], []>} : vector<64x128xbf16>, vector<128x128xbf16>, vector<64x128xf32> -> vector<64x128xf32>
    %188 = arith.addf %181, %187 : vector<64x128xf32>
    %189 = vector.extract_strided_slice %19 {offsets = [3, 0], sizes = [1, 128], strides = [1, 1]} : vector<7x128xf32> to vector<1x128xf32>
    %190 = vector.broadcast %189 : vector<1x128xf32> to vector<64x128xf32>
    %191 = arith.addf %188, %190 : vector<64x128xf32>
    %192 = vector.extract_strided_slice %19 {offsets = [4, 0], sizes = [1, 128], strides = [1, 1]} : vector<7x128xf32> to vector<1x128xf32>
    %193 = vector.extract_strided_slice %19 {offsets = [5, 0], sizes = [1, 128], strides = [1, 1]} : vector<7x128xf32> to vector<1x128xf32>
    %cst_173 = arith.constant dense<0.000000e+00> : vector<128xf32>
    %194 = vector.multi_reduction <add>, %191, %cst_173 [0] : vector<64x128xf32> to vector<128xf32>
    %195 = vector.shape_cast %194 : vector<128xf32> to vector<1x128xf32>
    %196 = arith.mulf %191, %191 : vector<64x128xf32>
    %cst_174 = arith.constant dense<0.000000e+00> : vector<128xf32>
    %197 = vector.multi_reduction <add>, %196, %cst_174 [0] : vector<64x128xf32> to vector<128xf32>
    %198 = vector.shape_cast %197 : vector<128xf32> to vector<1x128xf32>
    %199 = tpu.concatenate %195, %198 in 0 : vector<1x128xf32>, vector<1x128xf32> -> vector<2x128xf32>
    %cst_175 = arith.constant dense<0.000000e+00> : vector<2x4xf32>
    %200 = tpu.matmul %199, %20, %cst_175 {dimension_numbers = #tpu.dot_dimension_numbers<[1], [0], [0], [1], [0, 0, 1, 1], [], []>} : vector<2x128xf32>, vector<128x4xf32>, vector<2x4xf32> -> vector<2x4xf32>
    %cst_176 = arith.constant 4.8828125E-4 : f32
    %201 = vector.broadcast %cst_176 : f32 to vector<2x4xf32>
    %202 = arith.mulf %200, %201 : vector<2x4xf32>
    %203 = vector.extract_strided_slice %202 {offsets = [0, 0], sizes = [1, 4], strides = [1, 1]} : vector<2x4xf32> to vector<1x4xf32>
    %204 = vector.extract_strided_slice %202 {offsets = [1, 0], sizes = [1, 4], strides = [1, 1]} : vector<2x4xf32> to vector<1x4xf32>
    %205 = arith.mulf %203, %203 : vector<1x4xf32>
    %206 = arith.subf %204, %205 : vector<1x4xf32>
    %cst_177 = arith.constant 0.000000e+00 : f32
    %207 = vector.broadcast %cst_177 : f32 to vector<1x4xf32>
    %208 = arith.maximumf %206, %207 : vector<1x4xf32>
    %cst_178 = arith.constant 9.99999974E-6 : f32
    %209 = vector.broadcast %cst_178 : f32 to vector<1x4xf32>
    %210 = arith.addf %208, %209 : vector<1x4xf32>
    %211 = math.rsqrt %210 : vector<1x4xf32>
    %212 = tpu.concatenate %203, %211 in 0 : vector<1x4xf32>, vector<1x4xf32> -> vector<2x4xf32>
    %cst_179 = arith.constant dense<0.000000e+00> : vector<2x128xf32>
    %213 = tpu.matmul %212, %21, %cst_179 {dimension_numbers = #tpu.dot_dimension_numbers<[1], [0], [0], [1], [0, 0, 1, 1], [], []>} : vector<2x4xf32>, vector<4x128xf32>, vector<2x128xf32> -> vector<2x128xf32>
    %214 = vector.extract_strided_slice %213 {offsets = [0, 0], sizes = [1, 128], strides = [1, 1]} : vector<2x128xf32> to vector<1x128xf32>
    %215 = vector.broadcast %214 : vector<1x128xf32> to vector<64x128xf32>
    %216 = arith.subf %191, %215 : vector<64x128xf32>
    %217 = vector.extract_strided_slice %213 {offsets = [1, 0], sizes = [1, 128], strides = [1, 1]} : vector<2x128xf32> to vector<1x128xf32>
    %218 = vector.broadcast %217 : vector<1x128xf32> to vector<64x128xf32>
    %219 = arith.mulf %216, %218 : vector<64x128xf32>
    %220 = vector.broadcast %192 : vector<1x128xf32> to vector<64x128xf32>
    %221 = arith.mulf %219, %220 : vector<64x128xf32>
    %222 = vector.broadcast %193 : vector<1x128xf32> to vector<64x128xf32>
    %223 = arith.addf %221, %222 : vector<64x128xf32>
    %224 = vector.shape_cast %17 : vector<8x8x64xf32> to vector<64x64xf32>
    %225 = arith.truncf %224 : vector<64x64xf32> to vector<64x64xbf16>
    %c0_180 = arith.constant 0 : index
    %c0_181 = arith.constant 0 : index
    %226 = vector.load %arg4[%c0_180, %c0_181] : memref<64x128xbf16, #tpu.memory_space<vmem>>, vector<64x128xbf16>
    %cst_182 = arith.constant dense<0.000000e+00> : vector<64x128xf32>
    %227 = tpu.matmul %225, %226, %cst_182 {dimension_numbers = #tpu.dot_dimension_numbers<[1], [0], [0], [1], [0, 0, 1, 1], [], []>} : vector<64x64xbf16>, vector<64x128xbf16>, vector<64x128xf32> -> vector<64x128xf32>
    %228 = arith.addf %223, %227 : vector<64x128xf32>
    %229 = vector.extract_strided_slice %19 {offsets = [6, 0], sizes = [1, 128], strides = [1, 1]} : vector<7x128xf32> to vector<1x128xf32>
    %230 = vector.broadcast %229 : vector<1x128xf32> to vector<64x128xf32>
    %231 = arith.addf %228, %230 : vector<64x128xf32>
    %cst_183 = arith.constant 0.000000e+00 : f32
    %232 = vector.broadcast %cst_183 : f32 to vector<64x128xf32>
    %233 = arith.maximumf %231, %232 : vector<64x128xf32>
    %234 = vector.shape_cast %233 : vector<64x128xf32> to vector<8x8x128xf32>
    %c0_184 = arith.constant 0 : index
    %c0_185 = arith.constant 0 : index
    %c0_186 = arith.constant 0 : index
    %c0_187 = arith.constant 0 : index
    %235 = vector.load %arg8[%c0_184, %c0_185, %c0_186, %c0_187] : memref<1x8x8x128xf32, #tpu.memory_space<vmem>>, vector<1x8x8x128xf32>
    %236 = vector.shape_cast %235 : vector<1x8x8x128xf32> to vector<8x8x128xf32>
    %237 = vector.shape_cast %234 : vector<8x8x128xf32> to vector<1x8x8x128xf32>
    tpu.vector_store %arg8[%c0_184, %c0_185, %c0_186, %c0_187], %237 {strides = array<i32>} : memref<1x8x8x128xf32, #tpu.memory_space<vmem>>, vector<1x8x8x128xf32>,
    return
  }
  func.func @transform_0(%arg0: i32) -> (i32, i32, i32, i32) {
    %c0_i32 = arith.constant 0 : i32
    %c0_i32_0 = arith.constant 0 : i32
    %c0_i32_1 = arith.constant 0 : i32
    %c0_i32_2 = arith.constant 0 : i32
    return %arg0, %c0_i32, %c0_i32_0, %c0_i32_1 : i32, i32, i32, i32
  }
  func.func @transform_1(%arg0: i32) -> (i32, i32, i32) {
    %c0_i32 = arith.constant 0 : i32
    %c0_i32_0 = arith.constant 0 : i32
    %c0_i32_1 = arith.constant 0 : i32
    %c0_i32_2 = arith.constant 0 : i32
    return %c0_i32, %c0_i32_0, %c0_i32_1 : i32, i32, i32
  }
  func.func @transform_2(%arg0: i32) -> (i32, i32, i32) {
    %c0_i32 = arith.constant 0 : i32
    %c0_i32_0 = arith.constant 0 : i32
    %c0_i32_1 = arith.constant 0 : i32
    %c0_i32_2 = arith.constant 0 : i32
    return %c0_i32, %c0_i32_0, %c0_i32_1 : i32, i32, i32
  }
  func.func @transform_3(%arg0: i32) -> (i32, i32) {
    %c0_i32 = arith.constant 0 : i32
    %c0_i32_0 = arith.constant 0 : i32
    %c0_i32_1 = arith.constant 0 : i32
    return %c0_i32, %c0_i32_0 : i32, i32
  }
  func.func @transform_4(%arg0: i32) -> (i32, i32) {
    %c0_i32 = arith.constant 0 : i32
    %c0_i32_0 = arith.constant 0 : i32
    %c0_i32_1 = arith.constant 0 : i32
    return %c0_i32, %c0_i32_0 : i32, i32
  }
  func.func @transform_5(%arg0: i32) -> (i32, i32) {
    %c0_i32 = arith.constant 0 : i32
    %c0_i32_0 = arith.constant 0 : i32
    %c0_i32_1 = arith.constant 0 : i32
    return %c0_i32, %c0_i32_0 : i32, i32
  }
  func.func @transform_6(%arg0: i32) -> (i32, i32) {
    %c0_i32 = arith.constant 0 : i32
    %c0_i32_0 = arith.constant 0 : i32
    %c0_i32_1 = arith.constant 0 : i32
    return %c0_i32, %c0_i32_0 : i32, i32
  }
  func.func @transform_7(%arg0: i32) -> (i32, i32, i32, i32) {
    %c0_i32 = arith.constant 0 : i32
    %c0_i32_0 = arith.constant 0 : i32
    %c0_i32_1 = arith.constant 0 : i32
    %c0_i32_2 = arith.constant 0 : i32
    return %arg0, %c0_i32, %c0_i32_0, %c0_i32_1 : i32, i32, i32, i32
  }
}

</mosaic_0001>

<llo_original>
// kernel: tpu_custom_call.1
$region0: #{tpu_custom_call.1}
  #allocation0 [shape = 'u32[]', space=smem, size = 0x4, offset = 0x4, fixed_abs, tag = 'smem constant byte address 0x4 - core index']
  #allocation1 [shape = 'u32[144,128]{1,0:T(1,128)}', space=vmem, size = 0x12000, scoped, tag = 'internal scratch']
  #allocation2 [shape = 'f32[10,10,64]{2,1,0:T(8,128)}', space=vmem, size = 0x14000, scoped, tag = 'scratch operand']
  #allocation3 [shape = 'f32[10,10,128]{2,1,0:T(8,128)}', space=vmem, size = 0x14000, scoped, tag = 'scratch operand']
  %s0 = inlined_call_operand.vmem [shape: f32[2,8,8,64], index: 0, kind: input, shape index: {}]
  %s1 = inlined_call_operand.hbm [shape: bf16[9,64,128], index: 1, kind: input, shape index: {}]
  %s2 = inlined_call_operand.hbm [shape: bf16[9,128,128], index: 2, kind: input, shape index: {}]
  %s3 = inlined_call_operand.hbm [shape: bf16[64,128], index: 3, kind: input, shape index: {}]
  %s4 = inlined_call_operand.vmem [shape: f32[7,128], index: 4, kind: input, shape index: {}]
  %s5 = inlined_call_operand.vmem [shape: f32[128,4], index: 5, kind: input, shape index: {}]
  %s6 = inlined_call_operand.vmem [shape: f32[4,128], index: 6, kind: input, shape index: {}]
  %s7 = inlined_call_operand.hbm [shape: f32[2,8,8,128], index: 7, kind: output, shape index: {}]
  %s8 = sld [smem:[#allocation0]]
  $region73: #{tpu_custom_call.1} parent=0
    _
  %s10 = ssub.s32 1, %s8
  %s11 = scalar_select 0, %s10, %s8
  $region1: #{tpu_custom_call.1} parent=0
    #allocation4 [shape = 'u8[147456]{0}', space=vmem, size = 0x24000, scoped, tag = 'input window, operand 1, single buffered']
    #allocation5 [shape = 's32[2]{0}', space=sflag, size = 0x8, scoped, tag = 'scoped memory for tpu_custom_call.1']
    #allocation6 [shape = 's32[2]{0}', space=sflag, size = 0x8, scoped, tag = 'scoped memory for tpu_custom_call.1']
    #allocation7 [shape = 'u8[294912]{0}', space=vmem, size = 0x48000, scoped, tag = 'input window, operand 2, single buffered']
    #allocation8 [shape = 's32[1]{0}', space=sflag, size = 0x4, scoped, tag = 'scoped memory for tpu_custom_call.1']
    #allocation9 [shape = 'u8[16384]{0}', space=vmem, size = 0x4000, scoped, tag = 'input window, operand 3, single buffered']
    #allocation10 [shape = 'u8[65536]{0}', space=vmem, size = 0x10000, scoped, tag = 'output window, operand 0']
    %12 = vsyncpa [#allocation5], 0
    %13 = vsyncpa [#allocation8], 0
    %14 = vsyncpa [#allocation6], 0
    %s15 = scalar_lea.sflag [#allocation6], 1
    %16 = vsyncpa %s15, 0
    loop: start=0, step=1, limit=4
    $region2: #{tpu_custom_call.1} parent=1 // loop_pre_header
      _
    $region3: #{tpu_custom_call.1} parent=1 // loop_header
      %s18 = sphi 0, %s22
      %p19 = scmp.ge.s32.totalorder %s18, 4
      %s28 = sphi 0, %s30
      %s31 = sphi 0, %s28
      %s32 = sphi 0, %s31
      %s48 = sphi 0, %s32
      %s52 = sphi 0, %s52
      %s54 = sphi 0, %s52
      %s55 = sphi 0, %s54
      %s69 = sphi 0, %s55
      %s73 = sphi 0, %s73
      %s75 = sphi 0, %s73
      %s76 = sphi 0, %s75
      %s90 = sphi 0, %s76
      %s94 = sphi 0, %s94
      %s96 = sphi 0, %s94
      %s97 = sphi 0, %s96
      %s111 = sphi 0, %s97
      %s115 = sphi 0, %s115
      %s117 = sphi 0, %s115
      %s118 = sphi 0, %s117
      %s132 = sphi 0, %s118
      %s136 = sphi 0, %s136
      %s138 = sphi 0, %s136
      %s139 = sphi 0, %s138
      %s153 = sphi 0, %s139
      %s157 = sphi 0, %s157
      %s159 = sphi 0, %s157
      %s160 = sphi 0, %s159
      %s174 = sphi 0, %s160
      %s180 = sphi 0, %s182
      %s183 = sphi 0, %s180
      %s184 = sphi 0, %s183
      %s200 = sphi 0, %s184
    $region4: #{tpu_custom_call.1} parent=1 // loop_header_branch
      %21 = sbr.rel (%p19) target = $region8
    $region5: #{tpu_custom_call.1} parent=1 // loop_body
      %s23 = ssub.s32 %s18, 1
      %s24 = ssub.s32 %s18, 2
      %s25 = sadd.s32 %s18, 1
      %s26 = ssub.s32 %s18, %s25
      %p27 = scmp.eq.s32.totalorder %s26, 0
      %s29 = sadd.s32 %s28, 1
      %s30 = scalar_select %p27, %s28, %s29
      %p33 = pneg %p27
      %p34 = scmp.eq.s32.totalorder %s18, 1
      %p35 = por %p33, %p34
      %p36 = scmp.ne.s32.totalorder %s28, %s31
      %p37 = scmp.eq.s32.totalorder %s18, 0
      %p38 = por %p36, %p37
      %p39 = scmp.ne.s32.totalorder %s28, %s31
      %p40 = scmp.eq.s32.totalorder %s23, 1
      %p41 = por %p39, %p40
      %p42 = scmp.ne.s32.totalorder %s31, %s32
      %p43 = scmp.eq.s32.totalorder %s23, 0
      %p44 = por %p42, %p43
      %p45 = scmp.ne.s32.totalorder %s31, %s32
      %p46 = scmp.eq.s32.totalorder %s24, 1
      %p47 = por %p45, %p46
      %p49 = scmp.ne.s32.totalorder %s32, %s48
      %p50 = scmp.eq.s32.totalorder %s24, 0
      %p51 = por %p49, %p50
      %s53 = sadd.s32 %s52, 1
      %p56 = scmp.eq.s32.totalorder %s18, 1
      %p57 = scmp.ne.s32.totalorder %s52, %s54
      %p58 = scmp.eq.s32.totalorder %s18, 0
      %p59 = por %p57, %p58
      %p60 = scmp.ne.s32.totalorder %s52, %s54
      %p61 = scmp.eq.s32.totalorder %s23, 1
      %p62 = por %p60, %p61
      %p63 = scmp.ne.s32.totalorder %s54, %s55
      %p64 = scmp.eq.s32.totalorder %s23, 0
      %p65 = por %p63, %p64
      %p66 = scmp.ne.s32.totalorder %s54, %s55
      %p67 = scmp.eq.s32.totalorder %s24, 1
      %p68 = por %p66, %p67
      %p70 = scmp.ne.s32.totalorder %s55, %s69
      %p71 = scmp.eq.s32.totalorder %s24, 0
      %p72 = por %p70, %p71
      %s74 = sadd.s32 %s73, 1
      %p77 = scmp.eq.s32.totalorder %s18, 1
      %p78 = scmp.ne.s32.totalorder %s73, %s75
      %p79 = scmp.eq.s32.totalorder %s18, 0
      %p80 = por %p78, %p79
      %p81 = scmp.ne.s32.totalorder %s73, %s75
      %p82 = scmp.eq.s32.totalorder %s23, 1
      %p83 = por %p81, %p82
      %p84 = scmp.ne.s32.totalorder %s75, %s76
      %p85 = scmp.eq.s32.totalorder %s23, 0
      %p86 = por %p84, %p85
      %p87 = scmp.ne.s32.totalorder %s75, %s76
      %p88 = scmp.eq.s32.totalorder %s24, 1
      %p89 = por %p87, %p88
      %p91 = scmp.ne.s32.totalorder %s76, %s90
      %p92 = scmp.eq.s32.totalorder %s24, 0
      %p93 = por %p91, %p92
      %s95 = sadd.s32 %s94, 1
      %p98 = scmp.eq.s32.totalorder %s18, 1
      %p99 = scmp.ne.s32.totalorder %s94, %s96
      %p100 = scmp.eq.s32.totalorder %s18, 0
      %p101 = por %p99, %p100
      %p102 = scmp.ne.s32.totalorder %s94, %s96
      %p103 = scmp.eq.s32.totalorder %s23, 1
      %p104 = por %p102, %p103
      %p105 = scmp.ne.s32.totalorder %s96, %s97
      %p106 = scmp.eq.s32.totalorder %s23, 0
      %p107 = por %p105, %p106
      %p108 = scmp.ne.s32.totalorder %s96, %s97
      %p109 = scmp.eq.s32.totalorder %s24, 1
      %p110 = por %p108, %p109
      %p112 = scmp.ne.s32.totalorder %s97, %s111
      %p113 = scmp.eq.s32.totalorder %s24, 0
      %p114 = por %p112, %p113
      %s116 = sadd.s32 %s115, 1
      %p119 = scmp.eq.s32.totalorder %s18, 1
      %p120 = scmp.ne.s32.totalorder %s115, %s117
      %p121 = scmp.eq.s32.totalorder %s18, 0
      %p122 = por %p120, %p121
      %p123 = scmp.ne.s32.totalorder %s115, %s117
      %p124 = scmp.eq.s32.totalorder %s23, 1
      %p125 = por %p123, %p124
      %p126 = scmp.ne.s32.totalorder %s117, %s118
      %p127 = scmp.eq.s32.totalorder %s23, 0
      %p128 = por %p126, %p127
      %p129 = scmp.ne.s32.totalorder %s117, %s118
      %p130 = scmp.eq.s32.totalorder %s24, 1
      %p131 = por %p129, %p130
      %p133 = scmp.ne.s32.totalorder %s118, %s132
      %p134 = scmp.eq.s32.totalorder %s24, 0
      %p135 = por %p133, %p134
      %s137 = sadd.s32 %s136, 1
      %p140 = scmp.eq.s32.totalorder %s18, 1
      %p141 = scmp.ne.s32.totalorder %s136, %s138
      %p142 = scmp.eq.s32.totalorder %s18, 0
      %p143 = por %p141, %p142
      %p144 = scmp.ne.s32.totalorder %s136, %s138
      %p145 = scmp.eq.s32.totalorder %s23, 1
      %p146 = por %p144, %p145
      %p147 = scmp.ne.s32.totalorder %s138, %s139
      %p148 = scmp.eq.s32.totalorder %s23, 0
      %p149 = por %p147, %p148
      %p150 = scmp.ne.s32.totalorder %s138, %s139
      %p151 = scmp.eq.s32.totalorder %s24, 1
      %p152 = por %p150, %p151
      %p154 = scmp.ne.s32.totalorder %s139, %s153
      %p155 = scmp.eq.s32.totalorder %s24, 0
      %p156 = por %p154, %p155
      %s158 = sadd.s32 %s157, 1
      %p161 = scmp.eq.s32.totalorder %s18, 1
      %p162 = scmp.ne.s32.totalorder %s157, %s159
      %p163 = scmp.eq.s32.totalorder %s18, 0
      %p164 = por %p162, %p163
      %p165 = scmp.ne.s32.totalorder %s157, %s159
      %p166 = scmp.eq.s32.totalorder %s23, 1
      %p167 = por %p165, %p166
      %p168 = scmp.ne.s32.totalorder %s159, %s160
      %p169 = scmp.eq.s32.totalorder %s23, 0
      %p170 = por %p168, %p169
      %p171 = scmp.ne.s32.totalorder %s159, %s160
      %p172 = scmp.eq.s32.totalorder %s24, 1
      %p173 = por %p171, %p172
      %p175 = scmp.ne.s32.totalorder %s160, %s174
      %p176 = scmp.eq.s32.totalorder %s24, 0
      %p177 = por %p175, %p176
      %s178 = ssub.s32 %s18, %s25
      %p179 = scmp.eq.s32.totalorder %s178, 0
      %s181 = sadd.s32 %s180, 1
      %s182 = scalar_select %p179, %s180, %s181
      %p185 = pneg %p179
      %p186 = scmp.eq.s32.totalorder %s18, 1
      %p187 = por %p185, %p186
      %p188 = scmp.ne.s32.totalorder %s180, %s183
      %p189 = scmp.eq.s32.totalorder %s18, 0
      %p190 = por %p188, %p189
      %p191 = scmp.ne.s32.totalorder %s180, %s183
      %p192 = scmp.eq.s32.totalorder %s23, 1
      %p193 = por %p191, %p192
      %p194 = scmp.ne.s32.totalorder %s183, %s184
      %p195 = scmp.eq.s32.totalorder %s23, 0
      %p196 = por %p194, %p195
      %p197 = scmp.ne.s32.totalorder %s183, %s184
      %p198 = scmp.eq.s32.totalorder %s24, 1
      %p199 = por %p197, %p198
      %p201 = scmp.ne.s32.totalorder %s184, %s200
      %p202 = scmp.eq.s32.totalorder %s24, 0
      %p203 = por %p201, %p202
      %p204 = scmp.le.s32.totalorder 1, %s18
      %p205 = scmp.lt.s32.totalorder %s18, 3
      %p206 = pnand %p204, %p205
      %p207 = pneg %p206
      // Predicated region
      $region9: #{tpu_custom_call.1} parent=5 // pred_check
        _
      $region10: #{tpu_custom_call.1} parent=5 // pred_check_branch
        %209 = sbr.rel (%p206) target = $region12
      $region11: #{tpu_custom_call.1} parent=5 // pred_region
        %s210 = ssub.s32 %s18, 1
        // Predicated region
        $region13: #{tpu_custom_call.1} parent=11 // pred_check
          %p211 = pneg %p65
        $region14: #{tpu_custom_call.1} parent=11 // pred_check_branch
          %213 = sbr.rel (%p211) target = $region16
        $region15: #{tpu_custom_call.1} parent=11 // pred_region
          %s215 = ssub.s32 4608, 4608
          %216 = vsyncadd [#allocation5], %s215
          %s217 = sshll.u32 [#allocation4], 4
          %s218 = int_to_ptr.vmem [resolvable:$true] %s217
          %223 = dma.hbm_to_vmem [thread:$0]  %s1, 4608, %s218, [#allocation5], 64, 64, 4
        $region16: #{tpu_custom_call.1} parent=11 // pred_fallthru
          _
        // Predicated region
        $region17: #{tpu_custom_call.1} parent=11 // pred_check
          %p224 = pneg %p86
        $region18: #{tpu_custom_call.1} parent=11 // pred_check_branch
          %226 = sbr.rel (%p224) target = $region20
        $region19: #{tpu_custom_call.1} parent=11 // pred_region
          %s228 = ssub.s32 9216, 9216
          %229 = vsyncadd [#allocation8], %s228
          %s230 = sshll.u32 [#allocation7], 4
          %s231 = int_to_ptr.vmem [resolvable:$true] %s230
          %236 = dma.hbm_to_vmem [thread:$0]  %s2, 9216, %s231, [#allocation8], 64, 64, 4
        $region20: #{tpu_custom_call.1} parent=11 // pred_fallthru
          _
        // Predicated region
        $region21: #{tpu_custom_call.1} parent=11 // pred_check
          %p237 = pneg %p107
        $region22: #{tpu_custom_call.1} parent=11 // pred_check_branch
          %239 = sbr.rel (%p237) target = $region24
        $region23: #{tpu_custom_call.1} parent=11 // pred_region
          %s241 = ssub.s32 512, 512
          %242 = vsyncadd [#allocation8], %s241
          %s243 = sshll.u32 [#allocation9], 4
          %s244 = int_to_ptr.vmem [resolvable:$true] %s243
          %249 = dma.hbm_to_vmem [thread:$0]  %s3, 512, %s244, [#allocation8], 64, 64, 4
        $region24: #{tpu_custom_call.1} parent=11 // pred_fallthru
          _
        // Predicated region
        $region25: #{tpu_custom_call.1} parent=11 // pred_check
          %p250 = pneg %p128
        $region26: #{tpu_custom_call.1} parent=11 // pred_check_branch
          %252 = sbr.rel (%p250) target = $region28
        $region27: #{tpu_custom_call.1} parent=11 // pred_region
          _
        $region28: #{tpu_custom_call.1} parent=11 // pred_fallthru
          _
        // Predicated region
        $region29: #{tpu_custom_call.1} parent=11 // pred_check
          %p253 = pneg %p149
        $region30: #{tpu_custom_call.1} parent=11 // pred_check_branch
          %255 = sbr.rel (%p253) target = $region32
        $region31: #{tpu_custom_call.1} parent=11 // pred_region
          _
        $region32: #{tpu_custom_call.1} parent=11 // pred_fallthru
          _
        // Predicated region
        $region33: #{tpu_custom_call.1} parent=11 // pred_check
          %p256 = pneg %p170
        $region34: #{tpu_custom_call.1} parent=11 // pred_check_branch
          %258 = sbr.rel (%p256) target = $region36
        $region35: #{tpu_custom_call.1} parent=11 // pred_region
          _
        $region36: #{tpu_custom_call.1} parent=11 // pred_fallthru
          _
      $region12: #{tpu_custom_call.1} parent=5 // pred_fallthru
        _
      %p259 = scmp.lt.s32.totalorder %s18, 2
      // Predicated region
      $region37: #{tpu_custom_call.1} parent=5 // pred_check
        %p260 = pneg %p259
      $region38: #{tpu_custom_call.1} parent=5 // pred_check_branch
        %262 = sbr.rel (%p260) target = $region40
      $region39: #{tpu_custom_call.1} parent=5 // pred_region
        // Predicated region
        $region41: #{tpu_custom_call.1} parent=39 // pred_check
          %p263 = pneg %p38
        $region42: #{tpu_custom_call.1} parent=39 // pred_check_branch
          %265 = sbr.rel (%p263) target = $region44
        $region43: #{tpu_custom_call.1} parent=39 // pred_region
          %p266 = scmp.lt.s32.totalorder %s18, 1
          %s267 = scalar_select %p266, %s18, 1
          %s268 = smul.addr %s267, 8
          %s269 = smul.addr %s268, 8
          %s270 = scalar_lea.vmem %s0, %s269
        $region44: #{tpu_custom_call.1} parent=39 // pred_fallthru
          _
      $region40: #{tpu_custom_call.1} parent=5 // pred_fallthru
        _
      %p271 = scmp.le.s32.totalorder 1, %s18
      %p272 = scmp.lt.s32.totalorder %s18, 3
      %p273 = pnand %p271, %p272
      %p274 = pneg %p273
      // Predicated region
      $region45: #{tpu_custom_call.1} parent=5 // pred_check
        _
      $region46: #{tpu_custom_call.1} parent=5 // pred_check_branch
        %276 = sbr.rel (%p273) target = $region48
      $region47: #{tpu_custom_call.1} parent=5 // pred_region
        %s277 = ssub.s32 %s18, 1
        // Predicated region
        $region49: #{tpu_custom_call.1} parent=47 // pred_check
          %p278 = pneg %p65
        $region50: #{tpu_custom_call.1} parent=47 // pred_check_branch
          %280 = sbr.rel (%p278) target = $region52
        $region51: #{tpu_custom_call.1} parent=47 // pred_region
          %281 = dma.done [#allocation5], 4608
        $region52: #{tpu_custom_call.1} parent=47 // pred_fallthru
          _
        // Predicated region
        $region53: #{tpu_custom_call.1} parent=47 // pred_check
          %p282 = pneg %p86
        $region54: #{tpu_custom_call.1} parent=47 // pred_check_branch
          %284 = sbr.rel (%p282) target = $region56
        $region55: #{tpu_custom_call.1} parent=47 // pred_region
          %285 = dma.done [#allocation8], 9216
        $region56: #{tpu_custom_call.1} parent=47 // pred_fallthru
          _
        // Predicated region
        $region57: #{tpu_custom_call.1} parent=47 // pred_check
          %p286 = pneg %p107
        $region58: #{tpu_custom_call.1} parent=47 // pred_check_branch
          %288 = sbr.rel (%p286) target = $region60
        $region59: #{tpu_custom_call.1} parent=47 // pred_region
          %289 = dma.done [#allocation8], 512
        $region60: #{tpu_custom_call.1} parent=47 // pred_fallthru
          _
        %p290 = scmp.lt.s32.totalorder %s23, 1
        %s291 = scalar_select %p290, %s23, 1
        %s292 = smul.addr %s291, 8
        %s293 = smul.addr %s292, 8
        %s294 = scalar_lea.vmem %s0, %s293
        %p295 = pneg %p44
        %p296 = pneg %p41
        %p297 = pneg %p65
        %p298 = pneg %p62
        %p299 = pneg %p86
        %p300 = pneg %p83
        %p301 = pneg %p107
        %p302 = pneg %p104
        %p303 = pneg %p128
        %p304 = pneg %p125
        %p305 = pneg %p149
        %p306 = pneg %p146
        %p307 = pneg %p170
        %p308 = pneg %p167
        %p309 = pneg %p196
        %p310 = pneg %p193
        %s311 = sand.u32 %s183, 1
        %s312 = scalar_lea.sflag [#allocation6], %s311
        %s313 = sand.u32 %s183, 1
        %s314 = smul.addr %s313, 64
        %s315 = scalar_lea.vmem [#allocation10], %s314
        %p316 = scmp.lt.s32.totalorder %s23, 1
        %s317 = scalar_select %p316, %s23, 1
        %s318 = smul.addr %s317, 8
        %s319 = smul.addr %s318, 8
        %s320 = scalar_lea.vmem %s0, %s319
        %vm322 = vcmask 523264
        %323 = vst.msk [vmem:[#allocation2] sm:$0xff] %vm322, 0.0
        %vm324 = vcmask 517120
        %325 = vst.msk [vmem:[#allocation2 + $0x8] sm:$0x3] %vm324, 0.0
        %s326 = scalar_lea.vmem [#allocation2], 144
        %327 = vst.msk [vmem:[%s326] sm:$0xff] %vm322, 0.0
        %328 = vst.msk [vmem:[%s326 + $0x8] sm:$0x3] %vm324, 0.0
        %vm329 = vcmask 516096
        %330 = vst.msk [vmem:[#allocation2] sm:$0x1] %vm329, 0.0
        %331 = vst.msk [vmem:[#allocation2 + $0x10] sm:$0x1] %vm329, 0.0
        %332 = vst.msk [vmem:[#allocation2 + $0x20] sm:$0x1] %vm329, 0.0
        %333 = vst.msk [vmem:[#allocation2 + $0x30] sm:$0x1] %vm329, 0.0
        %334 = vst.msk [vmem:[#allocation2 + $0x40] sm:$0x1] %vm329, 0.0
        %335 = vst.msk [vmem:[#allocation2 + $0x50] sm:$0x1] %vm329, 0.0
        %336 = vst.msk [vmem:[#allocation2 + $0x60] sm:$0x1] %vm329, 0.0
        %337 = vst.msk [vmem:[#allocation2 + $0x70] sm:$0x1] %vm329, 0.0
        %338 = vst.msk [vmem:[#allocation2 + $0x80] sm:$0x1] %vm329, 0.0
        %339 = vst.msk [vmem:[#allocation2 + $0x90] sm:$0x1] %vm329, 0.0
        %340 = vst.msk [vmem:[#allocation2 + $0x9] sm:$0x1] %vm329, 0.0
        %341 = vst.msk [vmem:[#allocation2 + $0x19] sm:$0x1] %vm329, 0.0
        %342 = vst.msk [vmem:[#allocation2 + $0x29] sm:$0x1] %vm329, 0.0
        %343 = vst.msk [vmem:[#allocation2 + $0x39] sm:$0x1] %vm329, 0.0
        %344 = vst.msk [vmem:[#allocation2 + $0x49] sm:$0x1] %vm329, 0.0
        %345 = vst.msk [vmem:[#allocation2 + $0x59] sm:$0x1] %vm329, 0.0
        %346 = vst.msk [vmem:[#allocation2 + $0x69] sm:$0x1] %vm329, 0.0
        %347 = vst.msk [vmem:[#allocation2 + $0x79] sm:$0x1] %vm329, 0.0
        %348 = vst.msk [vmem:[#allocation2 + $0x89] sm:$0x1] %vm329, 0.0
        %349 = vst.msk [vmem:[#allocation2 + $0x99] sm:$0x1] %vm329, 0.0
        %350 = vst [vmem:[#allocation3] sm:$0xff] 0.0
        %351 = vst [vmem:[#allocation3 + $0x8] sm:$0x3] 0.0
        %s352 = scalar_lea.vmem [#allocation3], 144
        %353 = vst [vmem:[%s352] sm:$0xff] 0.0
        %354 = vst [vmem:[%s352 + $0x8] sm:$0x3] 0.0
        %355 = vst [vmem:[#allocation3] sm:$0x1] 0.0
        %356 = vst [vmem:[#allocation3 + $0x10] sm:$0x1] 0.0
        %357 = vst [vmem:[#allocation3 + $0x20] sm:$0x1] 0.0
        %358 = vst [vmem:[#allocation3 + $0x30] sm:$0x1] 0.0
        %359 = vst [vmem:[#allocation3 + $0x40] sm:$0x1] 0.0
        %360 = vst [vmem:[#allocation3 + $0x50] sm:$0x1] 0.0
        %361 = vst [vmem:[#allocation3 + $0x60] sm:$0x1] 0.0
        %362 = vst [vmem:[#allocation3 + $0x70] sm:$0x1] 0.0
        %363 = vst [vmem:[#allocation3 + $0x80] sm:$0x1] 0.0
        %364 = vst [vmem:[#allocation3 + $0x90] sm:$0x1] 0.0
        %365 = vst [vmem:[#allocation3 + $0x9] sm:$0x1] 0.0
        %366 = vst [vmem:[#allocation3 + $0x19] sm:$0x1] 0.0
        %367 = vst [vmem:[#allocation3 + $0x29] sm:$0x1] 0.0
        %368 = vst [vmem:[#allocation3 + $0x39] sm:$0x1] 0.0
        %369 = vst [vmem:[#allocation3 + $0x49] sm:$0x1] 0.0
        %370 = vst [vmem:[#allocation3 + $0x59] sm:$0x1] 0.0
        %371 = vst [vmem:[#allocation3 + $0x69] sm:$0x1] 0.0
        %372 = vst [vmem:[#allocation3 + $0x79] sm:$0x1] 0.0
        %373 = vst [vmem:[#allocation3 + $0x89] sm:$0x1] 0.0
        %374 = vst [vmem:[#allocation3 + $0x99] sm:$0x1] 0.0
        %v375 = vld [vmem:[%s320] sm:$0xff]
        %v376 = vld [vmem:[%s320 + $0x8] sm:$0xff]
        %v377 = vld [vmem:[%s320 + $0x10] sm:$0xff]
        %v378 = vld [vmem:[%s320 + $0x18] sm:$0xff]
        %v379 = vld [vmem:[%s320 + $0x20] sm:$0xff]
        %v380 = vld [vmem:[%s320 + $0x28] sm:$0xff]
        %v381 = vld [vmem:[%s320 + $0x30] sm:$0xff]
        %v382 = vld [vmem:[%s320 + $0x38] sm:$0xff]
        %s383 = scalar_lea.vmem [#allocation2], 16
        %384 = vst.msk [vmem:[%s383 + $0x1] sm:$0xff] %vm322, %v375
        %385 = vst.msk [vmem:[%s383 + $0x11] sm:$0xff] %vm322, %v376
        %386 = vst.msk [vmem:[%s383 + $0x21] sm:$0xff] %vm322, %v377
        %387 = vst.msk [vmem:[%s383 + $0x31] sm:$0xff] %vm322, %v378
        %388 = vst.msk [vmem:[%s383 + $0x41] sm:$0xff] %vm322, %v379
        %389 = vst.msk [vmem:[%s383 + $0x51] sm:$0xff] %vm322, %v380
        %390 = vst.msk [vmem:[%s383 + $0x61] sm:$0xff] %vm322, %v381
        %391 = vst.msk [vmem:[%s383 + $0x71] sm:$0xff] %vm322, %v382
        %v392 = vld [vmem:[%s4] sm:$0x7f]
        %v393 = vld [vmem:[%s5] sm:$0xff]
        %v394 = vld [vmem:[%s5 + $0x8] sm:$0xff]
        %v395 = vld [vmem:[%s5 + $0x10] sm:$0xff]
        %v396 = vld [vmem:[%s5 + $0x18] sm:$0xff]
        %v397 = vld [vmem:[%s5 + $0x20] sm:$0xff]
        %v398 = vld [vmem:[%s5 + $0x28] sm:$0xff]
        %v399 = vld [vmem:[%s5 + $0x30] sm:$0xff]
        %v400 = vld [vmem:[%s5 + $0x38] sm:$0xff]
        %v401 = vld [vmem:[%s5 + $0x40] sm:$0xff]
        %v402 = vld [vmem:[%s5 + $0x48] sm:$0xff]
        %v403 = vld [vmem:[%s5 + $0x50] sm:$0xff]
        %v404 = vld [vmem:[%s5 + $0x58] sm:$0xff]
        %v405 = vld [vmem:[%s5 + $0x60] sm:$0xff]
        %v406 = vld [vmem:[%s5 + $0x68] sm:$0xff]
        %v407 = vld [vmem:[%s5 + $0x70] sm:$0xff]
        %v408 = vld [vmem:[%s5 + $0x78] sm:$0xff]
        %v409 = vld [vmem:[%s6] sm:$0xf]
        %v410 = vld [vmem:[#allocation2] sm:$0xff]
        %v411 = vld [vmem:[#allocation2 + $0x10] sm:$0xff]
        %v412 = vld [vmem:[#allocation2 + $0x20] sm:$0xff]
        %v413 = vld [vmem:[#allocation2 + $0x30] sm:$0xff]
        %v414 = vld [vmem:[#allocation2 + $0x40] sm:$0xff]
        %v415 = vld [vmem:[#allocation2 + $0x50] sm:$0xff]
        %v416 = vld [vmem:[#allocation2 + $0x60] sm:$0xff]
        %v417 = vld [vmem:[#allocation2 + $0x70] sm:$0xff]
        %v418 = vpack.c.bf16 %v411, %v410
        %v419 = vpack.c.bf16 %v413, %v412
        %v420 = vpack.c.bf16 %v415, %v414
        %v421 = vpack.c.bf16 %v417, %v416
        %v422 = vld [vmem:[#allocation4] sm:$0xf]
        %v423 = vld [vmem:[#allocation4 + $0x4] sm:$0xf]
        %v424 = vld [vmem:[#allocation4 + $0x8] sm:$0xf]
        %v425 = vld [vmem:[#allocation4 + $0xc] sm:$0xf]
        %v426 = vld [vmem:[#allocation4 + $0x10] sm:$0xf]
        %v427 = vld [vmem:[#allocation4 + $0x14] sm:$0xf]
        %v428 = vld [vmem:[#allocation4 + $0x18] sm:$0xf]
        %v429 = vld [vmem:[#allocation4 + $0x1c] sm:$0xf]
        %v430 = vld [vmem:[#allocation2 + $0x1] sm:$0xff]
        %v431 = vld [vmem:[#allocation2 + $0x11] sm:$0xff]
        %v432 = vld [vmem:[#allocation2 + $0x21] sm:$0xff]
        %v433 = vld [vmem:[#allocation2 + $0x31] sm:$0xff]
        %v434 = vld [vmem:[#allocation2 + $0x41] sm:$0xff]
        %v435 = vld [vmem:[#allocation2 + $0x51] sm:$0xff]
        %v436 = vld [vmem:[#allocation2 + $0x61] sm:$0xff]
        %v437 = vld [vmem:[#allocation2 + $0x71] sm:$0xff]
        %v438 = vpack.c.bf16 %v431, %v430
        %v439 = vpack.c.bf16 %v433, %v432
        %v440 = vpack.c.bf16 %v435, %v434
        %v441 = vpack.c.bf16 %v437, %v436
        %s442 = scalar_lea.vmem [#allocation4], 32
        %v443 = vld [vmem:[%s442] sm:$0xf]
        %v444 = vld [vmem:[%s442 + $0x4] sm:$0xf]
        %v445 = vld [vmem:[%s442 + $0x8] sm:$0xf]
        %v446 = vld [vmem:[%s442 + $0xc] sm:$0xf]
        %v447 = vld [vmem:[%s442 + $0x10] sm:$0xf]
        %v448 = vld [vmem:[%s442 + $0x14] sm:$0xf]
        %v449 = vld [vmem:[%s442 + $0x18] sm:$0xf]
        %v450 = vld [vmem:[%s442 + $0x1c] sm:$0xf]
        %v459 = vunpack.c.l.b16 %v443
        %v460 = vunpack.c.l.b16 %v444
        %v461 = vunpack.c.l.b16 %v445
        %v462 = vunpack.c.l.b16 %v446
        %v463 = vunpack.c.l.b16 %v447
        %v464 = vunpack.c.l.b16 %v448
        %v465 = vunpack.c.l.b16 %v449
        %v466 = vunpack.c.l.b16 %v450
        %v467 = vpack.c.b16 %v460, %v459
        %v468 = vpack.c.b16 %v462, %v461
        %v469 = vpack.c.b16 %v464, %v463
        %v470 = vpack.c.b16 %v466, %v465
        %v476 = vsel %vm322, %v438, 0
        %v479 = vsel %vm322, %v439, 0
        %v482 = vsel %vm322, %v440, 0
        %v485 = vsel %vm322, %v441, 0
        %487 = vmatprep.subr.bf16.mxu0 0
        %488 = vmatpush1.bf16.msra.mxu0 %v467
        %489 = vmatprep.subr.bf16.mxu0 0
        %490 = vmatpush1.bf16.msra.mxu0 %v468
        %491 = vmatprep.subr.bf16.mxu0 0
        %492 = vmatpush1.bf16.msra.mxu0 %v469
        %493 = vmatprep.subr.bf16.mxu0 0
        %494 = vmatpush1.bf16.msra.mxu0 %v470
        %495 = vmatprep.subr.bf16.mxu0 0
        %496 = vmatpush1.bf16.msra.mxu0 0
        %497 = vmatprep.subr.bf16.mxu0 0
        %498 = vmatpush1.bf16.msra.mxu0 0
        %499 = vmatprep.subr.bf16.mxu0 0
        %500 = vmatpush1.bf16.msra.mxu0 0
        %501 = vmatprep.subr.bf16.mxu0 0
        %502 = vmatpush1.bf16.msra.mxu0 0
        %503 = vmatprep.subr.bf16.mxu0 0
        %504 = vmatpush1.bf16.msra.mxu0 0
        %505 = vmatprep.subr.bf16.mxu0 0
        %506 = vmatpush1.bf16.msra.mxu0 0
        %507 = vmatprep.subr.bf16.mxu0 0
        %508 = vmatpush1.bf16.msra.mxu0 0
        %509 = vmatprep.subr.bf16.mxu0 0
        %510 = vmatpush1.bf16.msra.mxu0 0
        %511 = vmatprep.subr.bf16.mxu0 0
        %512 = vmatpush1.bf16.msra.mxu0 0
        %513 = vmatprep.subr.bf16.mxu0 0
        %514 = vmatpush1.bf16.msra.mxu0 0
        %515 = vmatprep.subr.bf16.mxu0 0
        %516 = vmatpush1.bf16.msra.mxu0 0
        %517 = vmatprep.subr.bf16.mxu0 0
        %518 = vmatpush1.bf16.msra.mxu0 0
        %519 = vmatprep.mubr.bf16.mxu0 0
        %520 = vmatmul.mubr.bf16.gmra.mrb[0].mxu0 %v476
        %v521 = vpop.f32.mrb[0].mxu0
        %v522 = vadd.f32 0.0, %v521
        %v523 = vpop.f32.mrb[0].mxu0
        %v524 = vpop.f32.mrb[0].mxu0
        %v525 = vadd.f32 0.0, %v524
        %v526 = vpop.f32.mrb[0].mxu0
        %527 = vmatprep.mubr.bf16.mxu0 0
        %528 = vmatmul.mubr.bf16.gmra.mrb[0].mxu0 %v479
        %v529 = vpop.f32.mrb[0].mxu0
        %v530 = vadd.f32 0.0, %v529
        %v531 = vpop.f32.mrb[0].mxu0
        %v532 = vpop.f32.mrb[0].mxu0
        %v533 = vadd.f32 0.0, %v532
        %v534 = vpop.f32.mrb[0].mxu0
        %535 = vmatprep.mubr.bf16.mxu0 0
        %536 = vmatmul.mubr.bf16.gmra.mrb[0].mxu0 %v482
        %v537 = vpop.f32.mrb[0].mxu0
        %v538 = vadd.f32 0.0, %v537
        %v539 = vpop.f32.mrb[0].mxu0
        %v540 = vpop.f32.mrb[0].mxu0
        %v541 = vadd.f32 0.0, %v540
        %v542 = vpop.f32.mrb[0].mxu0
        %543 = vmatprep.mubr.bf16.mxu0 0
        %544 = vmatmul.mubr.bf16.gmra.mrb[0].mxu0 %v485
        %v545 = vpop.f32.mrb[0].mxu0
        %v546 = vadd.f32 0.0, %v545
        %v547 = vpop.f32.mrb[0].mxu0
        %v548 = vpop.f32.mrb[0].mxu0
        %v549 = vadd.f32 0.0, %v548
        %v550 = vpop.f32.mrb[0].mxu0
        %551 = vdwg.mxu0
        %v560 = vunpack.c.l.b16 %v422
        %v561 = vunpack.c.l.b16 %v423
        %v562 = vunpack.c.l.b16 %v424
        %v563 = vunpack.c.l.b16 %v425
        %v564 = vunpack.c.l.b16 %v426
        %v565 = vunpack.c.l.b16 %v427
        %v566 = vunpack.c.l.b16 %v428
        %v567 = vunpack.c.l.b16 %v429
        %v568 = vpack.c.b16 %v561, %v560
        %v569 = vpack.c.b16 %v563, %v562
        %v570 = vpack.c.b16 %v565, %v564
        %v571 = vpack.c.b16 %v567, %v566
        %v577 = vsel %vm322, %v418, 0
        %v580 = vsel %vm322, %v419, 0
        %v583 = vsel %vm322, %v420, 0
        %v586 = vsel %vm322, %v421, 0
        %588 = vmatprep.subr.bf16.mxu0 0
        %589 = vmatpush1.bf16.msra.mxu0 %v568
        %590 = vmatprep.subr.bf16.mxu0 0
        %591 = vmatpush1.bf16.msra.mxu0 %v569
        %592 = vmatprep.subr.bf16.mxu0 0
        %593 = vmatpush1.bf16.msra.mxu0 %v570
        %594 = vmatprep.subr.bf16.mxu0 0
        %595 = vmatpush1.bf16.msra.mxu0 %v571
        %596 = vmatprep.subr.bf16.mxu0 0
        %597 = vmatpush1.bf16.msra.mxu0 0
        %598 = vmatprep.subr.bf16.mxu0 0
        %599 = vmatpush1.bf16.msra.mxu0 0
        %600 = vmatprep.subr.bf16.mxu0 0
        %601 = vmatpush1.bf16.msra.mxu0 0
        %602 = vmatprep.subr.bf16.mxu0 0
        %603 = vmatpush1.bf16.msra.mxu0 0
        %604 = vmatprep.subr.bf16.mxu0 0
        %605 = vmatpush1.bf16.msra.mxu0 0
        %606 = vmatprep.subr.bf16.mxu0 0
        %607 = vmatpush1.bf16.msra.mxu0 0
        %608 = vmatprep.subr.bf16.mxu0 0
        %609 = vmatpush1.bf16.msra.mxu0 0
        %610 = vmatprep.subr.bf16.mxu0 0
        %611 = vmatpush1.bf16.msra.mxu0 0
        %612 = vmatprep.subr.bf16.mxu0 0
        %613 = vmatpush1.bf16.msra.mxu0 0
        %614 = vmatprep.subr.bf16.mxu0 0
        %615 = vmatpush1.bf16.msra.mxu0 0
        %616 = vmatprep.subr.bf16.mxu0 0
        %617 = vmatpush1.bf16.msra.mxu0 0
        %618 = vmatprep.subr.bf16.mxu0 0
        %619 = vmatpush1.bf16.msra.mxu0 0
        %620 = vmatprep.mubr.bf16.mxu0 0
        %621 = vmatmul.mubr.bf16.gmra.mrb[0].mxu0 %v577
        %v622 = vpop.f32.mrb[0].mxu0
        %v623 = vadd.f32 %v522, %v622
        %v624 = vpop.f32.mrb[0].mxu0
        %v625 = vpop.f32.mrb[0].mxu0
        %v626 = vadd.f32 %v525, %v625
        %v627 = vpop.f32.mrb[0].mxu0
        %628 = vmatprep.mubr.bf16.mxu0 0
        %629 = vmatmul.mubr.bf16.gmra.mrb[0].mxu0 %v580
        %v630 = vpop.f32.mrb[0].mxu0
        %v631 = vadd.f32 %v530, %v630
        %v632 = vpop.f32.mrb[0].mxu0
        %v633 = vpop.f32.mrb[0].mxu0
        %v634 = vadd.f32 %v533, %v633
        %v635 = vpop.f32.mrb[0].mxu0
        %636 = vmatprep.mubr.bf16.mxu0 0
        %637 = vmatmul.mubr.bf16.gmra.mrb[0].mxu0 %v583
        %v638 = vpop.f32.mrb[0].mxu0
        %v639 = vadd.f32 %v538, %v638
        %v640 = vpop.f32.mrb[0].mxu0
        %v641 = vpop.f32.mrb[0].mxu0
        %v642 = vadd.f32 %v541, %v641
        %v643 = vpop.f32.mrb[0].mxu0
        %644 = vmatprep.mubr.bf16.mxu0 0
        %645 = vmatmul.mubr.bf16.gmra.mrb[0].mxu0 %v586
        %v646 = vpop.f32.mrb[0].mxu0
        %v647 = vadd.f32 %v546, %v646
        %v648 = vpop.f32.mrb[0].mxu0
        %v649 = vpop.f32.mrb[0].mxu0
        %v650 = vadd.f32 %v549, %v649
        %v651 = vpop.f32.mrb[0].mxu0
        %652 = vdwg.mxu0
        %v653 = vld [vmem:[#allocation2 + $0x2] sm:$0xff]
        %v654 = vld [vmem:[#allocation2 + $0x12] sm:$0xff]
        %v655 = vld [vmem:[#allocation2 + $0x22] sm:$0xff]
        %v656 = vld [vmem:[#allocation2 + $0x32] sm:$0xff]
        %v657 = vld [vmem:[#allocation2 + $0x42] sm:$0xff]
        %v658 = vld [vmem:[#allocation2 + $0x52] sm:$0xff]
        %v659 = vld [vmem:[#allocation2 + $0x62] sm:$0xff]
        %v660 = vld [vmem:[#allocation2 + $0x72] sm:$0xff]
        %v661 = vpack.c.bf16 %v654, %v653
        %v662 = vpack.c.bf16 %v656, %v655
        %v663 = vpack.c.bf16 %v658, %v657
        %v664 = vpack.c.bf16 %v660, %v659
        %s665 = scalar_lea.vmem [#allocation4], 64
        %v666 = vld [vmem:[%s665] sm:$0xf]
        %v667 = vld [vmem:[%s665 + $0x4] sm:$0xf]
        %v668 = vld [vmem:[%s665 + $0x8] sm:$0xf]
        %v669 = vld [vmem:[%s665 + $0xc] sm:$0xf]
        %v670 = vld [vmem:[%s665 + $0x10] sm:$0xf]
        %v671 = vld [vmem:[%s665 + $0x14] sm:$0xf]
        %v672 = vld [vmem:[%s665 + $0x18] sm:$0xf]
        %v673 = vld [vmem:[%s665 + $0x1c] sm:$0xf]
        %v682 = vunpack.c.l.b16 %v666
        %v683 = vunpack.c.l.b16 %v667
        %v684 = vunpack.c.l.b16 %v668
        %v685 = vunpack.c.l.b16 %v669
        %v686 = vunpack.c.l.b16 %v670
        %v687 = vunpack.c.l.b16 %v671
        %v688 = vunpack.c.l.b16 %v672
        %v689 = vunpack.c.l.b16 %v673
        %v690 = vpack.c.b16 %v683, %v682
        %v691 = vpack.c.b16 %v685, %v684
        %v692 = vpack.c.b16 %v687, %v686
        %v693 = vpack.c.b16 %v689, %v688
        %v699 = vsel %vm322, %v661, 0
        %v702 = vsel %vm322, %v662, 0
        %v705 = vsel %vm322, %v663, 0
        %v708 = vsel %vm322, %v664, 0
        %710 = vmatprep.subr.bf16.mxu0 0
        %711 = vmatpush1.bf16.msra.mxu0 %v690
        %712 = vmatprep.subr.bf16.mxu0 0
        %713 = vmatpush1.bf16.msra.mxu0 %v691
        %714 = vmatprep.subr.bf16.mxu0 0
        %715 = vmatpush1.bf16.msra.mxu0 %v692
        %716 = vmatprep.subr.bf16.mxu0 0
        %717 = vmatpush1.bf16.msra.mxu0 %v693
        %718 = vmatprep.subr.bf16.mxu0 0
        %719 = vmatpush1.bf16.msra.mxu0 0
        %720 = vmatprep.subr.bf16.mxu0 0
        %721 = vmatpush1.bf16.msra.mxu0 0
        %722 = vmatprep.subr.bf16.mxu0 0
        %723 = vmatpush1.bf16.msra.mxu0 0
        %724 = vmatprep.subr.bf16.mxu0 0
        %725 = vmatpush1.bf16.msra.mxu0 0
        %726 = vmatprep.subr.bf16.mxu0 0
        %727 = vmatpush1.bf16.msra.mxu0 0
        %728 = vmatprep.subr.bf16.mxu0 0
        %729 = vmatpush1.bf16.msra.mxu0 0
        %730 = vmatprep.subr.bf16.mxu0 0
        %731 = vmatpush1.bf16.msra.mxu0 0
        %732 = vmatprep.subr.bf16.mxu0 0
        %733 = vmatpush1.bf16.msra.mxu0 0
        %734 = vmatprep.subr.bf16.mxu0 0
        %735 = vmatpush1.bf16.msra.mxu0 0
        %736 = vmatprep.subr.bf16.mxu0 0
        %737 = vmatpush1.bf16.msra.mxu0 0
        %738 = vmatprep.subr.bf16.mxu0 0
        %739 = vmatpush1.bf16.msra.mxu0 0
        %740 = vmatprep.subr.bf16.mxu0 0
        %741 = vmatpush1.bf16.msra.mxu0 0
        %742 = vmatprep.mubr.bf16.mxu0 0
        %743 = vmatmul.mubr.bf16.gmra.mrb[0].mxu0 %v699
        %v744 = vpop.f32.mrb[0].mxu0
        %v745 = vadd.f32 0.0, %v744
        %v746 = vpop.f32.mrb[0].mxu0
        %v747 = vpop.f32.mrb[0].mxu0
        %v748 = vadd.f32 0.0, %v747
        %v749 = vpop.f32.mrb[0].mxu0
        %750 = vmatprep.mubr.bf16.mxu0 0
        %751 = vmatmul.mubr.bf16.gmra.mrb[0].mxu0 %v702
        %v752 = vpop.f32.mrb[0].mxu0
        %v753 = vadd.f32 0.0, %v752
        %v754 = vpop.f32.mrb[0].mxu0
        %v755 = vpop.f32.mrb[0].mxu0
        %v756 = vadd.f32 0.0, %v755
        %v757 = vpop.f32.mrb[0].mxu0
        %758 = vmatprep.mubr.bf16.mxu0 0
        %759 = vmatmul.mubr.bf16.gmra.mrb[0].mxu0 %v705
        %v760 = vpop.f32.mrb[0].mxu0
        %v761 = vadd.f32 0.0, %v760
        %v762 = vpop.f32.mrb[0].mxu0
        %v763 = vpop.f32.mrb[0].mxu0
        %v764 = vadd.f32 0.0, %v763
        %v765 = vpop.f32.mrb[0].mxu0
        %766 = vmatprep.mubr.bf16.mxu0 0
        %767 = vmatmul.mubr.bf16.gmra.mrb[0].mxu0 %v708
        %v768 = vpop.f32.mrb[0].mxu0
        %v769 = vadd.f32 0.0, %v768
        %v770 = vpop.f32.mrb[0].mxu0
        %v771 = vpop.f32.mrb[0].mxu0
        %v772 = vadd.f32 0.0, %v771
        %v773 = vpop.f32.mrb[0].mxu0
        %774 = vdwg.mxu0
        %v775 = vadd.f32 %v623, %v745
        %v776 = vadd.f32 %v626, %v748
        %v777 = vadd.f32 %v631, %v753
        %v778 = vadd.f32 %v634, %v756
        %v779 = vadd.f32 %v639, %v761
        %v780 = vadd.f32 %v642, %v764
        %v781 = vadd.f32 %v647, %v769
        %v782 = vadd.f32 %v650, %v772
        %v783 = vld [vmem:[%s383] sm:$0xff]
        %v784 = vld [vmem:[%s383 + $0x10] sm:$0xff]
        %v785 = vld [vmem:[%s383 + $0x20] sm:$0xff]
        %v786 = vld [vmem:[%s383 + $0x30] sm:$0xff]
        %v787 = vld [vmem:[%s383 + $0x40] sm:$0xff]
        %v788 = vld [vmem:[%s383 + $0x50] sm:$0xff]
        %v789 = vld [vmem:[%s383 + $0x60] sm:$0xff]
        %v790 = vld [vmem:[%s383 + $0x70] sm:$0xff]
        %v791 = vpack.c.bf16 %v784, %v783
        %v792 = vpack.c.bf16 %v786, %v785
        %v793 = vpack.c.bf16 %v788, %v787
        %v794 = vpack.c.bf16 %v790, %v789
        %s795 = scalar_lea.vmem [#allocation4], 96
        %v796 = vld [vmem:[%s795] sm:$0xf]
        %v797 = vld [vmem:[%s795 + $0x4] sm:$0xf]
        %v798 = vld [vmem:[%s795 + $0x8] sm:$0xf]
        %v799 = vld [vmem:[%s795 + $0xc] sm:$0xf]
        %v800 = vld [vmem:[%s795 + $0x10] sm:$0xf]
        %v801 = vld [vmem:[%s795 + $0x14] sm:$0xf]
        %v802 = vld [vmem:[%s795 + $0x18] sm:$0xf]
        %v803 = vld [vmem:[%s795 + $0x1c] sm:$0xf]
        %v812 = vunpack.c.l.b16 %v796
        %v813 = vunpack.c.l.b16 %v797
        %v814 = vunpack.c.l.b16 %v798
        %v815 = vunpack.c.l.b16 %v799
        %v816 = vunpack.c.l.b16 %v800
        %v817 = vunpack.c.l.b16 %v801
        %v818 = vunpack.c.l.b16 %v802
        %v819 = vunpack.c.l.b16 %v803
        %v820 = vpack.c.b16 %v813, %v812
        %v821 = vpack.c.b16 %v815, %v814
        %v822 = vpack.c.b16 %v817, %v816
        %v823 = vpack.c.b16 %v819, %v818
        %v829 = vsel %vm322, %v791, 0
        %v832 = vsel %vm322, %v792, 0
        %v835 = vsel %vm322, %v793, 0
        %v838 = vsel %vm322, %v794, 0
        %840 = vmatprep.subr.bf16.mxu0 0
        %841 = vmatpush1.bf16.msra.mxu0 %v820
        %842 = vmatprep.subr.bf16.mxu0 0
        %843 = vmatpush1.bf16.msra.mxu0 %v821
        %844 = vmatprep.subr.bf16.mxu0 0
        %845 = vmatpush1.bf16.msra.mxu0 %v822
        %846 = vmatprep.subr.bf16.mxu0 0
        %847 = vmatpush1.bf16.msra.mxu0 %v823
        %848 = vmatprep.subr.bf16.mxu0 0
        %849 = vmatpush1.bf16.msra.mxu0 0
        %850 = vmatprep.subr.bf16.mxu0 0
        %851 = vmatpush1.bf16.msra.mxu0 0
        %852 = vmatprep.subr.bf16.mxu0 0
        %853 = vmatpush1.bf16.msra.mxu0 0
        %854 = vmatprep.subr.bf16.mxu0 0
        %855 = vmatpush1.bf16.msra.mxu0 0
        %856 = vmatprep.subr.bf16.mxu0 0
        %857 = vmatpush1.bf16.msra.mxu0 0
        %858 = vmatprep.subr.bf16.mxu0 0
        %859 = vmatpush1.bf16.msra.mxu0 0
        %860 = vmatprep.subr.bf16.mxu0 0
        %861 = vmatpush1.bf16.msra.mxu0 0
        %862 = vmatprep.subr.bf16.mxu0 0
        %863 = vmatpush1.bf16.msra.mxu0 0
        %864 = vmatprep.subr.bf16.mxu0 0
        %865 = vmatpush1.bf16.msra.mxu0 0
        %866 = vmatprep.subr.bf16.mxu0 0
        %867 = vmatpush1.bf16.msra.mxu0 0
        %868 = vmatprep.subr.bf16.mxu0 0
        %869 = vmatpush1.bf16.msra.mxu0 0
        %870 = vmatprep.subr.bf16.mxu0 0
        %871 = vmatpush1.bf16.msra.mxu0 0
        %872 = vmatprep.mubr.bf16.mxu0 0
        %873 = vmatmul.mubr.bf16.gmra.mrb[0].mxu0 %v829
        %v874 = vpop.f32.mrb[0].mxu0
        %v875 = vadd.f32 0.0, %v874
        %v876 = vpop.f32.mrb[0].mxu0
        %v877 = vpop.f32.mrb[0].mxu0
        %v878 = vadd.f32 0.0, %v877
        %v879 = vpop.f32.mrb[0].mxu0
        %880 = vmatprep.mubr.bf16.mxu0 0
        %881 = vmatmul.mubr.bf16.gmra.mrb[0].mxu0 %v832
        %v882 = vpop.f32.mrb[0].mxu0
        %v883 = vadd.f32 0.0, %v882
        %v884 = vpop.f32.mrb[0].mxu0
        %v885 = vpop.f32.mrb[0].mxu0
        %v886 = vadd.f32 0.0, %v885
        %v887 = vpop.f32.mrb[0].mxu0
        %888 = vmatprep.mubr.bf16.mxu0 0
        %889 = vmatmul.mubr.bf16.gmra.mrb[0].mxu0 %v835
        %v890 = vpop.f32.mrb[0].mxu0
        %v891 = vadd.f32 0.0, %v890
        %v892 = vpop.f32.mrb[0].mxu0
        %v893 = vpop.f32.mrb[0].mxu0
        %v894 = vadd.f32 0.0, %v893
        %v895 = vpop.f32.mrb[0].mxu0
        %896 = vmatprep.mubr.bf16.mxu0 0
        %897 = vmatmul.mubr.bf16.gmra.mrb[0].mxu0 %v838
        %v898 = vpop.f32.mrb[0].mxu0
        %v899 = vadd.f32 0.0, %v898
        %v900 = vpop.f32.mrb[0].mxu0
        %v901 = vpop.f32.mrb[0].mxu0
        %v902 = vadd.f32 0.0, %v901
        %v903 = vpop.f32.mrb[0].mxu0
        %904 = vdwg.mxu0
        %v905 = vadd.f32 %v775, %v875
        %v906 = vadd.f32 %v776, %v878
        %v907 = vadd.f32 %v777, %v883
        %v908 = vadd.f32 %v778, %v886
        %v909 = vadd.f32 %v779, %v891
        %v910 = vadd.f32 %v780, %v894
        %v911 = vadd.f32 %v781, %v899
        %v912 = vadd.f32 %v782, %v902
        %v913 = vld [vmem:[%s383 + $0x1] sm:$0xff]
        %v914 = vld [vmem:[%s383 + $0x11] sm:$0xff]
        %v915 = vld [vmem:[%s383 + $0x21] sm:$0xff]
        %v916 = vld [vmem:[%s383 + $0x31] sm:$0xff]
        %v917 = vld [vmem:[%s383 + $0x41] sm:$0xff]
        %v918 = vld [vmem:[%s383 + $0x51] sm:$0xff]
        %v919 = vld [vmem:[%s383 + $0x61] sm:$0xff]
        %v920 = vld [vmem:[%s383 + $0x71] sm:$0xff]
        %v921 = vpack.c.bf16 %v914, %v913
        %v922 = vpack.c.bf16 %v916, %v915
        %v923 = vpack.c.bf16 %v918, %v917
        %v924 = vpack.c.bf16 %v920, %v919
        %s925 = scalar_lea.vmem [#allocation4], 128
        %v926 = vld [vmem:[%s925] sm:$0xf]
        %v927 = vld [vmem:[%s925 + $0x4] sm:$0xf]
        %v928 = vld [vmem:[%s925 + $0x8] sm:$0xf]
        %v929 = vld [vmem:[%s925 + $0xc] sm:$0xf]
        %v930 = vld [vmem:[%s925 + $0x10] sm:$0xf]
        %v931 = vld [vmem:[%s925 + $0x14] sm:$0xf]
        %v932 = vld [vmem:[%s925 + $0x18] sm:$0xf]
        %v933 = vld [vmem:[%s925 + $0x1c] sm:$0xf]
        %v942 = vunpack.c.l.b16 %v926
        %v943 = vunpack.c.l.b16 %v927
        %v944 = vunpack.c.l.b16 %v928
        %v945 = vunpack.c.l.b16 %v929
        %v946 = vunpack.c.l.b16 %v930
        %v947 = vunpack.c.l.b16 %v931
        %v948 = vunpack.c.l.b16 %v932
        %v949 = vunpack.c.l.b16 %v933
        %v950 = vpack.c.b16 %v943, %v942
        %v951 = vpack.c.b16 %v945, %v944
        %v952 = vpack.c.b16 %v947, %v946
        %v953 = vpack.c.b16 %v949, %v948
        %v959 = vsel %vm322, %v921, 0
        %v962 = vsel %vm322, %v922, 0
        %v965 = vsel %vm322, %v923, 0
        %v968 = vsel %vm322, %v924, 0
        %970 = vmatprep.subr.bf16.mxu0 0
        %971 = vmatpush1.bf16.msra.mxu0 %v950
        %972 = vmatprep.subr.bf16.mxu0 0
        %973 = vmatpush1.bf16.msra.mxu0 %v951
        %974 = vmatprep.subr.bf16.mxu0 0
        %975 = vmatpush1.bf16.msra.mxu0 %v952
        %976 = vmatprep.subr.bf16.mxu0 0
        %977 = vmatpush1.bf16.msra.mxu0 %v953
        %978 = vmatprep.subr.bf16.mxu0 0
        %979 = vmatpush1.bf16.msra.mxu0 0
        %980 = vmatprep.subr.bf16.mxu0 0
        %981 = vmatpush1.bf16.msra.mxu0 0
        %982 = vmatprep.subr.bf16.mxu0 0
        %983 = vmatpush1.bf16.msra.mxu0 0
        %984 = vmatprep.subr.bf16.mxu0 0
        %985 = vmatpush1.bf16.msra.mxu0 0
        %986 = vmatprep.subr.bf16.mxu0 0
        %987 = vmatpush1.bf16.msra.mxu0 0
        %988 = vmatprep.subr.bf16.mxu0 0
        %989 = vmatpush1.bf16.msra.mxu0 0
        %990 = vmatprep.subr.bf16.mxu0 0
        %991 = vmatpush1.bf16.msra.mxu0 0
        %992 = vmatprep.subr.bf16.mxu0 0
        %993 = vmatpush1.bf16.msra.mxu0 0
        %994 = vmatprep.subr.bf16.mxu0 0
        %995 = vmatpush1.bf16.msra.mxu0 0
        %996 = vmatprep.subr.bf16.mxu0 0
        %997 = vmatpush1.bf16.msra.mxu0 0
        %998 = vmatprep.subr.bf16.mxu0 0
        %999 = vmatpush1.bf16.msra.mxu0 0
        %1000 = vmatprep.subr.bf16.mxu0 0
        %1001 = vmatpush1.bf16.msra.mxu0 0
        %1002 = vmatprep.mubr.bf16.mxu0 0
        %1003 = vmatmul.mubr.bf16.gmra.mrb[0].mxu0 %v959
        %v1004 = vpop.f32.mrb[0].mxu0
        %v1005 = vadd.f32 0.0, %v1004
        %v1006 = vpop.f32.mrb[0].mxu0
        %v1007 = vpop.f32.mrb[0].mxu0
        %v1008 = vadd.f32 0.0, %v1007
        %v1009 = vpop.f32.mrb[0].mxu0
        %1010 = vmatprep.mubr.bf16.mxu0 0
        %1011 = vmatmul.mubr.bf16.gmra.mrb[0].mxu0 %v962
        %v1012 = vpop.f32.mrb[0].mxu0
        %v1013 = vadd.f32 0.0, %v1012
        %v1014 = vpop.f32.mrb[0].mxu0
        %v1015 = vpop.f32.mrb[0].mxu0
        %v1016 = vadd.f32 0.0, %v1015
        %v1017 = vpop.f32.mrb[0].mxu0
        %1018 = vmatprep.mubr.bf16.mxu0 0
        %1019 = vmatmul.mubr.bf16.gmra.mrb[0].mxu0 %v965
        %v1020 = vpop.f32.mrb[0].mxu0
        %v1021 = vadd.f32 0.0, %v1020
        %v1022 = vpop.f32.mrb[0].mxu0
        %v1023 = vpop.f32.mrb[0].mxu0
        %v1024 = vadd.f32 0.0, %v1023
        %v1025 = vpop.f32.mrb[0].mxu0
        %1026 = vmatprep.mubr.bf16.mxu0 0
        %1027 = vmatmul.mubr.bf16.gmra.mrb[0].mxu0 %v968
        %v1028 = vpop.f32.mrb[0].mxu0
        %v1029 = vadd.f32 0.0, %v1028
        %v1030 = vpop.f32.mrb[0].mxu0
        %v1031 = vpop.f32.mrb[0].mxu0
        %v1032 = vadd.f32 0.0, %v1031
        %v1033 = vpop.f32.mrb[0].mxu0
        %1034 = vdwg.mxu0
        %v1035 = vadd.f32 %v905, %v1005
        %v1036 = vadd.f32 %v906, %v1008
        %v1037 = vadd.f32 %v907, %v1013
        %v1038 = vadd.f32 %v908, %v1016
        %v1039 = vadd.f32 %v909, %v1021
        %v1040 = vadd.f32 %v910, %v1024
        %v1041 = vadd.f32 %v911, %v1029
        %v1042 = vadd.f32 %v912, %v1032
        %v1043 = vld [vmem:[%s383 + $0x2] sm:$0xff]
        %v1044 = vld [vmem:[%s383 + $0x12] sm:$0xff]
        %v1045 = vld [vmem:[%s383 + $0x22] sm:$0xff]
        %v1046 = vld [vmem:[%s383 + $0x32] sm:$0xff]
        %v1047 = vld [vmem:[%s383 + $0x42] sm:$0xff]
        %v1048 = vld [vmem:[%s383 + $0x52] sm:$0xff]
        %v1049 = vld [vmem:[%s383 + $0x62] sm:$0xff]
        %v1050 = vld [vmem:[%s383 + $0x72] sm:$0xff]
        %v1051 = vpack.c.bf16 %v1044, %v1043
        %v1052 = vpack.c.bf16 %v1046, %v1045
        %v1053 = vpack.c.bf16 %v1048, %v1047
        %v1054 = vpack.c.bf16 %v1050, %v1049
        %s1055 = scalar_lea.vmem [#allocation4], 160
        %v1056 = vld [vmem:[%s1055] sm:$0xf]
        %v1057 = vld [vmem:[%s1055 + $0x4] sm:$0xf]
        %v1058 = vld [vmem:[%s1055 + $0x8] sm:$0xf]
        %v1059 = vld [vmem:[%s1055 + $0xc] sm:$0xf]
        %v1060 = vld [vmem:[%s1055 + $0x10] sm:$0xf]
        %v1061 = vld [vmem:[%s1055 + $0x14] sm:$0xf]
        %v1062 = vld [vmem:[%s1055 + $0x18] sm:$0xf]
        %v1063 = vld [vmem:[%s1055 + $0x1c] sm:$0xf]
        %v1072 = vunpack.c.l.b16 %v1056
        %v1073 = vunpack.c.l.b16 %v1057
        %v1074 = vunpack.c.l.b16 %v1058
        %v1075 = vunpack.c.l.b16 %v1059
        %v1076 = vunpack.c.l.b16 %v1060
        %v1077 = vunpack.c.l.b16 %v1061
        %v1078 = vunpack.c.l.b16 %v1062
        %v1079 = vunpack.c.l.b16 %v1063
        %v1080 = vpack.c.b16 %v1073, %v1072
        %v1081 = vpack.c.b16 %v1075, %v1074
        %v1082 = vpack.c.b16 %v1077, %v1076
        %v1083 = vpack.c.b16 %v1079, %v1078
        %v1089 = vsel %vm322, %v1051, 0
        %v1092 = vsel %vm322, %v1052, 0
        %v1095 = vsel %vm322, %v1053, 0
        %v1098 = vsel %vm322, %v1054, 0
        %1100 = vmatprep.subr.bf16.mxu0 0
        %1101 = vmatpush1.bf16.msra.mxu0 %v1080
        %1102 = vmatprep.subr.bf16.mxu0 0
        %1103 = vmatpush1.bf16.msra.mxu0 %v1081
        %1104 = vmatprep.subr.bf16.mxu0 0
        %1105 = vmatpush1.bf16.msra.mxu0 %v1082
        %1106 = vmatprep.subr.bf16.mxu0 0
        %1107 = vmatpush1.bf16.msra.mxu0 %v1083
        %1108 = vmatprep.subr.bf16.mxu0 0
        %1109 = vmatpush1.bf16.msra.mxu0 0
        %1110 = vmatprep.subr.bf16.mxu0 0
        %1111 = vmatpush1.bf16.msra.mxu0 0
        %1112 = vmatprep.subr.bf16.mxu0 0
        %1113 = vmatpush1.bf16.msra.mxu0 0
        %1114 = vmatprep.subr.bf16.mxu0 0
        %1115 = vmatpush1.bf16.msra.mxu0 0
        %1116 = vmatprep.subr.bf16.mxu0 0
        %1117 = vmatpush1.bf16.msra.mxu0 0
        %1118 = vmatprep.subr.bf16.mxu0 0
        %1119 = vmatpush1.bf16.msra.mxu0 0
        %1120 = vmatprep.subr.bf16.mxu0 0
        %1121 = vmatpush1.bf16.msra.mxu0 0
        %1122 = vmatprep.subr.bf16.mxu0 0
        %1123 = vmatpush1.bf16.msra.mxu0 0
        %1124 = vmatprep.subr.bf16.mxu0 0
        %1125 = vmatpush1.bf16.msra.mxu0 0
        %1126 = vmatprep.subr.bf16.mxu0 0
        %1127 = vmatpush1.bf16.msra.mxu0 0
        %1128 = vmatprep.subr.bf16.mxu0 0
        %1129 = vmatpush1.bf16.msra.mxu0 0
        %1130 = vmatprep.subr.bf16.mxu0 0
        %1131 = vmatpush1.bf16.msra.mxu0 0
        %1132 = vmatprep.mubr.bf16.mxu0 0
        %1133 = vmatmul.mubr.bf16.gmra.mrb[0].mxu0 %v1089
        %v1134 = vpop.f32.mrb[0].mxu0
        %v1135 = vadd.f32 0.0, %v1134
        %v1136 = vpop.f32.mrb[0].mxu0
        %v1137 = vpop.f32.mrb[0].mxu0
        %v1138 = vadd.f32 0.0, %v1137
        %v1139 = vpop.f32.mrb[0].mxu0
        %1140 = vmatprep.mubr.bf16.mxu0 0
        %1141 = vmatmul.mubr.bf16.gmra.mrb[0].mxu0 %v1092
        %v1142 = vpop.f32.mrb[0].mxu0
        %v1143 = vadd.f32 0.0, %v1142
        %v1144 = vpop.f32.mrb[0].mxu0
        %v1145 = vpop.f32.mrb[0].mxu0
        %v1146 = vadd.f32 0.0, %v1145
        %v1147 = vpop.f32.mrb[0].mxu0
        %1148 = vmatprep.mubr.bf16.mxu0 0
        %1149 = vmatmul.mubr.bf16.gmra.mrb[0].mxu0 %v1095
        %v1150 = vpop.f32.mrb[0].mxu0
        %v1151 = vadd.f32 0.0, %v1150
        %v1152 = vpop.f32.mrb[0].mxu0
        %v1153 = vpop.f32.mrb[0].mxu0
        %v1154 = vadd.f32 0.0, %v1153
        %v1155 = vpop.f32.mrb[0].mxu0
        %1156 = vmatprep.mubr.bf16.mxu0 0
        %1157 = vmatmul.mubr.bf16.gmra.mrb[0].mxu0 %v1098
        %v1158 = vpop.f32.mrb[0].mxu0
        %v1159 = vadd.f32 0.0, %v1158
        %v1160 = vpop.f32.mrb[0].mxu0
        %v1161 = vpop.f32.mrb[0].mxu0
        %v1162 = vadd.f32 0.0, %v1161
        %v1163 = vpop.f32.mrb[0].mxu0
        %1164 = vdwg.mxu0
        %v1165 = vadd.f32 %v1035, %v1135
        %v1166 = vadd.f32 %v1036, %v1138
        %v1167 = vadd.f32 %v1037, %v1143
        %v1168 = vadd.f32 %v1038, %v1146
        %v1169 = vadd.f32 %v1039, %v1151
        %v1170 = vadd.f32 %v1040, %v1154
        %v1171 = vadd.f32 %v1041, %v1159
        %v1172 = vadd.f32 %v1042, %v1162
        %s1173 = scalar_lea.vmem [#allocation2], 32
        %v1174 = vld [vmem:[%s1173] sm:$0xff]
        %v1175 = vld [vmem:[%s1173 + $0x10] sm:$0xff]
        %v1176 = vld [vmem:[%s1173 + $0x20] sm:$0xff]
        %v1177 = vld [vmem:[%s1173 + $0x30] sm:$0xff]
        %v1178 = vld [vmem:[%s1173 + $0x40] sm:$0xff]
        %v1179 = vld [vmem:[%s1173 + $0x50] sm:$0xff]
        %v1180 = vld [vmem:[%s1173 + $0x60] sm:$0xff]
        %v1181 = vld [vmem:[%s1173 + $0x70] sm:$0xff]
        %v1182 = vpack.c.bf16 %v1175, %v1174
        %v1183 = vpack.c.bf16 %v1177, %v1176
        %v1184 = vpack.c.bf16 %v1179, %v1178
        %v1185 = vpack.c.bf16 %v1181, %v1180
        %s1186 = scalar_lea.vmem [#allocation4], 192
        %v1187 = vld [vmem:[%s1186] sm:$0xf]
        %v1188 = vld [vmem:[%s1186 + $0x4] sm:$0xf]
        %v1189 = vld [vmem:[%s1186 + $0x8] sm:$0xf]
        %v1190 = vld [vmem:[%s1186 + $0xc] sm:$0xf]
        %v1191 = vld [vmem:[%s1186 + $0x10] sm:$0xf]
        %v1192 = vld [vmem:[%s1186 + $0x14] sm:$0xf]
        %v1193 = vld [vmem:[%s1186 + $0x18] sm:$0xf]
        %v1194 = vld [vmem:[%s1186 + $0x1c] sm:$0xf]
        %v1203 = vunpack.c.l.b16 %v1187
        %v1204 = vunpack.c.l.b16 %v1188
        %v1205 = vunpack.c.l.b16 %v1189
        %v1206 = vunpack.c.l.b16 %v1190
        %v1207 = vunpack.c.l.b16 %v1191
        %v1208 = vunpack.c.l.b16 %v1192
        %v1209 = vunpack.c.l.b16 %v1193
        %v1210 = vunpack.c.l.b16 %v1194
        %v1211 = vpack.c.b16 %v1204, %v1203
        %v1212 = vpack.c.b16 %v1206, %v1205
        %v1213 = vpack.c.b16 %v1208, %v1207
        %v1214 = vpack.c.b16 %v1210, %v1209
        %v1220 = vsel %vm322, %v1182, 0
        %v1223 = vsel %vm322, %v1183, 0
        %v1226 = vsel %vm322, %v1184, 0
        %v1229 = vsel %vm322, %v1185, 0
        %1231 = vmatprep.subr.bf16.mxu0 0
        %1232 = vmatpush1.bf16.msra.mxu0 %v1211
        %1233 = vmatprep.subr.bf16.mxu0 0
        %1234 = vmatpush1.bf16.msra.mxu0 %v1212
        %1235 = vmatprep.subr.bf16.mxu0 0
        %1236 = vmatpush1.bf16.msra.mxu0 %v1213
        %1237 = vmatprep.subr.bf16.mxu0 0
        %1238 = vmatpush1.bf16.msra.mxu0 %v1214
        %1239 = vmatprep.subr.bf16.mxu0 0
        %1240 = vmatpush1.bf16.msra.mxu0 0
        %1241 = vmatprep.subr.bf16.mxu0 0
        %1242 = vmatpush1.bf16.msra.mxu0 0
        %1243 = vmatprep.subr.bf16.mxu0 0
        %1244 = vmatpush1.bf16.msra.mxu0 0
        %1245 = vmatprep.subr.bf16.mxu0 0
        %1246 = vmatpush1.bf16.msra.mxu0 0
        %1247 = vmatprep.subr.bf16.mxu0 0
        %1248 = vmatpush1.bf16.msra.mxu0 0
        %1249 = vmatprep.subr.bf16.mxu0 0
        %1250 = vmatpush1.bf16.msra.mxu0 0
        %1251 = vmatprep.subr.bf16.mxu0 0
        %1252 = vmatpush1.bf16.msra.mxu0 0
        %1253 = vmatprep.subr.bf16.mxu0 0
        %1254 = vmatpush1.bf16.msra.mxu0 0
        %1255 = vmatprep.subr.bf16.mxu0 0
        %1256 = vmatpush1.bf16.msra.mxu0 0
        %1257 = vmatprep.subr.bf16.mxu0 0
        %1258 = vmatpush1.bf16.msra.mxu0 0
        %1259 = vmatprep.subr.bf16.mxu0 0
        %1260 = vmatpush1.bf16.msra.mxu0 0
        %1261 = vmatprep.subr.bf16.mxu0 0
        %1262 = vmatpush1.bf16.msra.mxu0 0
        %1263 = vmatprep.mubr.bf16.mxu0 0
        %1264 = vmatmul.mubr.bf16.gmra.mrb[0].mxu0 %v1220
        %v1265 = vpop.f32.mrb[0].mxu0
        %v1266 = vadd.f32 0.0, %v1265
        %v1267 = vpop.f32.mrb[0].mxu0
        %v1268 = vpop.f32.mrb[0].mxu0
        %v1269 = vadd.f32 0.0, %v1268
        %v1270 = vpop.f32.mrb[0].mxu0
        %1271 = vmatprep.mubr.bf16.mxu0 0
        %1272 = vmatmul.mubr.bf16.gmra.mrb[0].mxu0 %v1223
        %v1273 = vpop.f32.mrb[0].mxu0
        %v1274 = vadd.f32 0.0, %v1273
        %v1275 = vpop.f32.mrb[0].mxu0
        %v1276 = vpop.f32.mrb[0].mxu0
        %v1277 = vadd.f32 0.0, %v1276
        %v1278 = vpop.f32.mrb[0].mxu0
        %1279 = vmatprep.mubr.bf16.mxu0 0
        %1280 = vmatmul.mubr.bf16.gmra.mrb[0].mxu0 %v1226
        %v1281 = vpop.f32.mrb[0].mxu0
        %v1282 = vadd.f32 0.0, %v1281
        %v1283 = vpop.f32.mrb[0].mxu0
        %v1284 = vpop.f32.mrb[0].mxu0
        %v1285 = vadd.f32 0.0, %v1284
        %v1286 = vpop.f32.mrb[0].mxu0
        %1287 = vmatprep.mubr.bf16.mxu0 0
        %1288 = vmatmul.mubr.bf16.gmra.mrb[0].mxu0 %v1229
        %v1289 = vpop.f32.mrb[0].mxu0
        %v1290 = vadd.f32 0.0, %v1289
        %v1291 = vpop.f32.mrb[0].mxu0
        %v1292 = vpop.f32.mrb[0].mxu0
        %v1293 = vadd.f32 0.0, %v1292
        %v1294 = vpop.f32.mrb[0].mxu0
        %1295 = vdwg.mxu0
        %v1296 = vadd.f32 %v1165, %v1266
        %v1297 = vadd.f32 %v1166, %v1269
        %v1298 = vadd.f32 %v1167, %v1274
        %v1299 = vadd.f32 %v1168, %v1277
        %v1300 = vadd.f32 %v1169, %v1282
        %v1301 = vadd.f32 %v1170, %v1285
        %v1302 = vadd.f32 %v1171, %v1290
        %v1303 = vadd.f32 %v1172, %v1293
        %v1304 = vld [vmem:[%s1173 + $0x1] sm:$0xff]
        %v1305 = vld [vmem:[%s1173 + $0x11] sm:$0xff]
        %v1306 = vld [vmem:[%s1173 + $0x21] sm:$0xff]
        %v1307 = vld [vmem:[%s1173 + $0x31] sm:$0xff]
        %v1308 = vld [vmem:[%s1173 + $0x41] sm:$0xff]
        %v1309 = vld [vmem:[%s1173 + $0x51] sm:$0xff]
        %v1310 = vld [vmem:[%s1173 + $0x61] sm:$0xff]
        %v1311 = vld [vmem:[%s1173 + $0x71] sm:$0xff]
        %v1312 = vpack.c.bf16 %v1305, %v1304
        %v1313 = vpack.c.bf16 %v1307, %v1306
        %v1314 = vpack.c.bf16 %v1309, %v1308
        %v1315 = vpack.c.bf16 %v1311, %v1310
        %s1316 = scalar_lea.vmem [#allocation4], 224
        %v1317 = vld [vmem:[%s1316] sm:$0xf]
        %v1318 = vld [vmem:[%s1316 + $0x4] sm:$0xf]
        %v1319 = vld [vmem:[%s1316 + $0x8] sm:$0xf]
        %v1320 = vld [vmem:[%s1316 + $0xc] sm:$0xf]
        %v1321 = vld [vmem:[%s1316 + $0x10] sm:$0xf]
        %v1322 = vld [vmem:[%s1316 + $0x14] sm:$0xf]
        %v1323 = vld [vmem:[%s1316 + $0x18] sm:$0xf]
        %v1324 = vld [vmem:[%s1316 + $0x1c] sm:$0xf]
        %v1333 = vunpack.c.l.b16 %v1317
        %v1334 = vunpack.c.l.b16 %v1318
        %v1335 = vunpack.c.l.b16 %v1319
        %v1336 = vunpack.c.l.b16 %v1320
        %v1337 = vunpack.c.l.b16 %v1321
        %v1338 = vunpack.c.l.b16 %v1322
        %v1339 = vunpack.c.l.b16 %v1323
        %v1340 = vunpack.c.l.b16 %v1324
        %v1341 = vpack.c.b16 %v1334, %v1333
        %v1342 = vpack.c.b16 %v1336, %v1335
        %v1343 = vpack.c.b16 %v1338, %v1337
        %v1344 = vpack.c.b16 %v1340, %v1339
        %v1350 = vsel %vm322, %v1312, 0
        %v1353 = vsel %vm322, %v1313, 0
        %v1356 = vsel %vm322, %v1314, 0
        %v1359 = vsel %vm322, %v1315, 0
        %1361 = vmatprep.subr.bf16.mxu0 0
        %1362 = vmatpush1.bf16.msra.mxu0 %v1341
        %1363 = vmatprep.subr.bf16.mxu0 0
        %1364 = vmatpush1.bf16.msra.mxu0 %v1342
        %1365 = vmatprep.subr.bf16.mxu0 0
        %1366 = vmatpush1.bf16.msra.mxu0 %v1343
        %1367 = vmatprep.subr.bf16.mxu0 0
        %1368 = vmatpush1.bf16.msra.mxu0 %v1344
        %1369 = vmatprep.subr.bf16.mxu0 0
        %1370 = vmatpush1.bf16.msra.mxu0 0
        %1371 = vmatprep.subr.bf16.mxu0 0
        %1372 = vmatpush1.bf16.msra.mxu0 0
        %1373 = vmatprep.subr.bf16.mxu0 0
        %1374 = vmatpush1.bf16.msra.mxu0 0
        %1375 = vmatprep.subr.bf16.mxu0 0
        %1376 = vmatpush1.bf16.msra.mxu0 0
        %1377 = vmatprep.subr.bf16.mxu0 0
        %1378 = vmatpush1.bf16.msra.mxu0 0
        %1379 = vmatprep.subr.bf16.mxu0 0
        %1380 = vmatpush1.bf16.msra.mxu0 0
        %1381 = vmatprep.subr.bf16.mxu0 0
        %1382 = vmatpush1.bf16.msra.mxu0 0
        %1383 = vmatprep.subr.bf16.mxu0 0
        %1384 = vmatpush1.bf16.msra.mxu0 0
        %1385 = vmatprep.subr.bf16.mxu0 0
        %1386 = vmatpush1.bf16.msra.mxu0 0
        %1387 = vmatprep.subr.bf16.mxu0 0
        %1388 = vmatpush1.bf16.msra.mxu0 0
        %1389 = vmatprep.subr.bf16.mxu0 0
        %1390 = vmatpush1.bf16.msra.mxu0 0
        %1391 = vmatprep.subr.bf16.mxu0 0
        %1392 = vmatpush1.bf16.msra.mxu0 0
        %1393 = vmatprep.mubr.bf16.mxu0 0
        %1394 = vmatmul.mubr.bf16.gmra.mrb[0].mxu0 %v1350
        %v1395 = vpop.f32.mrb[0].mxu0
        %v1396 = vadd.f32 0.0, %v1395
        %v1397 = vpop.f32.mrb[0].mxu0
        %v1398 = vpop.f32.mrb[0].mxu0
        %v1399 = vadd.f32 0.0, %v1398
        %v1400 = vpop.f32.mrb[0].mxu0
        %1401 = vmatprep.mubr.bf16.mxu0 0
        %1402 = vmatmul.mubr.bf16.gmra.mrb[0].mxu0 %v1353
        %v1403 = vpop.f32.mrb[0].mxu0
        %v1404 = vadd.f32 0.0, %v1403
        %v1405 = vpop.f32.mrb[0].mxu0
        %v1406 = vpop.f32.mrb[0].mxu0
        %v1407 = vadd.f32 0.0, %v1406
        %v1408 = vpop.f32.mrb[0].mxu0
        %1409 = vmatprep.mubr.bf16.mxu0 0
        %1410 = vmatmul.mubr.bf16.gmra.mrb[0].mxu0 %v1356
        %v1411 = vpop.f32.mrb[0].mxu0
        %v1412 = vadd.f32 0.0, %v1411
        %v1413 = vpop.f32.mrb[0].mxu0
        %v1414 = vpop.f32.mrb[0].mxu0
        %v1415 = vadd.f32 0.0, %v1414
        %v1416 = vpop.f32.mrb[0].mxu0
        %1417 = vmatprep.mubr.bf16.mxu0 0
        %1418 = vmatmul.mubr.bf16.gmra.mrb[0].mxu0 %v1359
        %v1419 = vpop.f32.mrb[0].mxu0
        %v1420 = vadd.f32 0.0, %v1419
        %v1421 = vpop.f32.mrb[0].mxu0
        %v1422 = vpop.f32.mrb[0].mxu0
        %v1423 = vadd.f32 0.0, %v1422
        %v1424 = vpop.f32.mrb[0].mxu0
        %1425 = vdwg.mxu0
        %v1426 = vadd.f32 %v1296, %v1396
        %v1427 = vadd.f32 %v1297, %v1399
        %v1428 = vadd.f32 %v1298, %v1404
        %v1429 = vadd.f32 %v1299, %v1407
        %v1430 = vadd.f32 %v1300, %v1412
        %v1431 = vadd.f32 %v1301, %v1415
        %v1432 = vadd.f32 %v1302, %v1420
        %v1433 = vadd.f32 %v1303, %v1423
        %v1434 = vld [vmem:[%s1173 + $0x2] sm:$0xff]
        %v1435 = vld [vmem:[%s1173 + $0x12] sm:$0xff]
        %v1436 = vld [vmem:[%s1173 + $0x22] sm:$0xff]
        %v1437 = vld [vmem:[%s1173 + $0x32] sm:$0xff]
        %v1438 = vld [vmem:[%s1173 + $0x42] sm:$0xff]
        %v1439 = vld [vmem:[%s1173 + $0x52] sm:$0xff]
        %v1440 = vld [vmem:[%s1173 + $0x62] sm:$0xff]
        %v1441 = vld [vmem:[%s1173 + $0x72] sm:$0xff]
        %v1442 = vpack.c.bf16 %v1435, %v1434
        %v1443 = vpack.c.bf16 %v1437, %v1436
        %v1444 = vpack.c.bf16 %v1439, %v1438
        %v1445 = vpack.c.bf16 %v1441, %v1440
        %s1446 = scalar_lea.vmem [#allocation4], 256
        %v1447 = vld [vmem:[%s1446] sm:$0xf]
        %v1448 = vld [vmem:[%s1446 + $0x4] sm:$0xf]
        %v1449 = vld [vmem:[%s1446 + $0x8] sm:$0xf]
        %v1450 = vld [vmem:[%s1446 + $0xc] sm:$0xf]
        %v1451 = vld [vmem:[%s1446 + $0x10] sm:$0xf]
        %v1452 = vld [vmem:[%s1446 + $0x14] sm:$0xf]
        %v1453 = vld [vmem:[%s1446 + $0x18] sm:$0xf]
        %v1454 = vld [vmem:[%s1446 + $0x1c] sm:$0xf]
        %v1463 = vunpack.c.l.b16 %v1447
        %v1464 = vunpack.c.l.b16 %v1448
        %v1465 = vunpack.c.l.b16 %v1449
        %v1466 = vunpack.c.l.b16 %v1450
        %v1467 = vunpack.c.l.b16 %v1451
        %v1468 = vunpack.c.l.b16 %v1452
        %v1469 = vunpack.c.l.b16 %v1453
        %v1470 = vunpack.c.l.b16 %v1454
        %v1471 = vpack.c.b16 %v1464, %v1463
        %v1472 = vpack.c.b16 %v1466, %v1465
        %v1473 = vpack.c.b16 %v1468, %v1467
        %v1474 = vpack.c.b16 %v1470, %v1469
        %v1480 = vsel %vm322, %v1442, 0
        %v1483 = vsel %vm322, %v1443, 0
        %v1486 = vsel %vm322, %v1444, 0
        %v1489 = vsel %vm322, %v1445, 0
        %1491 = vmatprep.subr.bf16.mxu0 0
        %1492 = vmatpush1.bf16.msra.mxu0 %v1471
        %1493 = vmatprep.subr.bf16.mxu0 0
        %1494 = vmatpush1.bf16.msra.mxu0 %v1472
        %1495 = vmatprep.subr.bf16.mxu0 0
        %1496 = vmatpush1.bf16.msra.mxu0 %v1473
        %1497 = vmatprep.subr.bf16.mxu0 0
        %1498 = vmatpush1.bf16.msra.mxu0 %v1474
        %1499 = vmatprep.subr.bf16.mxu0 0
        %1500 = vmatpush1.bf16.msra.mxu0 0
        %1501 = vmatprep.subr.bf16.mxu0 0
        %1502 = vmatpush1.bf16.msra.mxu0 0
        %1503 = vmatprep.subr.bf16.mxu0 0
        %1504 = vmatpush1.bf16.msra.mxu0 0
        %1505 = vmatprep.subr.bf16.mxu0 0
        %1506 = vmatpush1.bf16.msra.mxu0 0
        %1507 = vmatprep.subr.bf16.mxu0 0
        %1508 = vmatpush1.bf16.msra.mxu0 0
        %1509 = vmatprep.subr.bf16.mxu0 0
        %1510 = vmatpush1.bf16.msra.mxu0 0
        %1511 = vmatprep.subr.bf16.mxu0 0
        %1512 = vmatpush1.bf16.msra.mxu0 0
        %1513 = vmatprep.subr.bf16.mxu0 0
        %1514 = vmatpush1.bf16.msra.mxu0 0
        %1515 = vmatprep.subr.bf16.mxu0 0
        %1516 = vmatpush1.bf16.msra.mxu0 0
        %1517 = vmatprep.subr.bf16.mxu0 0
        %1518 = vmatpush1.bf16.msra.mxu0 0
        %1519 = vmatprep.subr.bf16.mxu0 0
        %1520 = vmatpush1.bf16.msra.mxu0 0
        %1521 = vmatprep.subr.bf16.mxu0 0
        %1522 = vmatpush1.bf16.msra.mxu0 0
        %1523 = vmatprep.mubr.bf16.mxu0 0
        %1524 = vmatmul.mubr.bf16.gmra.mrb[0].mxu0 %v1480
        %v1525 = vpop.f32.mrb[0].mxu0
        %v1526 = vadd.f32 0.0, %v1525
        %v1527 = vpop.f32.mrb[0].mxu0
        %v1528 = vpop.f32.mrb[0].mxu0
        %v1529 = vadd.f32 0.0, %v1528
        %v1530 = vpop.f32.mrb[0].mxu0
        %1531 = vmatprep.mubr.bf16.mxu0 0
        %1532 = vmatmul.mubr.bf16.gmra.mrb[0].mxu0 %v1483
        %v1533 = vpop.f32.mrb[0].mxu0
        %v1534 = vadd.f32 0.0, %v1533
        %v1535 = vpop.f32.mrb[0].mxu0
        %v1536 = vpop.f32.mrb[0].mxu0
        %v1537 = vadd.f32 0.0, %v1536
        %v1538 = vpop.f32.mrb[0].mxu0
        %1539 = vmatprep.mubr.bf16.mxu0 0
        %1540 = vmatmul.mubr.bf16.gmra.mrb[0].mxu0 %v1486
        %v1541 = vpop.f32.mrb[0].mxu0
        %v1542 = vadd.f32 0.0, %v1541
        %v1543 = vpop.f32.mrb[0].mxu0
        %v1544 = vpop.f32.mrb[0].mxu0
        %v1545 = vadd.f32 0.0, %v1544
        %v1546 = vpop.f32.mrb[0].mxu0
        %1547 = vmatprep.mubr.bf16.mxu0 0
        %1548 = vmatmul.mubr.bf16.gmra.mrb[0].mxu0 %v1489
        %v1549 = vpop.f32.mrb[0].mxu0
        %v1550 = vadd.f32 0.0, %v1549
        %v1551 = vpop.f32.mrb[0].mxu0
        %v1552 = vpop.f32.mrb[0].mxu0
        %v1553 = vadd.f32 0.0, %v1552
        %v1554 = vpop.f32.mrb[0].mxu0
        %1555 = vdwg.mxu0
        %v1556 = vadd.f32 %v1426, %v1526
        %v1557 = vadd.f32 %v1427, %v1529
        %v1558 = vadd.f32 %v1428, %v1534
        %v1559 = vadd.f32 %v1429, %v1537
        %v1560 = vadd.f32 %v1430, %v1542
        %v1561 = vadd.f32 %v1431, %v1545
        %v1562 = vadd.f32 %v1432, %v1550
        %v1563 = vadd.f32 %v1433, %v1553
        %v1564 = vlaneseq
        %v1565 = vshrl.u32 %v1564, 7
        %v1566 = vsub.s32 0, %v1565
        %v1567 = vrot.slane %v392, %v1566
        %v1568 = vadd.f32 %v1556, %v1567
        %v1569 = vadd.f32 %v1557, %v1567
        %v1570 = vadd.f32 %v1558, %v1567
        %v1571 = vadd.f32 %v1559, %v1567
        %v1572 = vadd.f32 %v1560, %v1567
        %v1573 = vadd.f32 %v1561, %v1567
        %v1574 = vadd.f32 %v1562, %v1567
        %v1575 = vadd.f32 %v1563, %v1567
        %v1576 = vadd.f32 %v1568, %v1569
        %v1577 = vadd.f32 %v1576, %v1570
        %v1578 = vadd.f32 %v1577, %v1571
        %v1579 = vadd.f32 %v1578, %v1572
        %v1580 = vadd.f32 %v1579, %v1573
        %v1581 = vadd.f32 %v1580, %v1574
        %v1582 = vadd.f32 %v1581, %v1575
        %v1583 = vrot.slane %v1582, 4
        %v1584 = vadd.f32 %v1582, %v1583
        %v1585 = vrot.slane %v1584, 2
        %v1586 = vadd.f32 %v1584, %v1585
        %v1587 = vrot.slane %v1586, 1
        %v1588 = vadd.f32 %v1586, %v1587
        %v1589 = vmul.f32 %v1568, %v1568
        %v1590 = vmul.f32 %v1569, %v1569
        %v1591 = vmul.f32 %v1570, %v1570
        %v1592 = vmul.f32 %v1571, %v1571
        %v1593 = vmul.f32 %v1572, %v1572
        %v1594 = vmul.f32 %v1573, %v1573
        %v1595 = vmul.f32 %v1574, %v1574
        %v1596 = vmul.f32 %v1575, %v1575
        %v1597 = vadd.f32 %v1589, %v1590
        %v1598 = vadd.f32 %v1597, %v1591
        %v1599 = vadd.f32 %v1598, %v1592
        %v1600 = vadd.f32 %v1599, %v1593
        %v1601 = vadd.f32 %v1600, %v1594
        %v1602 = vadd.f32 %v1601, %v1595
        %v1603 = vadd.f32 %v1602, %v1596
        %v1604 = vrot.slane %v1603, 4
        %v1605 = vadd.f32 %v1603, %v1604
        %v1606 = vrot.slane %v1605, 2
        %v1607 = vadd.f32 %v1605, %v1606
        %v1608 = vrot.slane %v1607, 1
        %v1609 = vadd.f32 %v1607, %v1608
        %vm1610 = vcmask 1040384
        %v1611 = vsel %vm1610, %v1588, %v1609
        %1612 = vmatprep.subr.mxu0 0.0
        %1613 = vmatpush1.msra.mxu0 %v393
        %1614 = vmatprep.subr.mxu0 0.0
        %1615 = vmatpush1.msra.mxu0 %v394
        %1616 = vmatprep.subr.mxu0 0.0
        %1617 = vmatpush1.msra.mxu0 %v395
        %1618 = vmatprep.subr.mxu0 0.0
        %1619 = vmatpush1.msra.mxu0 %v396
        %1620 = vmatprep.subr.mxu0 0.0
        %1621 = vmatpush1.msra.mxu0 %v397
        %1622 = vmatprep.subr.mxu0 0.0
        %1623 = vmatpush1.msra.mxu0 %v398
        %1624 = vmatprep.subr.mxu0 0.0
        %1625 = vmatpush1.msra.mxu0 %v399
        %1626 = vmatprep.subr.mxu0 0.0
        %1627 = vmatpush1.msra.mxu0 %v400
        %1628 = vmatprep.subr.mxu0 0.0
        %1629 = vmatpush1.msra.mxu0 %v401
        %1630 = vmatprep.subr.mxu0 0.0
        %1631 = vmatpush1.msra.mxu0 %v402
        %1632 = vmatprep.subr.mxu0 0.0
        %1633 = vmatpush1.msra.mxu0 %v403
        %1634 = vmatprep.subr.mxu0 0.0
        %1635 = vmatpush1.msra.mxu0 %v404
        %1636 = vmatprep.subr.mxu0 0.0
        %1637 = vmatpush1.msra.mxu0 %v405
        %1638 = vmatprep.subr.mxu0 0.0
        %1639 = vmatpush1.msra.mxu0 %v406
        %1640 = vmatprep.subr.mxu0 0.0
        %1641 = vmatpush1.msra.mxu0 %v407
        %1642 = vmatprep.subr.mxu0 0.0
        %1643 = vmatpush1.msra.mxu0 %v408
        %1644 = vmatprep.subr.mxu0 0.0
        %1645 = vmatpush1.msra.mxu0 0.0
        %1646 = vmatprep.subr.mxu0 0.0
        %1647 = vmatpush1.msra.mxu0 0.0
        %1648 = vmatprep.subr.mxu0 0.0
        %1649 = vmatpush1.msra.mxu0 0.0
        %1650 = vmatprep.subr.mxu0 0.0
        %1651 = vmatpush1.msra.mxu0 0.0
        %1652 = vmatprep.subr.mxu0 0.0
        %1653 = vmatpush1.msra.mxu0 0.0
        %1654 = vmatprep.subr.mxu0 0.0
        %1655 = vmatpush1.msra.mxu0 0.0
        %1656 = vmatprep.subr.mxu0 0.0
        %1657 = vmatpush1.msra.mxu0 0.0
        %1658 = vmatprep.subr.mxu0 0.0
        %1659 = vmatpush1.msra.mxu0 0.0
        %1660 = vmatprep.subr.mxu0 0.0
        %1661 = vmatpush1.msra.mxu0 0.0
        %1662 = vmatprep.subr.mxu0 0.0
        %1663 = vmatpush1.msra.mxu0 0.0
        %1664 = vmatprep.subr.mxu0 0.0
        %1665 = vmatpush1.msra.mxu0 0.0
        %1666 = vmatprep.subr.mxu0 0.0
        %1667 = vmatpush1.msra.mxu0 0.0
        %1668 = vmatprep.subr.mxu0 0.0
        %1669 = vmatpush1.msra.mxu0 0.0
        %1670 = vmatprep.subr.mxu0 0.0
        %1671 = vmatpush1.msra.mxu0 0.0
        %1672 = vmatprep.subr.mxu0 0.0
        %1673 = vmatpush1.msra.mxu0 0.0
        %1674 = vmatprep.subr.mxu0 0.0
        %1675 = vmatpush1.msra.mxu0 0.0
        %1676 = vmatprep.mubr.f32.mxu0 0.0
        %1677 = vmatmul.mubr.f32.gmra.mrb[0].mxu0 %v1611
        %v1678 = vpop.f32.mrb[0].mxu0
        %v1679 = vadd.f32 0.0, %v1678
        %v1680 = vpop.f32.mrb[0].mxu0
        %1681 = vdwg.mxu0
        %v1682 = vmul.f32 %v1679, 0.00048828125
        %v1683 = vmul.f32 %v1682, %v1682
        %v1685 = vrot.slane %v1683, 7
        %v1687 = vsub.f32 %v1682, %v1685
        %v1688 = vmax.f32 %v1687, 0.0
        %v1689 = vadd.f32 %v1688, 1e-05
        %v1690 = vrsqrt.pop %v1689
        %v1691 = vsel %vm1610, %v1682, %v1690
        %vm1692 = vcmask 31744
        %v1694 = vsel %vm1692, %v1691, 0
        %vm1696 = vcmask 1043456
        %v1698 = vsel %vm1696, %v409, 0
        %1700 = vmatprep.subr.mxu0 0.0
        %1701 = vmatpush1.msra.mxu0 %v1698
        %1702 = vmatprep.subr.mxu0 0.0
        %1703 = vmatpush1.msra.mxu0 0.0
        %1704 = vmatprep.subr.mxu0 0.0
        %1705 = vmatpush1.msra.mxu0 0.0
        %1706 = vmatprep.subr.mxu0 0.0
        %1707 = vmatpush1.msra.mxu0 0.0
        %1708 = vmatprep.subr.mxu0 0.0
        %1709 = vmatpush1.msra.mxu0 0.0
        %1710 = vmatprep.subr.mxu0 0.0
        %1711 = vmatpush1.msra.mxu0 0.0
        %1712 = vmatprep.subr.mxu0 0.0
        %1713 = vmatpush1.msra.mxu0 0.0
        %1714 = vmatprep.subr.mxu0 0.0
        %1715 = vmatpush1.msra.mxu0 0.0
        %1716 = vmatprep.subr.mxu0 0.0
        %1717 = vmatpush1.msra.mxu0 0.0
        %1718 = vmatprep.subr.mxu0 0.0
        %1719 = vmatpush1.msra.mxu0 0.0
        %1720 = vmatprep.subr.mxu0 0.0
        %1721 = vmatpush1.msra.mxu0 0.0
        %1722 = vmatprep.subr.mxu0 0.0
        %1723 = vmatpush1.msra.mxu0 0.0
        %1724 = vmatprep.subr.mxu0 0.0
        %1725 = vmatpush1.msra.mxu0 0.0
        %1726 = vmatprep.subr.mxu0 0.0
        %1727 = vmatpush1.msra.mxu0 0.0
        %1728 = vmatprep.subr.mxu0 0.0
        %1729 = vmatpush1.msra.mxu0 0.0
        %1730 = vmatprep.subr.mxu0 0.0
        %1731 = vmatpush1.msra.mxu0 0.0
        %1732 = vmatprep.subr.mxu0 0.0
        %1733 = vmatpush1.msra.mxu0 0.0
        %1734 = vmatprep.subr.mxu0 0.0
        %1735 = vmatpush1.msra.mxu0 0.0
        %1736 = vmatprep.subr.mxu0 0.0
        %1737 = vmatpush1.msra.mxu0 0.0
        %1738 = vmatprep.subr.mxu0 0.0
        %1739 = vmatpush1.msra.mxu0 0.0
        %1740 = vmatprep.subr.mxu0 0.0
        %1741 = vmatpush1.msra.mxu0 0.0
        %1742 = vmatprep.subr.mxu0 0.0
        %1743 = vmatpush1.msra.mxu0 0.0
        %1744 = vmatprep.subr.mxu0 0.0
        %1745 = vmatpush1.msra.mxu0 0.0
        %1746 = vmatprep.subr.mxu0 0.0
        %1747 = vmatpush1.msra.mxu0 0.0
        %1748 = vmatprep.subr.mxu0 0.0
        %1749 = vmatpush1.msra.mxu0 0.0
        %1750 = vmatprep.subr.mxu0 0.0
        %1751 = vmatpush1.msra.mxu0 0.0
        %1752 = vmatprep.subr.mxu0 0.0
        %1753 = vmatpush1.msra.mxu0 0.0
        %1754 = vmatprep.subr.mxu0 0.0
        %1755 = vmatpush1.msra.mxu0 0.0
        %1756 = vmatprep.subr.mxu0 0.0
        %1757 = vmatpush1.msra.mxu0 0.0
        %1758 = vmatprep.subr.mxu0 0.0
        %1759 = vmatpush1.msra.mxu0 0.0
        %1760 = vmatprep.subr.mxu0 0.0
        %1761 = vmatpush1.msra.mxu0 0.0
        %1762 = vmatprep.subr.mxu0 0.0
        %1763 = vmatpush1.msra.mxu0 0.0
        %1764 = vmatprep.mubr.f32.mxu0 0.0
        %1765 = vmatmul.mubr.f32.gmra.mrb[0].mxu0 %v1694
        %v1766 = vpop.f32.mrb[0].mxu0
        %v1767 = vadd.f32 0.0, %v1766
        %v1768 = vpop.f32.mrb[0].mxu0
        %1769 = vdwg.mxu0
        %v1770 = vlaneseq
        %v1771 = vshrl.u32 %v1770, 7
        %v1772 = vsub.s32 0, %v1771
        %v1773 = vrot.slane %v1767, %v1772
        %v1774 = vsub.f32 %v1568, %v1773
        %v1775 = vsub.f32 %v1569, %v1773
        %v1776 = vsub.f32 %v1570, %v1773
        %v1777 = vsub.f32 %v1571, %v1773
        %v1778 = vsub.f32 %v1572, %v1773
        %v1779 = vsub.f32 %v1573, %v1773
        %v1780 = vsub.f32 %v1574, %v1773
        %v1781 = vsub.f32 %v1575, %v1773
        %v1782 = vlaneseq
        %v1783 = vshrl.u32 %v1782, 7
        %v1784 = vsub.s32 1, %v1783
        %v1785 = vrot.slane %v1767, %v1784
        %v1786 = vmul.f32 %v1774, %v1785
        %v1787 = vmul.f32 %v1775, %v1785
        %v1788 = vmul.f32 %v1776, %v1785
        %v1789 = vmul.f32 %v1777, %v1785
        %v1790 = vmul.f32 %v1778, %v1785
        %v1791 = vmul.f32 %v1779, %v1785
        %v1792 = vmul.f32 %v1780, %v1785
        %v1793 = vmul.f32 %v1781, %v1785
        %v1794 = vlaneseq
        %v1795 = vshrl.u32 %v1794, 7
        %v1796 = vsub.s32 1, %v1795
        %v1797 = vrot.slane %v392, %v1796
        %v1798 = vmul.f32 %v1786, %v1797
        %v1799 = vmul.f32 %v1787, %v1797
        %v1800 = vmul.f32 %v1788, %v1797
        %v1801 = vmul.f32 %v1789, %v1797
        %v1802 = vmul.f32 %v1790, %v1797
        %v1803 = vmul.f32 %v1791, %v1797
        %v1804 = vmul.f32 %v1792, %v1797
        %v1805 = vmul.f32 %v1793, %v1797
        %v1806 = vlaneseq
        %v1807 = vshrl.u32 %v1806, 7
        %v1808 = vsub.s32 2, %v1807
        %v1809 = vrot.slane %v392, %v1808
        %v1810 = vadd.f32 %v1798, %v1809
        %v1811 = vadd.f32 %v1799, %v1809
        %v1812 = vadd.f32 %v1800, %v1809
        %v1813 = vadd.f32 %v1801, %v1809
        %v1814 = vadd.f32 %v1802, %v1809
        %v1815 = vadd.f32 %v1803, %v1809
        %v1816 = vadd.f32 %v1804, %v1809
        %v1817 = vadd.f32 %v1805, %v1809
        %v1818 = vmax.f32 %v1810, 0.0
        %v1819 = vmax.f32 %v1811, 0.0
        %v1820 = vmax.f32 %v1812, 0.0
        %v1821 = vmax.f32 %v1813, 0.0
        %v1822 = vmax.f32 %v1814, 0.0
        %v1823 = vmax.f32 %v1815, 0.0
        %v1824 = vmax.f32 %v1816, 0.0
        %v1825 = vmax.f32 %v1817, 0.0
        %s1826 = scalar_lea.vmem [#allocation3], 16
        %1827 = vst [vmem:[%s1826 + $0x1] sm:$0xff] %v1818
        %1828 = vst [vmem:[%s1826 + $0x11] sm:$0xff] %v1819
        %1829 = vst [vmem:[%s1826 + $0x21] sm:$0xff] %v1820
        %1830 = vst [vmem:[%s1826 + $0x31] sm:$0xff] %v1821
        %1831 = vst [vmem:[%s1826 + $0x41] sm:$0xff] %v1822
        %1832 = vst [vmem:[%s1826 + $0x51] sm:$0xff] %v1823
        %1833 = vst [vmem:[%s1826 + $0x61] sm:$0xff] %v1824
        %1834 = vst [vmem:[%s1826 + $0x71] sm:$0xff] %v1825
        %v1835 = vld [vmem:[#allocation3] sm:$0xff]
        %v1836 = vld [vmem:[#allocation3 + $0x10] sm:$0xff]
        %v1837 = vld [vmem:[#allocation3 + $0x20] sm:$0xff]
        %v1838 = vld [vmem:[#allocation3 + $0x30] sm:$0xff]
        %v1839 = vld [vmem:[#allocation3 + $0x40] sm:$0xff]
        %v1840 = vld [vmem:[#allocation3 + $0x50] sm:$0xff]
        %v1841 = vld [vmem:[#allocation3 + $0x60] sm:$0xff]
        %v1842 = vld [vmem:[#allocation3 + $0x70] sm:$0xff]
        %v1843 = vpack.c.bf16 %v1836, %v1835
        %v1844 = vpack.c.bf16 %v1838, %v1837
        %v1845 = vpack.c.bf16 %v1840, %v1839
        %v1846 = vpack.c.bf16 %v1842, %v1841
        %v1847 = vld [vmem:[#allocation7] sm:$0xf]
        %v1848 = vld [vmem:[#allocation7 + $0x4] sm:$0xf]
        %v1849 = vld [vmem:[#allocation7 + $0x8] sm:$0xf]
        %v1850 = vld [vmem:[#allocation7 + $0xc] sm:$0xf]
        %v1851 = vld [vmem:[#allocation7 + $0x10] sm:$0xf]
        %v1852 = vld [vmem:[#allocation7 + $0x14] sm:$0xf]
        %v1853 = vld [vmem:[#allocation7 + $0x18] sm:$0xf]
        %v1854 = vld [vmem:[#allocation7 + $0x1c] sm:$0xf]
        %v1855 = vld [vmem:[#allocation7 + $0x20] sm:$0xf]
        %v1856 = vld [vmem:[#allocation7 + $0x24] sm:$0xf]
        %v1857 = vld [vmem:[#allocation7 + $0x28] sm:$0xf]
        %v1858 = vld [vmem:[#allocation7 + $0x2c] sm:$0xf]
        %v1859 = vld [vmem:[#allocation7 + $0x30] sm:$0xf]
        %v1860 = vld [vmem:[#allocation7 + $0x34] sm:$0xf]
        %v1861 = vld [vmem:[#allocation7 + $0x38] sm:$0xf]
        %v1862 = vld [vmem:[#allocation7 + $0x3c] sm:$0xf]
        %v1863 = vld [vmem:[#allocation3 + $0x1] sm:$0xff]
        %v1864 = vld [vmem:[#allocation3 + $0x11] sm:$0xff]
        %v1865 = vld [vmem:[#allocation3 + $0x21] sm:$0xff]
        %v1866 = vld [vmem:[#allocation3 + $0x31] sm:$0xff]
        %v1867 = vld [vmem:[#allocation3 + $0x41] sm:$0xff]
        %v1868 = vld [vmem:[#allocation3 + $0x51] sm:$0xff]
        %v1869 = vld [vmem:[#allocation3 + $0x61] sm:$0xff]
        %v1870 = vld [vmem:[#allocation3 + $0x71] sm:$0xff]
        %v1871 = vpack.c.bf16 %v1864, %v1863
        %v1872 = vpack.c.bf16 %v1866, %v1865
        %v1873 = vpack.c.bf16 %v1868, %v1867
        %v1874 = vpack.c.bf16 %v1870, %v1869
        %s1875 = scalar_lea.vmem [#allocation7], 64
        %v1876 = vld [vmem:[%s1875] sm:$0xf]
        %v1877 = vld [vmem:[%s1875 + $0x4] sm:$0xf]
        %v1878 = vld [vmem:[%s1875 + $0x8] sm:$0xf]
        %v1879 = vld [vmem:[%s1875 + $0xc] sm:$0xf]
        %v1880 = vld [vmem:[%s1875 + $0x10] sm:$0xf]
        %v1881 = vld [vmem:[%s1875 + $0x14] sm:$0xf]
        %v1882 = vld [vmem:[%s1875 + $0x18] sm:$0xf]
        %v1883 = vld [vmem:[%s1875 + $0x1c] sm:$0xf]
        %v1884 = vld [vmem:[%s1875 + $0x20] sm:$0xf]
        %v1885 = vld [vmem:[%s1875 + $0x24] sm:$0xf]
        %v1886 = vld [vmem:[%s1875 + $0x28] sm:$0xf]
        %v1887 = vld [vmem:[%s1875 + $0x2c] sm:$0xf]
        %v1888 = vld [vmem:[%s1875 + $0x30] sm:$0xf]
        %v1889 = vld [vmem:[%s1875 + $0x34] sm:$0xf]
        %v1890 = vld [vmem:[%s1875 + $0x38] sm:$0xf]
        %v1891 = vld [vmem:[%s1875 + $0x3c] sm:$0xf]
        %v1908 = vunpack.c.l.b16 %v1876
        %v1909 = vunpack.c.l.b16 %v1877
        %v1910 = vunpack.c.l.b16 %v1878
        %v1911 = vunpack.c.l.b16 %v1879
        %v1912 = vunpack.c.l.b16 %v1880
        %v1913 = vunpack.c.l.b16 %v1881
        %v1914 = vunpack.c.l.b16 %v1882
        %v1915 = vunpack.c.l.b16 %v1883
        %v1916 = vunpack.c.l.b16 %v1884
        %v1917 = vunpack.c.l.b16 %v1885
        %v1918 = vunpack.c.l.b16 %v1886
        %v1919 = vunpack.c.l.b16 %v1887
        %v1920 = vunpack.c.l.b16 %v1888
        %v1921 = vunpack.c.l.b16 %v1889
        %v1922 = vunpack.c.l.b16 %v1890
        %v1923 = vunpack.c.l.b16 %v1891
        %v1924 = vpack.c.b16 %v1909, %v1908
        %v1925 = vpack.c.b16 %v1911, %v1910
        %v1926 = vpack.c.b16 %v1913, %v1912
        %v1927 = vpack.c.b16 %v1915, %v1914
        %v1928 = vpack.c.b16 %v1917, %v1916
        %v1929 = vpack.c.b16 %v1919, %v1918
        %v1930 = vpack.c.b16 %v1921, %v1920
        %v1931 = vpack.c.b16 %v1923, %v1922
        %1940 = vmatprep.subr.bf16.mxu0 0
        %1941 = vmatpush1.bf16.msra.mxu0 %v1924
        %1942 = vmatprep.subr.bf16.mxu0 0
        %1943 = vmatpush1.bf16.msra.mxu0 %v1925
        %1944 = vmatprep.subr.bf16.mxu0 0
        %1945 = vmatpush1.bf16.msra.mxu0 %v1926
        %1946 = vmatprep.subr.bf16.mxu0 0
        %1947 = vmatpush1.bf16.msra.mxu0 %v1927
        %1948 = vmatprep.subr.bf16.mxu0 0
        %1949 = vmatpush1.bf16.msra.mxu0 %v1928
        %1950 = vmatprep.subr.bf16.mxu0 0
        %1951 = vmatpush1.bf16.msra.mxu0 %v1929
        %1952 = vmatprep.subr.bf16.mxu0 0
        %1953 = vmatpush1.bf16.msra.mxu0 %v1930
        %1954 = vmatprep.subr.bf16.mxu0 0
        %1955 = vmatpush1.bf16.msra.mxu0 %v1931
        %1956 = vmatprep.subr.bf16.mxu0 0
        %1957 = vmatpush1.bf16.msra.mxu0 0
        %1958 = vmatprep.subr.bf16.mxu0 0
        %1959 = vmatpush1.bf16.msra.mxu0 0
        %1960 = vmatprep.subr.bf16.mxu0 0
        %1961 = vmatpush1.bf16.msra.mxu0 0
        %1962 = vmatprep.subr.bf16.mxu0 0
        %1963 = vmatpush1.bf16.msra.mxu0 0
        %1964 = vmatprep.subr.bf16.mxu0 0
        %1965 = vmatpush1.bf16.msra.mxu0 0
        %1966 = vmatprep.subr.bf16.mxu0 0
        %1967 = vmatpush1.bf16.msra.mxu0 0
        %1968 = vmatprep.subr.bf16.mxu0 0
        %1969 = vmatpush1.bf16.msra.mxu0 0
        %1970 = vmatprep.subr.bf16.mxu0 0
        %1971 = vmatpush1.bf16.msra.mxu0 0
        %1972 = vmatprep.mubr.bf16.mxu0 0
        %1973 = vmatmul.mubr.bf16.gmra.mrb[0].mxu0 %v1871
        %v1974 = vpop.f32.mrb[0].mxu0
        %v1975 = vadd.f32 0.0, %v1974
        %v1976 = vpop.f32.mrb[0].mxu0
        %v1977 = vpop.f32.mrb[0].mxu0
        %v1978 = vadd.f32 0.0, %v1977
        %v1979 = vpop.f32.mrb[0].mxu0
        %1980 = vmatprep.mubr.bf16.mxu0 0
        %1981 = vmatmul.mubr.bf16.gmra.mrb[0].mxu0 %v1872
        %v1982 = vpop.f32.mrb[0].mxu0
        %v1983 = vadd.f32 0.0, %v1982
        %v1984 = vpop.f32.mrb[0].mxu0
        %v1985 = vpop.f32.mrb[0].mxu0
        %v1986 = vadd.f32 0.0, %v1985
        %v1987 = vpop.f32.mrb[0].mxu0
        %1988 = vmatprep.mubr.bf16.mxu0 0
        %1989 = vmatmul.mubr.bf16.gmra.mrb[0].mxu0 %v1873
        %v1990 = vpop.f32.mrb[0].mxu0
        %v1991 = vadd.f32 0.0, %v1990
        %v1992 = vpop.f32.mrb[0].mxu0
        %v1993 = vpop.f32.mrb[0].mxu0
        %v1994 = vadd.f32 0.0, %v1993
        %v1995 = vpop.f32.mrb[0].mxu0
        %1996 = vmatprep.mubr.bf16.mxu0 0
        %1997 = vmatmul.mubr.bf16.gmra.mrb[0].mxu0 %v1874
        %v1998 = vpop.f32.mrb[0].mxu0
        %v1999 = vadd.f32 0.0, %v1998
        %v2000 = vpop.f32.mrb[0].mxu0
        %v2001 = vpop.f32.mrb[0].mxu0
        %v2002 = vadd.f32 0.0, %v2001
        %v2003 = vpop.f32.mrb[0].mxu0
        %2004 = vdwg.mxu0
        %v2021 = vunpack.c.l.b16 %v1847
        %v2022 = vunpack.c.l.b16 %v1848
        %v2023 = vunpack.c.l.b16 %v1849
        %v2024 = vunpack.c.l.b16 %v1850
        %v2025 = vunpack.c.l.b16 %v1851
        %v2026 = vunpack.c.l.b16 %v1852
        %v2027 = vunpack.c.l.b16 %v1853
        %v2028 = vunpack.c.l.b16 %v1854
        %v2029 = vunpack.c.l.b16 %v1855
        %v2030 = vunpack.c.l.b16 %v1856
        %v2031 = vunpack.c.l.b16 %v1857
        %v2032 = vunpack.c.l.b16 %v1858
        %v2033 = vunpack.c.l.b16 %v1859
        %v2034 = vunpack.c.l.b16 %v1860
        %v2035 = vunpack.c.l.b16 %v1861
        %v2036 = vunpack.c.l.b16 %v1862
        %v2037 = vpack.c.b16 %v2022, %v2021
        %v2038 = vpack.c.b16 %v2024, %v2023
        %v2039 = vpack.c.b16 %v2026, %v2025
        %v2040 = vpack.c.b16 %v2028, %v2027
        %v2041 = vpack.c.b16 %v2030, %v2029
        %v2042 = vpack.c.b16 %v2032, %v2031
        %v2043 = vpack.c.b16 %v2034, %v2033
        %v2044 = vpack.c.b16 %v2036, %v2035
        %2053 = vmatprep.subr.bf16.mxu0 0
        %2054 = vmatpush1.bf16.msra.mxu0 %v2037
        %2055 = vmatprep.subr.bf16.mxu0 0
        %2056 = vmatpush1.bf16.msra.mxu0 %v2038
        %2057 = vmatprep.subr.bf16.mxu0 0
        %2058 = vmatpush1.bf16.msra.mxu0 %v2039
        %2059 = vmatprep.subr.bf16.mxu0 0
        %2060 = vmatpush1.bf16.msra.mxu0 %v2040
        %2061 = vmatprep.subr.bf16.mxu0 0
        %2062 = vmatpush1.bf16.msra.mxu0 %v2041
        %2063 = vmatprep.subr.bf16.mxu0 0
        %2064 = vmatpush1.bf16.msra.mxu0 %v2042
        %2065 = vmatprep.subr.bf16.mxu0 0
        %2066 = vmatpush1.bf16.msra.mxu0 %v2043
        %2067 = vmatprep.subr.bf16.mxu0 0
        %2068 = vmatpush1.bf16.msra.mxu0 %v2044
        %2069 = vmatprep.subr.bf16.mxu0 0
        %2070 = vmatpush1.bf16.msra.mxu0 0
        %2071 = vmatprep.subr.bf16.mxu0 0
        %2072 = vmatpush1.bf16.msra.mxu0 0
        %2073 = vmatprep.subr.bf16.mxu0 0
        %2074 = vmatpush1.bf16.msra.mxu0 0
        %2075 = vmatprep.subr.bf16.mxu0 0
        %2076 = vmatpush1.bf16.msra.mxu0 0
        %2077 = vmatprep.subr.bf16.mxu0 0
        %2078 = vmatpush1.bf16.msra.mxu0 0
        %2079 = vmatprep.subr.bf16.mxu0 0
        %2080 = vmatpush1.bf16.msra.mxu0 0
        %2081 = vmatprep.subr.bf16.mxu0 0
        %2082 = vmatpush1.bf16.msra.mxu0 0
        %2083 = vmatprep.subr.bf16.mxu0 0
        %2084 = vmatpush1.bf16.msra.mxu0 0
        %2085 = vmatprep.mubr.bf16.mxu0 0
        %2086 = vmatmul.mubr.bf16.gmra.mrb[0].mxu0 %v1843
        %v2087 = vpop.f32.mrb[0].mxu0
        %v2088 = vadd.f32 %v1975, %v2087
        %v2089 = vpop.f32.mrb[0].mxu0
        %v2090 = vpop.f32.mrb[0].mxu0
        %v2091 = vadd.f32 %v1978, %v2090
        %v2092 = vpop.f32.mrb[0].mxu0
        %2093 = vmatprep.mubr.bf16.mxu0 0
        %2094 = vmatmul.mubr.bf16.gmra.mrb[0].mxu0 %v1844
        %v2095 = vpop.f32.mrb[0].mxu0
        %v2096 = vadd.f32 %v1983, %v2095
        %v2097 = vpop.f32.mrb[0].mxu0
        %v2098 = vpop.f32.mrb[0].mxu0
        %v2099 = vadd.f32 %v1986, %v2098
        %v2100 = vpop.f32.mrb[0].mxu0
        %2101 = vmatprep.mubr.bf16.mxu0 0
        %2102 = vmatmul.mubr.bf16.gmra.mrb[0].mxu0 %v1845
        %v2103 = vpop.f32.mrb[0].mxu0
        %v2104 = vadd.f32 %v1991, %v2103
        %v2105 = vpop.f32.mrb[0].mxu0
        %v2106 = vpop.f32.mrb[0].mxu0
        %v2107 = vadd.f32 %v1994, %v2106
        %v2108 = vpop.f32.mrb[0].mxu0
        %2109 = vmatprep.mubr.bf16.mxu0 0
        %2110 = vmatmul.mubr.bf16.gmra.mrb[0].mxu0 %v1846
        %v2111 = vpop.f32.mrb[0].mxu0
        %v2112 = vadd.f32 %v1999, %v2111
        %v2113 = vpop.f32.mrb[0].mxu0
        %v2114 = vpop.f32.mrb[0].mxu0
        %v2115 = vadd.f32 %v2002, %v2114
        %v2116 = vpop.f32.mrb[0].mxu0
        %2117 = vdwg.mxu0
        %v2118 = vld [vmem:[#allocation3 + $0x2] sm:$0xff]
        %v2119 = vld [vmem:[#allocation3 + $0x12] sm:$0xff]
        %v2120 = vld [vmem:[#allocation3 + $0x22] sm:$0xff]
        %v2121 = vld [vmem:[#allocation3 + $0x32] sm:$0xff]
        %v2122 = vld [vmem:[#allocation3 + $0x42] sm:$0xff]
        %v2123 = vld [vmem:[#allocation3 + $0x52] sm:$0xff]
        %v2124 = vld [vmem:[#allocation3 + $0x62] sm:$0xff]
        %v2125 = vld [vmem:[#allocation3 + $0x72] sm:$0xff]
        %v2126 = vpack.c.bf16 %v2119, %v2118
        %v2127 = vpack.c.bf16 %v2121, %v2120
        %v2128 = vpack.c.bf16 %v2123, %v2122
        %v2129 = vpack.c.bf16 %v2125, %v2124
        %s2130 = scalar_lea.vmem [#allocation7], 128
        %v2131 = vld [vmem:[%s2130] sm:$0xf]
        %v2132 = vld [vmem:[%s2130 + $0x4] sm:$0xf]
        %v2133 = vld [vmem:[%s2130 + $0x8] sm:$0xf]
        %v2134 = vld [vmem:[%s2130 + $0xc] sm:$0xf]
        %v2135 = vld [vmem:[%s2130 + $0x10] sm:$0xf]
        %v2136 = vld [vmem:[%s2130 + $0x14] sm:$0xf]
        %v2137 = vld [vmem:[%s2130 + $0x18] sm:$0xf]
        %v2138 = vld [vmem:[%s2130 + $0x1c] sm:$0xf]
        %v2139 = vld [vmem:[%s2130 + $0x20] sm:$0xf]
        %v2140 = vld [vmem:[%s2130 + $0x24] sm:$0xf]
        %v2141 = vld [vmem:[%s2130 + $0x28] sm:$0xf]
        %v2142 = vld [vmem:[%s2130 + $0x2c] sm:$0xf]
        %v2143 = vld [vmem:[%s2130 + $0x30] sm:$0xf]
        %v2144 = vld [vmem:[%s2130 + $0x34] sm:$0xf]
        %v2145 = vld [vmem:[%s2130 + $0x38] sm:$0xf]
        %v2146 = vld [vmem:[%s2130 + $0x3c] sm:$0xf]
        %v2163 = vunpack.c.l.b16 %v2131
        %v2164 = vunpack.c.l.b16 %v2132
        %v2165 = vunpack.c.l.b16 %v2133
        %v2166 = vunpack.c.l.b16 %v2134
        %v2167 = vunpack.c.l.b16 %v2135
        %v2168 = vunpack.c.l.b16 %v2136
        %v2169 = vunpack.c.l.b16 %v2137
        %v2170 = vunpack.c.l.b16 %v2138
        %v2171 = vunpack.c.l.b16 %v2139
        %v2172 = vunpack.c.l.b16 %v2140
        %v2173 = vunpack.c.l.b16 %v2141
        %v2174 = vunpack.c.l.b16 %v2142
        %v2175 = vunpack.c.l.b16 %v2143
        %v2176 = vunpack.c.l.b16 %v2144
        %v2177 = vunpack.c.l.b16 %v2145
        %v2178 = vunpack.c.l.b16 %v2146
        %v2179 = vpack.c.b16 %v2164, %v2163
        %v2180 = vpack.c.b16 %v2166, %v2165
        %v2181 = vpack.c.b16 %v2168, %v2167
        %v2182 = vpack.c.b16 %v2170, %v2169
        %v2183 = vpack.c.b16 %v2172, %v2171
        %v2184 = vpack.c.b16 %v2174, %v2173
        %v2185 = vpack.c.b16 %v2176, %v2175
        %v2186 = vpack.c.b16 %v2178, %v2177
        %2195 = vmatprep.subr.bf16.mxu0 0
        %2196 = vmatpush1.bf16.msra.mxu0 %v2179
        %2197 = vmatprep.subr.bf16.mxu0 0
        %2198 = vmatpush1.bf16.msra.mxu0 %v2180
        %2199 = vmatprep.subr.bf16.mxu0 0
        %2200 = vmatpush1.bf16.msra.mxu0 %v2181
        %2201 = vmatprep.subr.bf16.mxu0 0
        %2202 = vmatpush1.bf16.msra.mxu0 %v2182
        %2203 = vmatprep.subr.bf16.mxu0 0
        %2204 = vmatpush1.bf16.msra.mxu0 %v2183
        %2205 = vmatprep.subr.bf16.mxu0 0
        %2206 = vmatpush1.bf16.msra.mxu0 %v2184
        %2207 = vmatprep.subr.bf16.mxu0 0
        %2208 = vmatpush1.bf16.msra.mxu0 %v2185
        %2209 = vmatprep.subr.bf16.mxu0 0
        %2210 = vmatpush1.bf16.msra.mxu0 %v2186
        %2211 = vmatprep.subr.bf16.mxu0 0
        %2212 = vmatpush1.bf16.msra.mxu0 0
        %2213 = vmatprep.subr.bf16.mxu0 0
        %2214 = vmatpush1.bf16.msra.mxu0 0
        %2215 = vmatprep.subr.bf16.mxu0 0
        %2216 = vmatpush1.bf16.msra.mxu0 0
        %2217 = vmatprep.subr.bf16.mxu0 0
        %2218 = vmatpush1.bf16.msra.mxu0 0
        %2219 = vmatprep.subr.bf16.mxu0 0
        %2220 = vmatpush1.bf16.msra.mxu0 0
        %2221 = vmatprep.subr.bf16.mxu0 0
        %2222 = vmatpush1.bf16.msra.mxu0 0
        %2223 = vmatprep.subr.bf16.mxu0 0
        %2224 = vmatpush1.bf16.msra.mxu0 0
        %2225 = vmatprep.subr.bf16.mxu0 0
        %2226 = vmatpush1.bf16.msra.mxu0 0
        %2227 = vmatprep.mubr.bf16.mxu0 0
        %2228 = vmatmul.mubr.bf16.gmra.mrb[0].mxu0 %v2126
        %v2229 = vpop.f32.mrb[0].mxu0
        %v2230 = vadd.f32 0.0, %v2229
        %v2231 = vpop.f32.mrb[0].mxu0
        %v2232 = vpop.f32.mrb[0].mxu0
        %v2233 = vadd.f32 0.0, %v2232
        %v2234 = vpop.f32.mrb[0].mxu0
        %2235 = vmatprep.mubr.bf16.mxu0 0
        %2236 = vmatmul.mubr.bf16.gmra.mrb[0].mxu0 %v2127
        %v2237 = vpop.f32.mrb[0].mxu0
        %v2238 = vadd.f32 0.0, %v2237
        %v2239 = vpop.f32.mrb[0].mxu0
        %v2240 = vpop.f32.mrb[0].mxu0
        %v2241 = vadd.f32 0.0, %v2240
        %v2242 = vpop.f32.mrb[0].mxu0
        %2243 = vmatprep.mubr.bf16.mxu0 0
        %2244 = vmatmul.mubr.bf16.gmra.mrb[0].mxu0 %v2128
        %v2245 = vpop.f32.mrb[0].mxu0
        %v2246 = vadd.f32 0.0, %v2245
        %v2247 = vpop.f32.mrb[0].mxu0
        %v2248 = vpop.f32.mrb[0].mxu0
        %v2249 = vadd.f32 0.0, %v2248
        %v2250 = vpop.f32.mrb[0].mxu0
        %2251 = vmatprep.mubr.bf16.mxu0 0
        %2252 = vmatmul.mubr.bf16.gmra.mrb[0].mxu0 %v2129
        %v2253 = vpop.f32.mrb[0].mxu0
        %v2254 = vadd.f32 0.0, %v2253
        %v2255 = vpop.f32.mrb[0].mxu0
        %v2256 = vpop.f32.mrb[0].mxu0
        %v2257 = vadd.f32 0.0, %v2256
        %v2258 = vpop.f32.mrb[0].mxu0
        %2259 = vdwg.mxu0
        %v2260 = vadd.f32 %v2088, %v2230
        %v2261 = vadd.f32 %v2091, %v2233
        %v2262 = vadd.f32 %v2096, %v2238
        %v2263 = vadd.f32 %v2099, %v2241
        %v2264 = vadd.f32 %v2104, %v2246
        %v2265 = vadd.f32 %v2107, %v2249
        %v2266 = vadd.f32 %v2112, %v2254
        %v2267 = vadd.f32 %v2115, %v2257
        %v2268 = vld [vmem:[%s1826] sm:$0xff]
        %v2269 = vld [vmem:[%s1826 + $0x10] sm:$0xff]
        %v2270 = vld [vmem:[%s1826 + $0x20] sm:$0xff]
        %v2271 = vld [vmem:[%s1826 + $0x30] sm:$0xff]
        %v2272 = vld [vmem:[%s1826 + $0x40] sm:$0xff]
        %v2273 = vld [vmem:[%s1826 + $0x50] sm:$0xff]
        %v2274 = vld [vmem:[%s1826 + $0x60] sm:$0xff]
        %v2275 = vld [vmem:[%s1826 + $0x70] sm:$0xff]
        %v2276 = vpack.c.bf16 %v2269, %v2268
        %v2277 = vpack.c.bf16 %v2271, %v2270
        %v2278 = vpack.c.bf16 %v2273, %v2272
        %v2279 = vpack.c.bf16 %v2275, %v2274
        %s2280 = scalar_lea.vmem [#allocation7], 192
        %v2281 = vld [vmem:[%s2280] sm:$0xf]
        %v2282 = vld [vmem:[%s2280 + $0x4] sm:$0xf]
        %v2283 = vld [vmem:[%s2280 + $0x8] sm:$0xf]
        %v2284 = vld [vmem:[%s2280 + $0xc] sm:$0xf]
        %v2285 = vld [vmem:[%s2280 + $0x10] sm:$0xf]
        %v2286 = vld [vmem:[%s2280 + $0x14] sm:$0xf]
        %v2287 = vld [vmem:[%s2280 + $0x18] sm:$0xf]
        %v2288 = vld [vmem:[%s2280 + $0x1c] sm:$0xf]
        %v2289 = vld [vmem:[%s2280 + $0x20] sm:$0xf]
        %v2290 = vld [vmem:[%s2280 + $0x24] sm:$0xf]
        %v2291 = vld [vmem:[%s2280 + $0x28] sm:$0xf]
        %v2292 = vld [vmem:[%s2280 + $0x2c] sm:$0xf]
        %v2293 = vld [vmem:[%s2280 + $0x30] sm:$0xf]
        %v2294 = vld [vmem:[%s2280 + $0x34] sm:$0xf]
        %v2295 = vld [vmem:[%s2280 + $0x38] sm:$0xf]
        %v2296 = vld [vmem:[%s2280 + $0x3c] sm:$0xf]
        %v2313 = vunpack.c.l.b16 %v2281
        %v2314 = vunpack.c.l.b16 %v2282
        %v2315 = vunpack.c.l.b16 %v2283
        %v2316 = vunpack.c.l.b16 %v2284
        %v2317 = vunpack.c.l.b16 %v2285
        %v2318 = vunpack.c.l.b16 %v2286
        %v2319 = vunpack.c.l.b16 %v2287
        %v2320 = vunpack.c.l.b16 %v2288
        %v2321 = vunpack.c.l.b16 %v2289
        %v2322 = vunpack.c.l.b16 %v2290
        %v2323 = vunpack.c.l.b16 %v2291
        %v2324 = vunpack.c.l.b16 %v2292
        %v2325 = vunpack.c.l.b16 %v2293
        %v2326 = vunpack.c.l.b16 %v2294
        %v2327 = vunpack.c.l.b16 %v2295
        %v2328 = vunpack.c.l.b16 %v2296
        %v2329 = vpack.c.b16 %v2314, %v2313
        %v2330 = vpack.c.b16 %v2316, %v2315
        %v2331 = vpack.c.b16 %v2318, %v2317
        %v2332 = vpack.c.b16 %v2320, %v2319
        %v2333 = vpack.c.b16 %v2322, %v2321
        %v2334 = vpack.c.b16 %v2324, %v2323
        %v2335 = vpack.c.b16 %v2326, %v2325
        %v2336 = vpack.c.b16 %v2328, %v2327
        %2345 = vmatprep.subr.bf16.mxu0 0
        %2346 = vmatpush1.bf16.msra.mxu0 %v2329
        %2347 = vmatprep.subr.bf16.mxu0 0
        %2348 = vmatpush1.bf16.msra.mxu0 %v2330
        %2349 = vmatprep.subr.bf16.mxu0 0
        %2350 = vmatpush1.bf16.msra.mxu0 %v2331
        %2351 = vmatprep.subr.bf16.mxu0 0
        %2352 = vmatpush1.bf16.msra.mxu0 %v2332
        %2353 = vmatprep.subr.bf16.mxu0 0
        %2354 = vmatpush1.bf16.msra.mxu0 %v2333
        %2355 = vmatprep.subr.bf16.mxu0 0
        %2356 = vmatpush1.bf16.msra.mxu0 %v2334
        %2357 = vmatprep.subr.bf16.mxu0 0
        %2358 = vmatpush1.bf16.msra.mxu0 %v2335
        %2359 = vmatprep.subr.bf16.mxu0 0
        %2360 = vmatpush1.bf16.msra.mxu0 %v2336
        %2361 = vmatprep.subr.bf16.mxu0 0
        %2362 = vmatpush1.bf16.msra.mxu0 0
        %2363 = vmatprep.subr.bf16.mxu0 0
        %2364 = vmatpush1.bf16.msra.mxu0 0
        %2365 = vmatprep.subr.bf16.mxu0 0
        %2366 = vmatpush1.bf16.msra.mxu0 0
        %2367 = vmatprep.subr.bf16.mxu0 0
        %2368 = vmatpush1.bf16.msra.mxu0 0
        %2369 = vmatprep.subr.bf16.mxu0 0
        %2370 = vmatpush1.bf16.msra.mxu0 0
        %2371 = vmatprep.subr.bf16.mxu0 0
        %2372 = vmatpush1.bf16.msra.mxu0 0
        %2373 = vmatprep.subr.bf16.mxu0 0
        %2374 = vmatpush1.bf16.msra.mxu0 0
        %2375 = vmatprep.subr.bf16.mxu0 0
        %2376 = vmatpush1.bf16.msra.mxu0 0
        %2377 = vmatprep.mubr.bf16.mxu0 0
        %2378 = vmatmul.mubr.bf16.gmra.mrb[0].mxu0 %v2276
        %v2379 = vpop.f32.mrb[0].mxu0
        %v2380 = vadd.f32 0.0, %v2379
        %v2381 = vpop.f32.mrb[0].mxu0
        %v2382 = vpop.f32.mrb[0].mxu0
        %v2383 = vadd.f32 0.0, %v2382
        %v2384 = vpop.f32.mrb[0].mxu0
        %2385 = vmatprep.mubr.bf16.mxu0 0
        %2386 = vmatmul.mubr.bf16.gmra.mrb[0].mxu0 %v2277
        %v2387 = vpop.f32.mrb[0].mxu0
        %v2388 = vadd.f32 0.0, %v2387
        %v2389 = vpop.f32.mrb[0].mxu0
        %v2390 = vpop.f32.mrb[0].mxu0
        %v2391 = vadd.f32 0.0, %v2390
        %v2392 = vpop.f32.mrb[0].mxu0
        %2393 = vmatprep.mubr.bf16.mxu0 0
        %2394 = vmatmul.mubr.bf16.gmra.mrb[0].mxu0 %v2278
        %v2395 = vpop.f32.mrb[0].mxu0
        %v2396 = vadd.f32 0.0, %v2395
        %v2397 = vpop.f32.mrb[0].mxu0
        %v2398 = vpop.f32.mrb[0].mxu0
        %v2399 = vadd.f32 0.0, %v2398
        %v2400 = vpop.f32.mrb[0].mxu0
        %2401 = vmatprep.mubr.bf16.mxu0 0
        %2402 = vmatmul.mubr.bf16.gmra.mrb[0].mxu0 %v2279
        %v2403 = vpop.f32.mrb[0].mxu0
        %v2404 = vadd.f32 0.0, %v2403
        %v2405 = vpop.f32.mrb[0].mxu0
        %v2406 = vpop.f32.mrb[0].mxu0
        %v2407 = vadd.f32 0.0, %v2406
        %v2408 = vpop.f32.mrb[0].mxu0
        %2409 = vdwg.mxu0
        %v2410 = vadd.f32 %v2260, %v2380
        %v2411 = vadd.f32 %v2261, %v2383
        %v2412 = vadd.f32 %v2262, %v2388
        %v2413 = vadd.f32 %v2263, %v2391
        %v2414 = vadd.f32 %v2264, %v2396
        %v2415 = vadd.f32 %v2265, %v2399
        %v2416 = vadd.f32 %v2266, %v2404
        %v2417 = vadd.f32 %v2267, %v2407
        %v2418 = vld [vmem:[%s1826 + $0x1] sm:$0xff]
        %v2419 = vld [vmem:[%s1826 + $0x11] sm:$0xff]
        %v2420 = vld [vmem:[%s1826 + $0x21] sm:$0xff]
        %v2421 = vld [vmem:[%s1826 + $0x31] sm:$0xff]
        %v2422 = vld [vmem:[%s1826 + $0x41] sm:$0xff]
        %v2423 = vld [vmem:[%s1826 + $0x51] sm:$0xff]
        %v2424 = vld [vmem:[%s1826 + $0x61] sm:$0xff]
        %v2425 = vld [vmem:[%s1826 + $0x71] sm:$0xff]
        %v2426 = vpack.c.bf16 %v2419, %v2418
        %v2427 = vpack.c.bf16 %v2421, %v2420
        %v2428 = vpack.c.bf16 %v2423, %v2422
        %v2429 = vpack.c.bf16 %v2425, %v2424
        %s2430 = scalar_lea.vmem [#allocation7], 256
        %v2431 = vld [vmem:[%s2430] sm:$0xf]
        %v2432 = vld [vmem:[%s2430 + $0x4] sm:$0xf]
        %v2433 = vld [vmem:[%s2430 + $0x8] sm:$0xf]
        %v2434 = vld [vmem:[%s2430 + $0xc] sm:$0xf]
        %v2435 = vld [vmem:[%s2430 + $0x10] sm:$0xf]
        %v2436 = vld [vmem:[%s2430 + $0x14] sm:$0xf]
        %v2437 = vld [vmem:[%s2430 + $0x18] sm:$0xf]
        %v2438 = vld [vmem:[%s2430 + $0x1c] sm:$0xf]
        %v2439 = vld [vmem:[%s2430 + $0x20] sm:$0xf]
        %v2440 = vld [vmem:[%s2430 + $0x24] sm:$0xf]
        %v2441 = vld [vmem:[%s2430 + $0x28] sm:$0xf]
        %v2442 = vld [vmem:[%s2430 + $0x2c] sm:$0xf]
        %v2443 = vld [vmem:[%s2430 + $0x30] sm:$0xf]
        %v2444 = vld [vmem:[%s2430 + $0x34] sm:$0xf]
        %v2445 = vld [vmem:[%s2430 + $0x38] sm:$0xf]
        %v2446 = vld [vmem:[%s2430 + $0x3c] sm:$0xf]
        %v2463 = vunpack.c.l.b16 %v2431
        %v2464 = vunpack.c.l.b16 %v2432
        %v2465 = vunpack.c.l.b16 %v2433
        %v2466 = vunpack.c.l.b16 %v2434
        %v2467 = vunpack.c.l.b16 %v2435
        %v2468 = vunpack.c.l.b16 %v2436
        %v2469 = vunpack.c.l.b16 %v2437
        %v2470 = vunpack.c.l.b16 %v2438
        %v2471 = vunpack.c.l.b16 %v2439
        %v2472 = vunpack.c.l.b16 %v2440
        %v2473 = vunpack.c.l.b16 %v2441
        %v2474 = vunpack.c.l.b16 %v2442
        %v2475 = vunpack.c.l.b16 %v2443
        %v2476 = vunpack.c.l.b16 %v2444
        %v2477 = vunpack.c.l.b16 %v2445
        %v2478 = vunpack.c.l.b16 %v2446
        %v2479 = vpack.c.b16 %v2464, %v2463
        %v2480 = vpack.c.b16 %v2466, %v2465
        %v2481 = vpack.c.b16 %v2468, %v2467
        %v2482 = vpack.c.b16 %v2470, %v2469
        %v2483 = vpack.c.b16 %v2472, %v2471
        %v2484 = vpack.c.b16 %v2474, %v2473
        %v2485 = vpack.c.b16 %v2476, %v2475
        %v2486 = vpack.c.b16 %v2478, %v2477
        %2495 = vmatprep.subr.bf16.mxu0 0
        %2496 = vmatpush1.bf16.msra.mxu0 %v2479
        %2497 = vmatprep.subr.bf16.mxu0 0
        %2498 = vmatpush1.bf16.msra.mxu0 %v2480
        %2499 = vmatprep.subr.bf16.mxu0 0
        %2500 = vmatpush1.bf16.msra.mxu0 %v2481
        %2501 = vmatprep.subr.bf16.mxu0 0
        %2502 = vmatpush1.bf16.msra.mxu0 %v2482
        %2503 = vmatprep.subr.bf16.mxu0 0
        %2504 = vmatpush1.bf16.msra.mxu0 %v2483
        %2505 = vmatprep.subr.bf16.mxu0 0
        %2506 = vmatpush1.bf16.msra.mxu0 %v2484
        %2507 = vmatprep.subr.bf16.mxu0 0
        %2508 = vmatpush1.bf16.msra.mxu0 %v2485
        %2509 = vmatprep.subr.bf16.mxu0 0
        %2510 = vmatpush1.bf16.msra.mxu0 %v2486
        %2511 = vmatprep.subr.bf16.mxu0 0
        %2512 = vmatpush1.bf16.msra.mxu0 0
        %2513 = vmatprep.subr.bf16.mxu0 0
        %2514 = vmatpush1.bf16.msra.mxu0 0
        %2515 = vmatprep.subr.bf16.mxu0 0
        %2516 = vmatpush1.bf16.msra.mxu0 0
        %2517 = vmatprep.subr.bf16.mxu0 0
        %2518 = vmatpush1.bf16.msra.mxu0 0
        %2519 = vmatprep.subr.bf16.mxu0 0
        %2520 = vmatpush1.bf16.msra.mxu0 0
        %2521 = vmatprep.subr.bf16.mxu0 0
        %2522 = vmatpush1.bf16.msra.mxu0 0
        %2523 = vmatprep.subr.bf16.mxu0 0
        %2524 = vmatpush1.bf16.msra.mxu0 0
        %2525 = vmatprep.subr.bf16.mxu0 0
        %2526 = vmatpush1.bf16.msra.mxu0 0
        %2527 = vmatprep.mubr.bf16.mxu0 0
        %2528 = vmatmul.mubr.bf16.gmra.mrb[0].mxu0 %v2426
        %v2529 = vpop.f32.mrb[0].mxu0
        %v2530 = vadd.f32 0.0, %v2529
        %v2531 = vpop.f32.mrb[0].mxu0
        %v2532 = vpop.f32.mrb[0].mxu0
        %v2533 = vadd.f32 0.0, %v2532
        %v2534 = vpop.f32.mrb[0].mxu0
        %2535 = vmatprep.mubr.bf16.mxu0 0
        %2536 = vmatmul.mubr.bf16.gmra.mrb[0].mxu0 %v2427
        %v2537 = vpop.f32.mrb[0].mxu0
        %v2538 = vadd.f32 0.0, %v2537
        %v2539 = vpop.f32.mrb[0].mxu0
        %v2540 = vpop.f32.mrb[0].mxu0
        %v2541 = vadd.f32 0.0, %v2540
        %v2542 = vpop.f32.mrb[0].mxu0
        %2543 = vmatprep.mubr.bf16.mxu0 0
        %2544 = vmatmul.mubr.bf16.gmra.mrb[0].mxu0 %v2428
        %v2545 = vpop.f32.mrb[0].mxu0
        %v2546 = vadd.f32 0.0, %v2545
        %v2547 = vpop.f32.mrb[0].mxu0
        %v2548 = vpop.f32.mrb[0].mxu0
        %v2549 = vadd.f32 0.0, %v2548
        %v2550 = vpop.f32.mrb[0].mxu0
        %2551 = vmatprep.mubr.bf16.mxu0 0
        %2552 = vmatmul.mubr.bf16.gmra.mrb[0].mxu0 %v2429
        %v2553 = vpop.f32.mrb[0].mxu0
        %v2554 = vadd.f32 0.0, %v2553
        %v2555 = vpop.f32.mrb[0].mxu0
        %v2556 = vpop.f32.mrb[0].mxu0
        %v2557 = vadd.f32 0.0, %v2556
        %v2558 = vpop.f32.mrb[0].mxu0
        %2559 = vdwg.mxu0
        %v2560 = vadd.f32 %v2410, %v2530
        %v2561 = vadd.f32 %v2411, %v2533
        %v2562 = vadd.f32 %v2412, %v2538
        %v2563 = vadd.f32 %v2413, %v2541
        %v2564 = vadd.f32 %v2414, %v2546
        %v2565 = vadd.f32 %v2415, %v2549
        %v2566 = vadd.f32 %v2416, %v2554
        %v2567 = vadd.f32 %v2417, %v2557
        %v2568 = vld [vmem:[%s1826 + $0x2] sm:$0xff]
        %v2569 = vld [vmem:[%s1826 + $0x12] sm:$0xff]
        %v2570 = vld [vmem:[%s1826 + $0x22] sm:$0xff]
        %v2571 = vld [vmem:[%s1826 + $0x32] sm:$0xff]
        %v2572 = vld [vmem:[%s1826 + $0x42] sm:$0xff]
        %v2573 = vld [vmem:[%s1826 + $0x52] sm:$0xff]
        %v2574 = vld [vmem:[%s1826 + $0x62] sm:$0xff]
        %v2575 = vld [vmem:[%s1826 + $0x72] sm:$0xff]
        %v2576 = vpack.c.bf16 %v2569, %v2568
        %v2577 = vpack.c.bf16 %v2571, %v2570
        %v2578 = vpack.c.bf16 %v2573, %v2572
        %v2579 = vpack.c.bf16 %v2575, %v2574
        %s2580 = scalar_lea.vmem [#allocation7], 320
        %v2581 = vld [vmem:[%s2580] sm:$0xf]
        %v2582 = vld [vmem:[%s2580 + $0x4] sm:$0xf]
        %v2583 = vld [vmem:[%s2580 + $0x8] sm:$0xf]
        %v2584 = vld [vmem:[%s2580 + $0xc] sm:$0xf]
        %v2585 = vld [vmem:[%s2580 + $0x10] sm:$0xf]
        %v2586 = vld [vmem:[%s2580 + $0x14] sm:$0xf]
        %v2587 = vld [vmem:[%s2580 + $0x18] sm:$0xf]
        %v2588 = vld [vmem:[%s2580 + $0x1c] sm:$0xf]
        %v2589 = vld [vmem:[%s2580 + $0x20] sm:$0xf]
        %v2590 = vld [vmem:[%s2580 + $0x24] sm:$0xf]
        %v2591 = vld [vmem:[%s2580 + $0x28] sm:$0xf]
        %v2592 = vld [vmem:[%s2580 + $0x2c] sm:$0xf]
        %v2593 = vld [vmem:[%s2580 + $0x30] sm:$0xf]
        %v2594 = vld [vmem:[%s2580 + $0x34] sm:$0xf]
        %v2595 = vld [vmem:[%s2580 + $0x38] sm:$0xf]
        %v2596 = vld [vmem:[%s2580 + $0x3c] sm:$0xf]
        %v2613 = vunpack.c.l.b16 %v2581
        %v2614 = vunpack.c.l.b16 %v2582
        %v2615 = vunpack.c.l.b16 %v2583
        %v2616 = vunpack.c.l.b16 %v2584
        %v2617 = vunpack.c.l.b16 %v2585
        %v2618 = vunpack.c.l.b16 %v2586
        %v2619 = vunpack.c.l.b16 %v2587
        %v2620 = vunpack.c.l.b16 %v2588
        %v2621 = vunpack.c.l.b16 %v2589
        %v2622 = vunpack.c.l.b16 %v2590
        %v2623 = vunpack.c.l.b16 %v2591
        %v2624 = vunpack.c.l.b16 %v2592
        %v2625 = vunpack.c.l.b16 %v2593
        %v2626 = vunpack.c.l.b16 %v2594
        %v2627 = vunpack.c.l.b16 %v2595
        %v2628 = vunpack.c.l.b16 %v2596
        %v2629 = vpack.c.b16 %v2614, %v2613
        %v2630 = vpack.c.b16 %v2616, %v2615
        %v2631 = vpack.c.b16 %v2618, %v2617
        %v2632 = vpack.c.b16 %v2620, %v2619
        %v2633 = vpack.c.b16 %v2622, %v2621
        %v2634 = vpack.c.b16 %v2624, %v2623
        %v2635 = vpack.c.b16 %v2626, %v2625
        %v2636 = vpack.c.b16 %v2628, %v2627
        %2645 = vmatprep.subr.bf16.mxu0 0
        %2646 = vmatpush1.bf16.msra.mxu0 %v2629
        %2647 = vmatprep.subr.bf16.mxu0 0
        %2648 = vmatpush1.bf16.msra.mxu0 %v2630
        %2649 = vmatprep.subr.bf16.mxu0 0
        %2650 = vmatpush1.bf16.msra.mxu0 %v2631
        %2651 = vmatprep.subr.bf16.mxu0 0
        %2652 = vmatpush1.bf16.msra.mxu0 %v2632
        %2653 = vmatprep.subr.bf16.mxu0 0
        %2654 = vmatpush1.bf16.msra.mxu0 %v2633
        %2655 = vmatprep.subr.bf16.mxu0 0
        %2656 = vmatpush1.bf16.msra.mxu0 %v2634
        %2657 = vmatprep.subr.bf16.mxu0 0
        %2658 = vmatpush1.bf16.msra.mxu0 %v2635
        %2659 = vmatprep.subr.bf16.mxu0 0
        %2660 = vmatpush1.bf16.msra.mxu0 %v2636
        %2661 = vmatprep.subr.bf16.mxu0 0
        %2662 = vmatpush1.bf16.msra.mxu0 0
        %2663 = vmatprep.subr.bf16.mxu0 0
        %2664 = vmatpush1.bf16.msra.mxu0 0
        %2665 = vmatprep.subr.bf16.mxu0 0
        %2666 = vmatpush1.bf16.msra.mxu0 0
        %2667 = vmatprep.subr.bf16.mxu0 0
        %2668 = vmatpush1.bf16.msra.mxu0 0
        %2669 = vmatprep.subr.bf16.mxu0 0
        %2670 = vmatpush1.bf16.msra.mxu0 0
        %2671 = vmatprep.subr.bf16.mxu0 0
        %2672 = vmatpush1.bf16.msra.mxu0 0
        %2673 = vmatprep.subr.bf16.mxu0 0
        %2674 = vmatpush1.bf16.msra.mxu0 0
        %2675 = vmatprep.subr.bf16.mxu0 0
        %2676 = vmatpush1.bf16.msra.mxu0 0
        %2677 = vmatprep.mubr.bf16.mxu0 0
        %2678 = vmatmul.mubr.bf16.gmra.mrb[0].mxu0 %v2576
        %v2679 = vpop.f32.mrb[0].mxu0
        %v2680 = vadd.f32 0.0, %v2679
        %v2681 = vpop.f32.mrb[0].mxu0
        %v2682 = vpop.f32.mrb[0].mxu0
        %v2683 = vadd.f32 0.0, %v2682
        %v2684 = vpop.f32.mrb[0].mxu0
        %2685 = vmatprep.mubr.bf16.mxu0 0
        %2686 = vmatmul.mubr.bf16.gmra.mrb[0].mxu0 %v2577
        %v2687 = vpop.f32.mrb[0].mxu0
        %v2688 = vadd.f32 0.0, %v2687
        %v2689 = vpop.f32.mrb[0].mxu0
        %v2690 = vpop.f32.mrb[0].mxu0
        %v2691 = vadd.f32 0.0, %v2690
        %v2692 = vpop.f32.mrb[0].mxu0
        %2693 = vmatprep.mubr.bf16.mxu0 0
        %2694 = vmatmul.mubr.bf16.gmra.mrb[0].mxu0 %v2578
        %v2695 = vpop.f32.mrb[0].mxu0
        %v2696 = vadd.f32 0.0, %v2695
        %v2697 = vpop.f32.mrb[0].mxu0
        %v2698 = vpop.f32.mrb[0].mxu0
        %v2699 = vadd.f32 0.0, %v2698
        %v2700 = vpop.f32.mrb[0].mxu0
        %2701 = vmatprep.mubr.bf16.mxu0 0
        %2702 = vmatmul.mubr.bf16.gmra.mrb[0].mxu0 %v2579
        %v2703 = vpop.f32.mrb[0].mxu0
        %v2704 = vadd.f32 0.0, %v2703
        %v2705 = vpop.f32.mrb[0].mxu0
        %v2706 = vpop.f32.mrb[0].mxu0
        %v2707 = vadd.f32 0.0, %v2706
        %v2708 = vpop.f32.mrb[0].mxu0
        %2709 = vdwg.mxu0
        %v2710 = vadd.f32 %v2560, %v2680
        %v2711 = vadd.f32 %v2561, %v2683
        %v2712 = vadd.f32 %v2562, %v2688
        %v2713 = vadd.f32 %v2563, %v2691
        %v2714 = vadd.f32 %v2564, %v2696
        %v2715 = vadd.f32 %v2565, %v2699
        %v2716 = vadd.f32 %v2566, %v2704
        %v2717 = vadd.f32 %v2567, %v2707
        %s2718 = scalar_lea.vmem [#allocation3], 32
        %v2719 = vld [vmem:[%s2718] sm:$0xff]
        %v2720 = vld [vmem:[%s2718 + $0x10] sm:$0xff]
        %v2721 = vld [vmem:[%s2718 + $0x20] sm:$0xff]
        %v2722 = vld [vmem:[%s2718 + $0x30] sm:$0xff]
        %v2723 = vld [vmem:[%s2718 + $0x40] sm:$0xff]
        %v2724 = vld [vmem:[%s2718 + $0x50] sm:$0xff]
        %v2725 = vld [vmem:[%s2718 + $0x60] sm:$0xff]
        %v2726 = vld [vmem:[%s2718 + $0x70] sm:$0xff]
        %v2727 = vpack.c.bf16 %v2720, %v2719
        %v2728 = vpack.c.bf16 %v2722, %v2721
        %v2729 = vpack.c.bf16 %v2724, %v2723
        %v2730 = vpack.c.bf16 %v2726, %v2725
        %s2731 = scalar_lea.vmem [#allocation7], 384
        %v2732 = vld [vmem:[%s2731] sm:$0xf]
        %v2733 = vld [vmem:[%s2731 + $0x4] sm:$0xf]
        %v2734 = vld [vmem:[%s2731 + $0x8] sm:$0xf]
        %v2735 = vld [vmem:[%s2731 + $0xc] sm:$0xf]
        %v2736 = vld [vmem:[%s2731 + $0x10] sm:$0xf]
        %v2737 = vld [vmem:[%s2731 + $0x14] sm:$0xf]
        %v2738 = vld [vmem:[%s2731 + $0x18] sm:$0xf]
        %v2739 = vld [vmem:[%s2731 + $0x1c] sm:$0xf]
        %v2740 = vld [vmem:[%s2731 + $0x20] sm:$0xf]
        %v2741 = vld [vmem:[%s2731 + $0x24] sm:$0xf]
        %v2742 = vld [vmem:[%s2731 + $0x28] sm:$0xf]
        %v2743 = vld [vmem:[%s2731 + $0x2c] sm:$0xf]
        %v2744 = vld [vmem:[%s2731 + $0x30] sm:$0xf]
        %v2745 = vld [vmem:[%s2731 + $0x34] sm:$0xf]
        %v2746 = vld [vmem:[%s2731 + $0x38] sm:$0xf]
        %v2747 = vld [vmem:[%s2731 + $0x3c] sm:$0xf]
        %v2764 = vunpack.c.l.b16 %v2732
        %v2765 = vunpack.c.l.b16 %v2733
        %v2766 = vunpack.c.l.b16 %v2734
        %v2767 = vunpack.c.l.b16 %v2735
        %v2768 = vunpack.c.l.b16 %v2736
        %v2769 = vunpack.c.l.b16 %v2737
        %v2770 = vunpack.c.l.b16 %v2738
        %v2771 = vunpack.c.l.b16 %v2739
        %v2772 = vunpack.c.l.b16 %v2740
        %v2773 = vunpack.c.l.b16 %v2741
        %v2774 = vunpack.c.l.b16 %v2742
        %v2775 = vunpack.c.l.b16 %v2743
        %v2776 = vunpack.c.l.b16 %v2744
        %v2777 = vunpack.c.l.b16 %v2745
        %v2778 = vunpack.c.l.b16 %v2746
        %v2779 = vunpack.c.l.b16 %v2747
        %v2780 = vpack.c.b16 %v2765, %v2764
        %v2781 = vpack.c.b16 %v2767, %v2766
        %v2782 = vpack.c.b16 %v2769, %v2768
        %v2783 = vpack.c.b16 %v2771, %v2770
        %v2784 = vpack.c.b16 %v2773, %v2772
        %v2785 = vpack.c.b16 %v2775, %v2774
        %v2786 = vpack.c.b16 %v2777, %v2776
        %v2787 = vpack.c.b16 %v2779, %v2778
        %2796 = vmatprep.subr.bf16.mxu0 0
        %2797 = vmatpush1.bf16.msra.mxu0 %v2780
        %2798 = vmatprep.subr.bf16.mxu0 0
        %2799 = vmatpush1.bf16.msra.mxu0 %v2781
        %2800 = vmatprep.subr.bf16.mxu0 0
        %2801 = vmatpush1.bf16.msra.mxu0 %v2782
        %2802 = vmatprep.subr.bf16.mxu0 0
        %2803 = vmatpush1.bf16.msra.mxu0 %v2783
        %2804 = vmatprep.subr.bf16.mxu0 0
        %2805 = vmatpush1.bf16.msra.mxu0 %v2784
        %2806 = vmatprep.subr.bf16.mxu0 0
        %2807 = vmatpush1.bf16.msra.mxu0 %v2785
        %2808 = vmatprep.subr.bf16.mxu0 0
        %2809 = vmatpush1.bf16.msra.mxu0 %v2786
        %2810 = vmatprep.subr.bf16.mxu0 0
        %2811 = vmatpush1.bf16.msra.mxu0 %v2787
        %2812 = vmatprep.subr.bf16.mxu0 0
        %2813 = vmatpush1.bf16.msra.mxu0 0
        %2814 = vmatprep.subr.bf16.mxu0 0
        %2815 = vmatpush1.bf16.msra.mxu0 0
        %2816 = vmatprep.subr.bf16.mxu0 0
        %2817 = vmatpush1.bf16.msra.mxu0 0
        %2818 = vmatprep.subr.bf16.mxu0 0
        %2819 = vmatpush1.bf16.msra.mxu0 0
        %2820 = vmatprep.subr.bf16.mxu0 0
        %2821 = vmatpush1.bf16.msra.mxu0 0
        %2822 = vmatprep.subr.bf16.mxu0 0
        %2823 = vmatpush1.bf16.msra.mxu0 0
        %2824 = vmatprep.subr.bf16.mxu0 0
        %2825 = vmatpush1.bf16.msra.mxu0 0
        %2826 = vmatprep.subr.bf16.mxu0 0
        %2827 = vmatpush1.bf16.msra.mxu0 0
        %2828 = vmatprep.mubr.bf16.mxu0 0
        %2829 = vmatmul.mubr.bf16.gmra.mrb[0].mxu0 %v2727
        %v2830 = vpop.f32.mrb[0].mxu0
        %v2831 = vadd.f32 0.0, %v2830
        %v2832 = vpop.f32.mrb[0].mxu0
        %v2833 = vpop.f32.mrb[0].mxu0
        %v2834 = vadd.f32 0.0, %v2833
        %v2835 = vpop.f32.mrb[0].mxu0
        %2836 = vmatprep.mubr.bf16.mxu0 0
        %2837 = vmatmul.mubr.bf16.gmra.mrb[0].mxu0 %v2728
        %v2838 = vpop.f32.mrb[0].mxu0
        %v2839 = vadd.f32 0.0, %v2838
        %v2840 = vpop.f32.mrb[0].mxu0
        %v2841 = vpop.f32.mrb[0].mxu0
        %v2842 = vadd.f32 0.0, %v2841
        %v2843 = vpop.f32.mrb[0].mxu0
        %2844 = vmatprep.mubr.bf16.mxu0 0
        %2845 = vmatmul.mubr.bf16.gmra.mrb[0].mxu0 %v2729
        %v2846 = vpop.f32.mrb[0].mxu0
        %v2847 = vadd.f32 0.0, %v2846
        %v2848 = vpop.f32.mrb[0].mxu0
        %v2849 = vpop.f32.mrb[0].mxu0
        %v2850 = vadd.f32 0.0, %v2849
        %v2851 = vpop.f32.mrb[0].mxu0
        %2852 = vmatprep.mubr.bf16.mxu0 0
        %2853 = vmatmul.mubr.bf16.gmra.mrb[0].mxu0 %v2730
        %v2854 = vpop.f32.mrb[0].mxu0
        %v2855 = vadd.f32 0.0, %v2854
        %v2856 = vpop.f32.mrb[0].mxu0
        %v2857 = vpop.f32.mrb[0].mxu0
        %v2858 = vadd.f32 0.0, %v2857
        %v2859 = vpop.f32.mrb[0].mxu0
        %2860 = vdwg.mxu0
        %v2861 = vadd.f32 %v2710, %v2831
        %v2862 = vadd.f32 %v2711, %v2834
        %v2863 = vadd.f32 %v2712, %v2839
        %v2864 = vadd.f32 %v2713, %v2842
        %v2865 = vadd.f32 %v2714, %v2847
        %v2866 = vadd.f32 %v2715, %v2850
        %v2867 = vadd.f32 %v2716, %v2855
        %v2868 = vadd.f32 %v2717, %v2858
        %v2869 = vld [vmem:[%s2718 + $0x1] sm:$0xff]
        %v2870 = vld [vmem:[%s2718 + $0x11] sm:$0xff]
        %v2871 = vld [vmem:[%s2718 + $0x21] sm:$0xff]
        %v2872 = vld [vmem:[%s2718 + $0x31] sm:$0xff]
        %v2873 = vld [vmem:[%s2718 + $0x41] sm:$0xff]
        %v2874 = vld [vmem:[%s2718 + $0x51] sm:$0xff]
        %v2875 = vld [vmem:[%s2718 + $0x61] sm:$0xff]
        %v2876 = vld [vmem:[%s2718 + $0x71] sm:$0xff]
        %v2877 = vpack.c.bf16 %v2870, %v2869
        %v2878 = vpack.c.bf16 %v2872, %v2871
        %v2879 = vpack.c.bf16 %v2874, %v2873
        %v2880 = vpack.c.bf16 %v2876, %v2875
        %s2881 = scalar_lea.vmem [#allocation7], 448
        %v2882 = vld [vmem:[%s2881] sm:$0xf]
        %v2883 = vld [vmem:[%s2881 + $0x4] sm:$0xf]
        %v2884 = vld [vmem:[%s2881 + $0x8] sm:$0xf]
        %v2885 = vld [vmem:[%s2881 + $0xc] sm:$0xf]
        %v2886 = vld [vmem:[%s2881 + $0x10] sm:$0xf]
        %v2887 = vld [vmem:[%s2881 + $0x14] sm:$0xf]
        %v2888 = vld [vmem:[%s2881 + $0x18] sm:$0xf]
        %v2889 = vld [vmem:[%s2881 + $0x1c] sm:$0xf]
        %v2890 = vld [vmem:[%s2881 + $0x20] sm:$0xf]
        %v2891 = vld [vmem:[%s2881 + $0x24] sm:$0xf]
        %v2892 = vld [vmem:[%s2881 + $0x28] sm:$0xf]
        %v2893 = vld [vmem:[%s2881 + $0x2c] sm:$0xf]
        %v2894 = vld [vmem:[%s2881 + $0x30] sm:$0xf]
        %v2895 = vld [vmem:[%s2881 + $0x34] sm:$0xf]
        %v2896 = vld [vmem:[%s2881 + $0x38] sm:$0xf]
        %v2897 = vld [vmem:[%s2881 + $0x3c] sm:$0xf]
        %v2914 = vunpack.c.l.b16 %v2882
        %v2915 = vunpack.c.l.b16 %v2883
        %v2916 = vunpack.c.l.b16 %v2884
        %v2917 = vunpack.c.l.b16 %v2885
        %v2918 = vunpack.c.l.b16 %v2886
        %v2919 = vunpack.c.l.b16 %v2887
        %v2920 = vunpack.c.l.b16 %v2888
        %v2921 = vunpack.c.l.b16 %v2889
        %v2922 = vunpack.c.l.b16 %v2890
        %v2923 = vunpack.c.l.b16 %v2891
        %v2924 = vunpack.c.l.b16 %v2892
        %v2925 = vunpack.c.l.b16 %v2893
        %v2926 = vunpack.c.l.b16 %v2894
        %v2927 = vunpack.c.l.b16 %v2895
        %v2928 = vunpack.c.l.b16 %v2896
        %v2929 = vunpack.c.l.b16 %v2897
        %v2930 = vpack.c.b16 %v2915, %v2914
        %v2931 = vpack.c.b16 %v2917, %v2916
        %v2932 = vpack.c.b16 %v2919, %v2918
        %v2933 = vpack.c.b16 %v2921, %v2920
        %v2934 = vpack.c.b16 %v2923, %v2922
        %v2935 = vpack.c.b16 %v2925, %v2924
        %v2936 = vpack.c.b16 %v2927, %v2926
        %v2937 = vpack.c.b16 %v2929, %v2928
        %2946 = vmatprep.subr.bf16.mxu0 0
        %2947 = vmatpush1.bf16.msra.mxu0 %v2930
        %2948 = vmatprep.subr.bf16.mxu0 0
        %2949 = vmatpush1.bf16.msra.mxu0 %v2931
        %2950 = vmatprep.subr.bf16.mxu0 0
        %2951 = vmatpush1.bf16.msra.mxu0 %v2932
        %2952 = vmatprep.subr.bf16.mxu0 0
        %2953 = vmatpush1.bf16.msra.mxu0 %v2933
        %2954 = vmatprep.subr.bf16.mxu0 0
        %2955 = vmatpush1.bf16.msra.mxu0 %v2934
        %2956 = vmatprep.subr.bf16.mxu0 0
        %2957 = vmatpush1.bf16.msra.mxu0 %v2935
        %2958 = vmatprep.subr.bf16.mxu0 0
        %2959 = vmatpush1.bf16.msra.mxu0 %v2936
        %2960 = vmatprep.subr.bf16.mxu0 0
        %2961 = vmatpush1.bf16.msra.mxu0 %v2937
        %2962 = vmatprep.subr.bf16.mxu0 0
        %2963 = vmatpush1.bf16.msra.mxu0 0
        %2964 = vmatprep.subr.bf16.mxu0 0
        %2965 = vmatpush1.bf16.msra.mxu0 0
        %2966 = vmatprep.subr.bf16.mxu0 0
        %2967 = vmatpush1.bf16.msra.mxu0 0
        %2968 = vmatprep.subr.bf16.mxu0 0
        %2969 = vmatpush1.bf16.msra.mxu0 0
        %2970 = vmatprep.subr.bf16.mxu0 0
        %2971 = vmatpush1.bf16.msra.mxu0 0
        %2972 = vmatprep.subr.bf16.mxu0 0
        %2973 = vmatpush1.bf16.msra.mxu0 0
        %2974 = vmatprep.subr.bf16.mxu0 0
        %2975 = vmatpush1.bf16.msra.mxu0 0
        %2976 = vmatprep.subr.bf16.mxu0 0
        %2977 = vmatpush1.bf16.msra.mxu0 0
        %2978 = vmatprep.mubr.bf16.mxu0 0
        %2979 = vmatmul.mubr.bf16.gmra.mrb[0].mxu0 %v2877
        %v2980 = vpop.f32.mrb[0].mxu0
        %v2981 = vadd.f32 0.0, %v2980
        %v2982 = vpop.f32.mrb[0].mxu0
        %v2983 = vpop.f32.mrb[0].mxu0
        %v2984 = vadd.f32 0.0, %v2983
        %v2985 = vpop.f32.mrb[0].mxu0
        %2986 = vmatprep.mubr.bf16.mxu0 0
        %2987 = vmatmul.mubr.bf16.gmra.mrb[0].mxu0 %v2878
        %v2988 = vpop.f32.mrb[0].mxu0
        %v2989 = vadd.f32 0.0, %v2988
        %v2990 = vpop.f32.mrb[0].mxu0
        %v2991 = vpop.f32.mrb[0].mxu0
        %v2992 = vadd.f32 0.0, %v2991
        %v2993 = vpop.f32.mrb[0].mxu0
        %2994 = vmatprep.mubr.bf16.mxu0 0
        %2995 = vmatmul.mubr.bf16.gmra.mrb[0].mxu0 %v2879
        %v2996 = vpop.f32.mrb[0].mxu0
        %v2997 = vadd.f32 0.0, %v2996
        %v2998 = vpop.f32.mrb[0].mxu0
        %v2999 = vpop.f32.mrb[0].mxu0
        %v3000 = vadd.f32 0.0, %v2999
        %v3001 = vpop.f32.mrb[0].mxu0
        %3002 = vmatprep.mubr.bf16.mxu0 0
        %3003 = vmatmul.mubr.bf16.gmra.mrb[0].mxu0 %v2880
        %v3004 = vpop.f32.mrb[0].mxu0
        %v3005 = vadd.f32 0.0, %v3004
        %v3006 = vpop.f32.mrb[0].mxu0
        %v3007 = vpop.f32.mrb[0].mxu0
        %v3008 = vadd.f32 0.0, %v3007
        %v3009 = vpop.f32.mrb[0].mxu0
        %3010 = vdwg.mxu0
        %v3011 = vadd.f32 %v2861, %v2981
        %v3012 = vadd.f32 %v2862, %v2984
        %v3013 = vadd.f32 %v2863, %v2989
        %v3014 = vadd.f32 %v2864, %v2992
        %v3015 = vadd.f32 %v2865, %v2997
        %v3016 = vadd.f32 %v2866, %v3000
        %v3017 = vadd.f32 %v2867, %v3005
        %v3018 = vadd.f32 %v2868, %v3008
        %v3019 = vld [vmem:[%s2718 + $0x2] sm:$0xff]
        %v3020 = vld [vmem:[%s2718 + $0x12] sm:$0xff]
        %v3021 = vld [vmem:[%s2718 + $0x22] sm:$0xff]
        %v3022 = vld [vmem:[%s2718 + $0x32] sm:$0xff]
        %v3023 = vld [vmem:[%s2718 + $0x42] sm:$0xff]
        %v3024 = vld [vmem:[%s2718 + $0x52] sm:$0xff]
        %v3025 = vld [vmem:[%s2718 + $0x62] sm:$0xff]
        %v3026 = vld [vmem:[%s2718 + $0x72] sm:$0xff]
        %v3027 = vpack.c.bf16 %v3020, %v3019
        %v3028 = vpack.c.bf16 %v3022, %v3021
        %v3029 = vpack.c.bf16 %v3024, %v3023
        %v3030 = vpack.c.bf16 %v3026, %v3025
        %s3031 = scalar_lea.vmem [#allocation7], 512
        %v3032 = vld [vmem:[%s3031] sm:$0xf]
        %v3033 = vld [vmem:[%s3031 + $0x4] sm:$0xf]
        %v3034 = vld [vmem:[%s3031 + $0x8] sm:$0xf]
        %v3035 = vld [vmem:[%s3031 + $0xc] sm:$0xf]
        %v3036 = vld [vmem:[%s3031 + $0x10] sm:$0xf]
        %v3037 = vld [vmem:[%s3031 + $0x14] sm:$0xf]
        %v3038 = vld [vmem:[%s3031 + $0x18] sm:$0xf]
        %v3039 = vld [vmem:[%s3031 + $0x1c] sm:$0xf]
        %v3040 = vld [vmem:[%s3031 + $0x20] sm:$0xf]
        %v3041 = vld [vmem:[%s3031 + $0x24] sm:$0xf]
        %v3042 = vld [vmem:[%s3031 + $0x28] sm:$0xf]
        %v3043 = vld [vmem:[%s3031 + $0x2c] sm:$0xf]
        %v3044 = vld [vmem:[%s3031 + $0x30] sm:$0xf]
        %v3045 = vld [vmem:[%s3031 + $0x34] sm:$0xf]
        %v3046 = vld [vmem:[%s3031 + $0x38] sm:$0xf]
        %v3047 = vld [vmem:[%s3031 + $0x3c] sm:$0xf]
        %v3064 = vunpack.c.l.b16 %v3032
        %v3065 = vunpack.c.l.b16 %v3033
        %v3066 = vunpack.c.l.b16 %v3034
        %v3067 = vunpack.c.l.b16 %v3035
        %v3068 = vunpack.c.l.b16 %v3036
        %v3069 = vunpack.c.l.b16 %v3037
        %v3070 = vunpack.c.l.b16 %v3038
        %v3071 = vunpack.c.l.b16 %v3039
        %v3072 = vunpack.c.l.b16 %v3040
        %v3073 = vunpack.c.l.b16 %v3041
        %v3074 = vunpack.c.l.b16 %v3042
        %v3075 = vunpack.c.l.b16 %v3043
        %v3076 = vunpack.c.l.b16 %v3044
        %v3077 = vunpack.c.l.b16 %v3045
        %v3078 = vunpack.c.l.b16 %v3046
        %v3079 = vunpack.c.l.b16 %v3047
        %v3080 = vpack.c.b16 %v3065, %v3064
        %v3081 = vpack.c.b16 %v3067, %v3066
        %v3082 = vpack.c.b16 %v3069, %v3068
        %v3083 = vpack.c.b16 %v3071, %v3070
        %v3084 = vpack.c.b16 %v3073, %v3072
        %v3085 = vpack.c.b16 %v3075, %v3074
        %v3086 = vpack.c.b16 %v3077, %v3076
        %v3087 = vpack.c.b16 %v3079, %v3078
        %3096 = vmatprep.subr.bf16.mxu0 0
        %3097 = vmatpush1.bf16.msra.mxu0 %v3080
        %3098 = vmatprep.subr.bf16.mxu0 0
        %3099 = vmatpush1.bf16.msra.mxu0 %v3081
        %3100 = vmatprep.subr.bf16.mxu0 0
        %3101 = vmatpush1.bf16.msra.mxu0 %v3082
        %3102 = vmatprep.subr.bf16.mxu0 0
        %3103 = vmatpush1.bf16.msra.mxu0 %v3083
        %3104 = vmatprep.subr.bf16.mxu0 0
        %3105 = vmatpush1.bf16.msra.mxu0 %v3084
        %3106 = vmatprep.subr.bf16.mxu0 0
        %3107 = vmatpush1.bf16.msra.mxu0 %v3085
        %3108 = vmatprep.subr.bf16.mxu0 0
        %3109 = vmatpush1.bf16.msra.mxu0 %v3086
        %3110 = vmatprep.subr.bf16.mxu0 0
        %3111 = vmatpush1.bf16.msra.mxu0 %v3087
        %3112 = vmatprep.subr.bf16.mxu0 0
        %3113 = vmatpush1.bf16.msra.mxu0 0
        %3114 = vmatprep.subr.bf16.mxu0 0
        %3115 = vmatpush1.bf16.msra.mxu0 0
        %3116 = vmatprep.subr.bf16.mxu0 0
        %3117 = vmatpush1.bf16.msra.mxu0 0
        %3118 = vmatprep.subr.bf16.mxu0 0
        %3119 = vmatpush1.bf16.msra.mxu0 0
        %3120 = vmatprep.subr.bf16.mxu0 0
        %3121 = vmatpush1.bf16.msra.mxu0 0
        %3122 = vmatprep.subr.bf16.mxu0 0
        %3123 = vmatpush1.bf16.msra.mxu0 0
        %3124 = vmatprep.subr.bf16.mxu0 0
        %3125 = vmatpush1.bf16.msra.mxu0 0
        %3126 = vmatprep.subr.bf16.mxu0 0
        %3127 = vmatpush1.bf16.msra.mxu0 0
        %3128 = vmatprep.mubr.bf16.mxu0 0
        %3129 = vmatmul.mubr.bf16.gmra.mrb[0].mxu0 %v3027
        %v3130 = vpop.f32.mrb[0].mxu0
        %v3131 = vadd.f32 0.0, %v3130
        %v3132 = vpop.f32.mrb[0].mxu0
        %v3133 = vpop.f32.mrb[0].mxu0
        %v3134 = vadd.f32 0.0, %v3133
        %v3135 = vpop.f32.mrb[0].mxu0
        %3136 = vmatprep.mubr.bf16.mxu0 0
        %3137 = vmatmul.mubr.bf16.gmra.mrb[0].mxu0 %v3028
        %v3138 = vpop.f32.mrb[0].mxu0
        %v3139 = vadd.f32 0.0, %v3138
        %v3140 = vpop.f32.mrb[0].mxu0
        %v3141 = vpop.f32.mrb[0].mxu0
        %v3142 = vadd.f32 0.0, %v3141
        %v3143 = vpop.f32.mrb[0].mxu0
        %3144 = vmatprep.mubr.bf16.mxu0 0
        %3145 = vmatmul.mubr.bf16.gmra.mrb[0].mxu0 %v3029
        %v3146 = vpop.f32.mrb[0].mxu0
        %v3147 = vadd.f32 0.0, %v3146
        %v3148 = vpop.f32.mrb[0].mxu0
        %v3149 = vpop.f32.mrb[0].mxu0
        %v3150 = vadd.f32 0.0, %v3149
        %v3151 = vpop.f32.mrb[0].mxu0
        %3152 = vmatprep.mubr.bf16.mxu0 0
        %3153 = vmatmul.mubr.bf16.gmra.mrb[0].mxu0 %v3030
        %v3154 = vpop.f32.mrb[0].mxu0
        %v3155 = vadd.f32 0.0, %v3154
        %v3156 = vpop.f32.mrb[0].mxu0
        %v3157 = vpop.f32.mrb[0].mxu0
        %v3158 = vadd.f32 0.0, %v3157
        %v3159 = vpop.f32.mrb[0].mxu0
        %3160 = vdwg.mxu0
        %v3161 = vadd.f32 %v3011, %v3131
        %v3162 = vadd.f32 %v3012, %v3134
        %v3163 = vadd.f32 %v3013, %v3139
        %v3164 = vadd.f32 %v3014, %v3142
        %v3165 = vadd.f32 %v3015, %v3147
        %v3166 = vadd.f32 %v3016, %v3150
        %v3167 = vadd.f32 %v3017, %v3155
        %v3168 = vadd.f32 %v3018, %v3158
        %v3169 = vlaneseq
        %v3170 = vshrl.u32 %v3169, 7
        %v3171 = vsub.s32 3, %v3170
        %v3172 = vrot.slane %v392, %v3171
        %v3173 = vadd.f32 %v3161, %v3172
        %v3174 = vadd.f32 %v3162, %v3172
        %v3175 = vadd.f32 %v3163, %v3172
        %v3176 = vadd.f32 %v3164, %v3172
        %v3177 = vadd.f32 %v3165, %v3172
        %v3178 = vadd.f32 %v3166, %v3172
        %v3179 = vadd.f32 %v3167, %v3172
        %v3180 = vadd.f32 %v3168, %v3172
        %v3181 = vadd.f32 %v3173, %v3174
        %v3182 = vadd.f32 %v3181, %v3175
        %v3183 = vadd.f32 %v3182, %v3176
        %v3184 = vadd.f32 %v3183, %v3177
        %v3185 = vadd.f32 %v3184, %v3178
        %v3186 = vadd.f32 %v3185, %v3179
        %v3187 = vadd.f32 %v3186, %v3180
        %v3188 = vrot.slane %v3187, 4
        %v3189 = vadd.f32 %v3187, %v3188
        %v3190 = vrot.slane %v3189, 2
        %v3191 = vadd.f32 %v3189, %v3190
        %v3192 = vrot.slane %v3191, 1
        %v3193 = vadd.f32 %v3191, %v3192
        %v3194 = vmul.f32 %v3173, %v3173
        %v3195 = vmul.f32 %v3174, %v3174
        %v3196 = vmul.f32 %v3175, %v3175
        %v3197 = vmul.f32 %v3176, %v3176
        %v3198 = vmul.f32 %v3177, %v3177
        %v3199 = vmul.f32 %v3178, %v3178
        %v3200 = vmul.f32 %v3179, %v3179
        %v3201 = vmul.f32 %v3180, %v3180
        %v3202 = vadd.f32 %v3194, %v3195
        %v3203 = vadd.f32 %v3202, %v3196
        %v3204 = vadd.f32 %v3203, %v3197
        %v3205 = vadd.f32 %v3204, %v3198
        %v3206 = vadd.f32 %v3205, %v3199
        %v3207 = vadd.f32 %v3206, %v3200
        %v3208 = vadd.f32 %v3207, %v3201
        %v3209 = vrot.slane %v3208, 4
        %v3210 = vadd.f32 %v3208, %v3209
        %v3211 = vrot.slane %v3210, 2
        %v3212 = vadd.f32 %v3210, %v3211
        %v3213 = vrot.slane %v3212, 1
        %v3214 = vadd.f32 %v3212, %v3213
        %v3215 = vsel %vm1610, %v3193, %v3214
        %3216 = vmatprep.subr.mxu0 0.0
        %3217 = vmatpush1.msra.mxu0 %v393
        %3218 = vmatprep.subr.mxu0 0.0
        %3219 = vmatpush1.msra.mxu0 %v394
        %3220 = vmatprep.subr.mxu0 0.0
        %3221 = vmatpush1.msra.mxu0 %v395
        %3222 = vmatprep.subr.mxu0 0.0
        %3223 = vmatpush1.msra.mxu0 %v396
        %3224 = vmatprep.subr.mxu0 0.0
        %3225 = vmatpush1.msra.mxu0 %v397
        %3226 = vmatprep.subr.mxu0 0.0
        %3227 = vmatpush1.msra.mxu0 %v398
        %3228 = vmatprep.subr.mxu0 0.0
        %3229 = vmatpush1.msra.mxu0 %v399
        %3230 = vmatprep.subr.mxu0 0.0
        %3231 = vmatpush1.msra.mxu0 %v400
        %3232 = vmatprep.subr.mxu0 0.0
        %3233 = vmatpush1.msra.mxu0 %v401
        %3234 = vmatprep.subr.mxu0 0.0
        %3235 = vmatpush1.msra.mxu0 %v402
        %3236 = vmatprep.subr.mxu0 0.0
        %3237 = vmatpush1.msra.mxu0 %v403
        %3238 = vmatprep.subr.mxu0 0.0
        %3239 = vmatpush1.msra.mxu0 %v404
        %3240 = vmatprep.subr.mxu0 0.0
        %3241 = vmatpush1.msra.mxu0 %v405
        %3242 = vmatprep.subr.mxu0 0.0
        %3243 = vmatpush1.msra.mxu0 %v406
        %3244 = vmatprep.subr.mxu0 0.0
        %3245 = vmatpush1.msra.mxu0 %v407
        %3246 = vmatprep.subr.mxu0 0.0
        %3247 = vmatpush1.msra.mxu0 %v408
        %3248 = vmatprep.subr.mxu0 0.0
        %3249 = vmatpush1.msra.mxu0 0.0
        %3250 = vmatprep.subr.mxu0 0.0
        %3251 = vmatpush1.msra.mxu0 0.0
        %3252 = vmatprep.subr.mxu0 0.0
        %3253 = vmatpush1.msra.mxu0 0.0
        %3254 = vmatprep.subr.mxu0 0.0
        %3255 = vmatpush1.msra.mxu0 0.0
        %3256 = vmatprep.subr.mxu0 0.0
        %3257 = vmatpush1.msra.mxu0 0.0
        %3258 = vmatprep.subr.mxu0 0.0
        %3259 = vmatpush1.msra.mxu0 0.0
        %3260 = vmatprep.subr.mxu0 0.0
        %3261 = vmatpush1.msra.mxu0 0.0
        %3262 = vmatprep.subr.mxu0 0.0
        %3263 = vmatpush1.msra.mxu0 0.0
        %3264 = vmatprep.subr.mxu0 0.0
        %3265 = vmatpush1.msra.mxu0 0.0
        %3266 = vmatprep.subr.mxu0 0.0
        %3267 = vmatpush1.msra.mxu0 0.0
        %3268 = vmatprep.subr.mxu0 0.0
        %3269 = vmatpush1.msra.mxu0 0.0
        %3270 = vmatprep.subr.mxu0 0.0
        %3271 = vmatpush1.msra.mxu0 0.0
        %3272 = vmatprep.subr.mxu0 0.0
        %3273 = vmatpush1.msra.mxu0 0.0
        %3274 = vmatprep.subr.mxu0 0.0
        %3275 = vmatpush1.msra.mxu0 0.0
        %3276 = vmatprep.subr.mxu0 0.0
        %3277 = vmatpush1.msra.mxu0 0.0
        %3278 = vmatprep.subr.mxu0 0.0
        %3279 = vmatpush1.msra.mxu0 0.0
        %3280 = vmatprep.mubr.f32.mxu0 0.0
        %3281 = vmatmul.mubr.f32.gmra.mrb[0].mxu0 %v3215
        %v3282 = vpop.f32.mrb[0].mxu0
        %v3283 = vadd.f32 0.0, %v3282
        %v3284 = vpop.f32.mrb[0].mxu0
        %3285 = vdwg.mxu0
        %v3286 = vmul.f32 %v3283, 0.00048828125
        %v3287 = vmul.f32 %v3286, %v3286
        %v3289 = vrot.slane %v3287, 7
        %v3291 = vsub.f32 %v3286, %v3289
        %v3292 = vmax.f32 %v3291, 0.0
        %v3293 = vadd.f32 %v3292, 1e-05
        %v3294 = vrsqrt.pop %v3293
        %v3295 = vsel %vm1610, %v3286, %v3294
        %v3297 = vsel %vm1692, %v3295, 0
        %3299 = vmatprep.subr.mxu0 0.0
        %3300 = vmatpush1.msra.mxu0 %v1698
        %3301 = vmatprep.subr.mxu0 0.0
        %3302 = vmatpush1.msra.mxu0 0.0
        %3303 = vmatprep.subr.mxu0 0.0
        %3304 = vmatpush1.msra.mxu0 0.0
        %3305 = vmatprep.subr.mxu0 0.0
        %3306 = vmatpush1.msra.mxu0 0.0
        %3307 = vmatprep.subr.mxu0 0.0
        %3308 = vmatpush1.msra.mxu0 0.0
        %3309 = vmatprep.subr.mxu0 0.0
        %3310 = vmatpush1.msra.mxu0 0.0
        %3311 = vmatprep.subr.mxu0 0.0
        %3312 = vmatpush1.msra.mxu0 0.0
        %3313 = vmatprep.subr.mxu0 0.0
        %3314 = vmatpush1.msra.mxu0 0.0
        %3315 = vmatprep.subr.mxu0 0.0
        %3316 = vmatpush1.msra.mxu0 0.0
        %3317 = vmatprep.subr.mxu0 0.0
        %3318 = vmatpush1.msra.mxu0 0.0
        %3319 = vmatprep.subr.mxu0 0.0
        %3320 = vmatpush1.msra.mxu0 0.0
        %3321 = vmatprep.subr.mxu0 0.0
        %3322 = vmatpush1.msra.mxu0 0.0
        %3323 = vmatprep.subr.mxu0 0.0
        %3324 = vmatpush1.msra.mxu0 0.0
        %3325 = vmatprep.subr.mxu0 0.0
        %3326 = vmatpush1.msra.mxu0 0.0
        %3327 = vmatprep.subr.mxu0 0.0
        %3328 = vmatpush1.msra.mxu0 0.0
        %3329 = vmatprep.subr.mxu0 0.0
        %3330 = vmatpush1.msra.mxu0 0.0
        %3331 = vmatprep.subr.mxu0 0.0
        %3332 = vmatpush1.msra.mxu0 0.0
        %3333 = vmatprep.subr.mxu0 0.0
        %3334 = vmatpush1.msra.mxu0 0.0
        %3335 = vmatprep.subr.mxu0 0.0
        %3336 = vmatpush1.msra.mxu0 0.0
        %3337 = vmatprep.subr.mxu0 0.0
        %3338 = vmatpush1.msra.mxu0 0.0
        %3339 = vmatprep.subr.mxu0 0.0
        %3340 = vmatpush1.msra.mxu0 0.0
        %3341 = vmatprep.subr.mxu0 0.0
        %3342 = vmatpush1.msra.mxu0 0.0
        %3343 = vmatprep.subr.mxu0 0.0
        %3344 = vmatpush1.msra.mxu0 0.0
        %3345 = vmatprep.subr.mxu0 0.0
        %3346 = vmatpush1.msra.mxu0 0.0
        %3347 = vmatprep.subr.mxu0 0.0
        %3348 = vmatpush1.msra.mxu0 0.0
        %3349 = vmatprep.subr.mxu0 0.0
        %3350 = vmatpush1.msra.mxu0 0.0
        %3351 = vmatprep.subr.mxu0 0.0
        %3352 = vmatpush1.msra.mxu0 0.0
        %3353 = vmatprep.subr.mxu0 0.0
        %3354 = vmatpush1.msra.mxu0 0.0
        %3355 = vmatprep.subr.mxu0 0.0
        %3356 = vmatpush1.msra.mxu0 0.0
        %3357 = vmatprep.subr.mxu0 0.0
        %3358 = vmatpush1.msra.mxu0 0.0
        %3359 = vmatprep.subr.mxu0 0.0
        %3360 = vmatpush1.msra.mxu0 0.0
        %3361 = vmatprep.subr.mxu0 0.0
        %3362 = vmatpush1.msra.mxu0 0.0
        %3363 = vmatprep.mubr.f32.mxu0 0.0
        %3364 = vmatmul.mubr.f32.gmra.mrb[0].mxu0 %v3297
        %v3365 = vpop.f32.mrb[0].mxu0
        %v3366 = vadd.f32 0.0, %v3365
        %v3367 = vpop.f32.mrb[0].mxu0
        %3368 = vdwg.mxu0
        %v3369 = vlaneseq
        %v3370 = vshrl.u32 %v3369, 7
        %v3371 = vsub.s32 0, %v3370
        %v3372 = vrot.slane %v3366, %v3371
        %v3373 = vsub.f32 %v3173, %v3372
        %v3374 = vsub.f32 %v3174, %v3372
        %v3375 = vsub.f32 %v3175, %v3372
        %v3376 = vsub.f32 %v3176, %v3372
        %v3377 = vsub.f32 %v3177, %v3372
        %v3378 = vsub.f32 %v3178, %v3372
        %v3379 = vsub.f32 %v3179, %v3372
        %v3380 = vsub.f32 %v3180, %v3372
        %v3381 = vlaneseq
        %v3382 = vshrl.u32 %v3381, 7
        %v3383 = vsub.s32 1, %v3382
        %v3384 = vrot.slane %v3366, %v3383
        %v3385 = vmul.f32 %v3373, %v3384
        %v3386 = vmul.f32 %v3374, %v3384
        %v3387 = vmul.f32 %v3375, %v3384
        %v3388 = vmul.f32 %v3376, %v3384
        %v3389 = vmul.f32 %v3377, %v3384
        %v3390 = vmul.f32 %v3378, %v3384
        %v3391 = vmul.f32 %v3379, %v3384
        %v3392 = vmul.f32 %v3380, %v3384
        %v3393 = vlaneseq
        %v3394 = vshrl.u32 %v3393, 7
        %v3395 = vsub.s32 4, %v3394
        %v3396 = vrot.slane %v392, %v3395
        %v3397 = vmul.f32 %v3385, %v3396
        %v3398 = vmul.f32 %v3386, %v3396
        %v3399 = vmul.f32 %v3387, %v3396
        %v3400 = vmul.f32 %v3388, %v3396
        %v3401 = vmul.f32 %v3389, %v3396
        %v3402 = vmul.f32 %v3390, %v3396
        %v3403 = vmul.f32 %v3391, %v3396
        %v3404 = vmul.f32 %v3392, %v3396
        %v3405 = vlaneseq
        %v3406 = vshrl.u32 %v3405, 7
        %v3407 = vsub.s32 5, %v3406
        %v3408 = vrot.slane %v392, %v3407
        %v3409 = vadd.f32 %v3397, %v3408
        %v3410 = vadd.f32 %v3398, %v3408
        %v3411 = vadd.f32 %v3399, %v3408
        %v3412 = vadd.f32 %v3400, %v3408
        %v3413 = vadd.f32 %v3401, %v3408
        %v3414 = vadd.f32 %v3402, %v3408
        %v3415 = vadd.f32 %v3403, %v3408
        %v3416 = vadd.f32 %v3404, %v3408
        %v3417 = vpack.c.bf16 %v376, %v375
        %v3418 = vpack.c.bf16 %v378, %v377
        %v3419 = vpack.c.bf16 %v380, %v379
        %v3420 = vpack.c.bf16 %v382, %v381
        %v3421 = vld [vmem:[#allocation9] sm:$0xf]
        %v3422 = vld [vmem:[#allocation9 + $0x4] sm:$0xf]
        %v3423 = vld [vmem:[#allocation9 + $0x8] sm:$0xf]
        %v3424 = vld [vmem:[#allocation9 + $0xc] sm:$0xf]
        %v3425 = vld [vmem:[#allocation9 + $0x10] sm:$0xf]
        %v3426 = vld [vmem:[#allocation9 + $0x14] sm:$0xf]
        %v3427 = vld [vmem:[#allocation9 + $0x18] sm:$0xf]
        %v3428 = vld [vmem:[#allocation9 + $0x1c] sm:$0xf]
        %v3437 = vunpack.c.l.b16 %v3421
        %v3438 = vunpack.c.l.b16 %v3422
        %v3439 = vunpack.c.l.b16 %v3423
        %v3440 = vunpack.c.l.b16 %v3424
        %v3441 = vunpack.c.l.b16 %v3425
        %v3442 = vunpack.c.l.b16 %v3426
        %v3443 = vunpack.c.l.b16 %v3427
        %v3444 = vunpack.c.l.b16 %v3428
        %v3445 = vpack.c.b16 %v3438, %v3437
        %v3446 = vpack.c.b16 %v3440, %v3439
        %v3447 = vpack.c.b16 %v3442, %v3441
        %v3448 = vpack.c.b16 %v3444, %v3443
        %v3454 = vsel %vm322, %v3417, 0
        %v3457 = vsel %vm322, %v3418, 0
        %v3460 = vsel %vm322, %v3419, 0
        %v3463 = vsel %vm322, %v3420, 0
        %3465 = vmatprep.subr.bf16.mxu0 0
        %3466 = vmatpush1.bf16.msra.mxu0 %v3445
        %3467 = vmatprep.subr.bf16.mxu0 0
        %3468 = vmatpush1.bf16.msra.mxu0 %v3446
        %3469 = vmatprep.subr.bf16.mxu0 0
        %3470 = vmatpush1.bf16.msra.mxu0 %v3447
        %3471 = vmatprep.subr.bf16.mxu0 0
        %3472 = vmatpush1.bf16.msra.mxu0 %v3448
        %3473 = vmatprep.subr.bf16.mxu0 0
        %3474 = vmatpush1.bf16.msra.mxu0 0
        %3475 = vmatprep.subr.bf16.mxu0 0
        %3476 = vmatpush1.bf16.msra.mxu0 0
        %3477 = vmatprep.subr.bf16.mxu0 0
        %3478 = vmatpush1.bf16.msra.mxu0 0
        %3479 = vmatprep.subr.bf16.mxu0 0
        %3480 = vmatpush1.bf16.msra.mxu0 0
        %3481 = vmatprep.subr.bf16.mxu0 0
        %3482 = vmatpush1.bf16.msra.mxu0 0
        %3483 = vmatprep.subr.bf16.mxu0 0
        %3484 = vmatpush1.bf16.msra.mxu0 0
        %3485 = vmatprep.subr.bf16.mxu0 0
        %3486 = vmatpush1.bf16.msra.mxu0 0
        %3487 = vmatprep.subr.bf16.mxu0 0
        %3488 = vmatpush1.bf16.msra.mxu0 0
        %3489 = vmatprep.subr.bf16.mxu0 0
        %3490 = vmatpush1.bf16.msra.mxu0 0
        %3491 = vmatprep.subr.bf16.mxu0 0
        %3492 = vmatpush1.bf16.msra.mxu0 0
        %3493 = vmatprep.subr.bf16.mxu0 0
        %3494 = vmatpush1.bf16.msra.mxu0 0
        %3495 = vmatprep.subr.bf16.mxu0 0
        %3496 = vmatpush1.bf16.msra.mxu0 0
        %3497 = vmatprep.mubr.bf16.mxu0 0
        %3498 = vmatmul.mubr.bf16.gmra.mrb[0].mxu0 %v3454
        %v3499 = vpop.f32.mrb[0].mxu0
        %v3500 = vadd.f32 0.0, %v3499
        %v3501 = vpop.f32.mrb[0].mxu0
        %v3502 = vpop.f32.mrb[0].mxu0
        %v3503 = vadd.f32 0.0, %v3502
        %v3504 = vpop.f32.mrb[0].mxu0
        %3505 = vmatprep.mubr.bf16.mxu0 0
        %3506 = vmatmul.mubr.bf16.gmra.mrb[0].mxu0 %v3457
        %v3507 = vpop.f32.mrb[0].mxu0
        %v3508 = vadd.f32 0.0, %v3507
        %v3509 = vpop.f32.mrb[0].mxu0
        %v3510 = vpop.f32.mrb[0].mxu0
        %v3511 = vadd.f32 0.0, %v3510
        %v3512 = vpop.f32.mrb[0].mxu0
        %3513 = vmatprep.mubr.bf16.mxu0 0
        %3514 = vmatmul.mubr.bf16.gmra.mrb[0].mxu0 %v3460
        %v3515 = vpop.f32.mrb[0].mxu0
        %v3516 = vadd.f32 0.0, %v3515
        %v3517 = vpop.f32.mrb[0].mxu0
        %v3518 = vpop.f32.mrb[0].mxu0
        %v3519 = vadd.f32 0.0, %v3518
        %v3520 = vpop.f32.mrb[0].mxu0
        %3521 = vmatprep.mubr.bf16.mxu0 0
        %3522 = vmatmul.mubr.bf16.gmra.mrb[0].mxu0 %v3463
        %v3523 = vpop.f32.mrb[0].mxu0
        %v3524 = vadd.f32 0.0, %v3523
        %v3525 = vpop.f32.mrb[0].mxu0
        %v3526 = vpop.f32.mrb[0].mxu0
        %v3527 = vadd.f32 0.0, %v3526
        %v3528 = vpop.f32.mrb[0].mxu0
        %3529 = vdwg.mxu0
        %v3530 = vadd.f32 %v3409, %v3500
        %v3531 = vadd.f32 %v3410, %v3503
        %v3532 = vadd.f32 %v3411, %v3508
        %v3533 = vadd.f32 %v3412, %v3511
        %v3534 = vadd.f32 %v3413, %v3516
        %v3535 = vadd.f32 %v3414, %v3519
        %v3536 = vadd.f32 %v3415, %v3524
        %v3537 = vadd.f32 %v3416, %v3527
        %v3538 = vlaneseq
        %v3539 = vshrl.u32 %v3538, 7
        %v3540 = vsub.s32 6, %v3539
        %v3541 = vrot.slane %v392, %v3540
        %v3542 = vadd.f32 %v3530, %v3541
        %v3543 = vadd.f32 %v3531, %v3541
        %v3544 = vadd.f32 %v3532, %v3541
        %v3545 = vadd.f32 %v3533, %v3541
        %v3546 = vadd.f32 %v3534, %v3541
        %v3547 = vadd.f32 %v3535, %v3541
        %v3548 = vadd.f32 %v3536, %v3541
        %v3549 = vadd.f32 %v3537, %v3541
        %v3550 = vmax.f32 %v3542, 0.0
        %v3551 = vmax.f32 %v3543, 0.0
        %v3552 = vmax.f32 %v3544, 0.0
        %v3553 = vmax.f32 %v3545, 0.0
        %v3554 = vmax.f32 %v3546, 0.0
        %v3555 = vmax.f32 %v3547, 0.0
        %v3556 = vmax.f32 %v3548, 0.0
        %v3557 = vmax.f32 %v3549, 0.0
        %3558 = vst [vmem:[%s315] sm:$0xff] %v3550
        %3559 = vst [vmem:[%s315 + $0x8] sm:$0xff] %v3551
        %3560 = vst [vmem:[%s315 + $0x10] sm:$0xff] %v3552
        %3561 = vst [vmem:[%s315 + $0x18] sm:$0xff] %v3553
        %3562 = vst [vmem:[%s315 + $0x20] sm:$0xff] %v3554
        %3563 = vst [vmem:[%s315 + $0x28] sm:$0xff] %v3555
        %3564 = vst [vmem:[%s315 + $0x30] sm:$0xff] %v3556
        %3565 = vst [vmem:[%s315 + $0x38] sm:$0xff] %v3557
        %s3566 = sand.u32 %s183, 1
        %s3567 = scalar_lea.sflag [#allocation6], %s3566
        %s3568 = sand.u32 %s183, 1
        %s3569 = smul.addr %s3568, 64
        %s3570 = scalar_lea.vmem [#allocation10], %s3569
        // Predicated region
        $region61: #{tpu_custom_call.1} parent=47 // pred_check
          %p3571 = pneg %p193
        $region62: #{tpu_custom_call.1} parent=47 // pred_check_branch
          %3573 = sbr.rel (%p3571) target = $region64
        $region63: #{tpu_custom_call.1} parent=47 // pred_region
          %s3575 = ssub.s32 1024, 1024
          %3576 = vsyncadd %s3567, %s3575
          %s3577 = smul.addr %s23, 8
          %s3578 = smul.addr %s3577, 128
          %s3579 = scalar_lea.hbm %s7, %s3578
          %s3580 = sshll.u32 %s3570, 4
          %s3581 = int_to_ptr.vmem [resolvable:$true] %s3580
          %3586 = dma.vmem_to_hbm [thread:$0]  %s3581, 1024, %s3579, %s3567, 128, 128, 8
        $region64: #{tpu_custom_call.1} parent=47 // pred_fallthru
          _
      $region48: #{tpu_custom_call.1} parent=5 // pred_fallthru
        _
      %p3587 = scmp.le.s32.totalorder 2, %s18
      // Predicated region
      $region65: #{tpu_custom_call.1} parent=5 // pred_check
        %p3588 = pneg %p3587
      $region66: #{tpu_custom_call.1} parent=5 // pred_check_branch
        %3590 = sbr.rel (%p3588) target = $region68
      $region67: #{tpu_custom_call.1} parent=5 // pred_region
        %s3591 = ssub.s32 %s18, 2
        // Predicated region
        $region69: #{tpu_custom_call.1} parent=67 // pred_check
          %p3592 = pneg %p199
        $region70: #{tpu_custom_call.1} parent=67 // pred_check_branch
          %3594 = sbr.rel (%p3592) target = $region72
        $region71: #{tpu_custom_call.1} parent=67 // pred_region
          %s3595 = sand.u32 %s184, 1
          %s3596 = scalar_lea.sflag [#allocation6], %s3595
          %s3597 = sand.u32 %s184, 1
          %s3598 = smul.addr %s3597, 64
          %s3599 = scalar_lea.vmem [#allocation10], %s3598
          %3600 = dma.done %s3596, 1024
        $region72: #{tpu_custom_call.1} parent=67 // pred_fallthru
          _
      $region68: #{tpu_custom_call.1} parent=5 // pred_fallthru
        _
    $region6: #{tpu_custom_call.1} parent=1 // loop_footer
      %s22 = sadd.s32 1, %s18
    $region7: #{tpu_custom_call.1} parent=1 // loop_footer_branch
      %17 = sbr.rel target = $region3
    $region8: #{tpu_custom_call.1} parent=1 // loop_exit
      _
    %3601 = vsyncpa [#allocation5], 1
    %s3602 = scalar_lea.sflag [#allocation5], 1
    %3603 = vsyncpa %s3602, 1
    %3604 = vsyncpa [#allocation8], 1
    %3605 = vsyncpa [#allocation6], 1
    %s3606 = scalar_lea.sflag [#allocation6], 1
    %3607 = vsyncpa %s3606, 1

</llo_original>
